<compile_context>
chip_gen: v7x
topology: tpu7x:2x2x1
jax: 0.10.0
libtpu: 0.0.40
codegen_flags: <defaults>
</compile_context>

<pallas_src>
import jax
import jax.numpy as jnp
from jax.experimental import pallas as pl
from jax.experimental.pallas import tpu as pltpu


# ----------------------------------------------------------------------------
# Fused Pallas kernel: whole Net1 forward for one batch tile.
# ----------------------------------------------------------------------------

def net1_kernel(x_ref, w1m_ref, b1_ref, w2m_ref, b2_ref,
                wf1_ref, bf1_ref, wf2_ref, bf2_ref,
                out_ref, f1_ref, f2_ref):
    """One batch tile of the full forward pass.

    x_ref  : (tb, 28, 28)     input images (single channel squeezed)
    w1m_ref: (5, 28, 240)     conv1 banded matrices, M1[ki][j, ow*10+c]
    b1_ref : (1, 240)         conv1 bias tiled over ow
    w2m_ref: (5, 120, 160)    conv2 banded matrices, M2[ki][w*10+ci, ow*20+co]
    b2_ref : (1, 160)         conv2 bias tiled over ow
    wf1_ref: (320, 50)        fc1 weights, rows in (h, w, c) order
    bf1_ref: (1, 50)
    wf2_ref: (50, 10)
    bf2_ref: (1, 10)
    out_ref: (tb, 10)         logits
    f1_ref : (tb, 1440)       conv1 block output, flat (h, w, c)
    f2_ref : (tb, 320)        conv2 block output, flat (h, w, c)
    """
    tb = x_ref.shape[0]
    f32 = jnp.float32

    # ---- conv1: Conv2d(1, 10, 5) as 5 MXU matmuls ---------------------------
    # rows = (b*24 + oh, j), lanes of the result = ow*10 + c  (lane-dense).
    acc1 = jnp.zeros((tb * 24, 240), f32) + b1_ref[...]
    for ki in range(5):
        rows = x_ref[:, ki:ki + 24, :].reshape(tb * 24, 28)
        acc1 = acc1 + jnp.dot(rows, w1m_ref[ki], preferred_element_type=f32)

    # ---- maxpool 2x2 + ReLU (as values, single dense store) -----------------
    a1 = acc1.reshape(tb, 12, 2, 240)
    hmax1 = jnp.maximum(a1[:, :, 0, :], a1[:, :, 1, :])          # (tb, 12, 240)
    p1 = jnp.concatenate(
        [jnp.maximum(hmax1[:, :, 20 * pw:20 * pw + 10],
                     hmax1[:, :, 20 * pw + 10:20 * pw + 20])
         for pw in range(12)], axis=-1)                          # (tb, 12, 120)
    p1 = jnp.maximum(p1, 0.0)
    f1_ref[...] = p1.reshape(tb, 1440)                           # one full store

    # ---- conv2: Conv2d(10, 20, 5) as 5 MXU matmuls --------------------------
    # rows = (b*8 + oh, w*10 + ci), lanes of the result = ow*20 + co.
    acc2 = jnp.zeros((tb * 8, 160), f32) + b2_ref[...]
    for ki in range(5):
        rows = p1[:, ki:ki + 8, :].reshape(tb * 8, 120)
        acc2 = acc2 + jnp.dot(rows, w2m_ref[ki], preferred_element_type=f32)
    # TODO(synk): nn.Dropout2d(0.5) is identity (inference mode).

    # ---- maxpool 2x2 + ReLU ---------------------------------------------------
    a2 = acc2.reshape(tb, 4, 2, 160)
    hmax2 = jnp.maximum(a2[:, :, 0, :], a2[:, :, 1, :])          # (tb, 4, 160)
    p2 = jnp.concatenate(
        [jnp.maximum(hmax2[:, :, 40 * pw:40 * pw + 20],
                     hmax2[:, :, 40 * pw + 20:40 * pw + 40])
         for pw in range(4)], axis=-1)                           # (tb, 4, 80)
    p2 = jnp.maximum(p2, 0.0)
    p2_flat = p2.reshape(tb, 320)                                # (h, w, c) flat
    f2_ref[...] = p2_flat                                        # one full store

    # ---- fc1 (+ReLU) and fc2 as two MXU matmuls -----------------------------
    h = jnp.dot(p2_flat, wf1_ref[...], preferred_element_type=f32) + bf1_ref[...]
    h = jnp.maximum(h, 0.0)
    # TODO(synk): nn.Dropout(0.5) is identity (inference mode).
    logits = jnp.dot(h, wf2_ref[...], preferred_element_type=f32) + bf2_ref[...]
    out_ref[...] = logits.astype(out_ref.dtype)


# ----------------------------------------------------------------------------
# Wrapper: one pallas_call, grid over batch tiles ("parallel" for megacore).
# ----------------------------------------------------------------------------

def net1_forward(x, prepped, *, batch_tile=128):
    """Forward pass of Net1. x: (B, 1, 28, 28) float32 (NCHW, like PyTorch).

    batch_tile is the primary tuning knob: ~128 fits comfortably in the 32 MiB
    scoped VMEM on all generations; v5e/v6e can sweep it (and vmem_limit_bytes)
    higher. For v7x megacore use, pick B >= 2 * batch_tile so the grid has >=2
    steps.
    """
    (w1m, b1t, w2m, b2t, wf1p, bf1p, wf2p, bf2p) = prepped
    B = x.shape[0]
    if B > batch_tile:
        tb = max(8, (batch_tile // 8) * 8)   # keep sublane dim of 2-D blocks aligned
    else:
        tb = B

    x2d = x[:, 0, :, :]                      # (B, 28, 28), channel squeezed

    out, f1_flat, f2_flat = pl.pallas_call(
        net1_kernel,
        out_shape=(
            jax.ShapeDtypeStruct((B, 10), jnp.float32),
            jax.ShapeDtypeStruct((B, 1440), jnp.float32),
            jax.ShapeDtypeStruct((B, 320), jnp.float32),
        ),
        grid=(pl.cdiv(B, tb),),
        in_specs=[
            pl.BlockSpec((tb, 28, 28), lambda i: (i, 0, 0)),
            # All weight blocks map to block (0, ...) each step -> stay resident.
            pl.BlockSpec((5, 28, 240), lambda i: (0, 0, 0)),
            pl.BlockSpec((1, 240), lambda i: (0, 0)),
            pl.BlockSpec((5, 120, 160), lambda i: (0, 0, 0)),
            pl.BlockSpec((1, 160), lambda i: (0, 0)),
            pl.BlockSpec((320, 50), lambda i: (0, 0)),
            pl.BlockSpec((1, 50), lambda i: (0, 0)),
            pl.BlockSpec((50, 10), lambda i: (0, 0)),
            pl.BlockSpec((1, 10), lambda i: (0, 0)),
        ],
        out_specs=(
            pl.BlockSpec((tb, 10), lambda i: (i, 0)),
            pl.BlockSpec((tb, 1440), lambda i: (i, 0)),
            pl.BlockSpec((tb, 320), lambda i: (i, 0)),
        ),
        compiler_params=pltpu.CompilerParams(
            dimension_semantics=("parallel",),
            vmem_limit_bytes=32 * 1024 * 1024,
        ),
    )(x2d, w1m, b1t, w2m, b2t, wf1p, bf1p, wf2p, bf2p)

    # Cheap XLA-side layout plumbing back to PyTorch's NCHW convention.
    f1 = jnp.transpose(f1_flat.reshape(B, 12, 12, 10), (0, 3, 1, 2))  # (B,10,12,12)
    f2 = jnp.transpose(f2_flat.reshape(B, 4, 4, 20), (0, 3, 1, 2))    # (B,20,4,4)
    return out, f1, f2


# ----------------------------------------------------------------------------
# One-time parameter preparation (all layout work hoisted out of the forward).
# ----------------------------------------------------------------------------

def prepare_params(params):
    (w1, b1, w2, b2, wf1, bf1, wf2, bf2) = params

    # conv1 banded matrices: M1[ki][j, ow*10 + c] = w1[c, 0, ki, j - ow]
    # for 0 <= j - ow < 5, else 0.  (ow in [0,24), j in [0,28))
    j = jnp.arange(28)[:, None]                    # (28, 1)
    col = jnp.arange(240)[None, :]                 # (1, 240)
    ow = col // 10
    c = col % 10
    kj = j - ow                                    # (28, 240)
    valid = (kj >= 0) & (kj < 5)
    kjc = jnp.clip(kj, 0, 4)
    w1m = jnp.stack(
        [jnp.where(valid, w1[:, 0, ki, :][c, kjc], 0.0) for ki in range(5)],
        axis=0)                                    # (5, 28, 240)

    # conv2 banded matrices: M2[ki][w*10 + ci, ow*20 + co] = w2[co, ci, ki, w - ow]
    # for 0 <= w - ow < 5, else 0.  (w in [0,12), ow in [0,8))
    row = jnp.arange(120)[:, None]                 # (120, 1)
    col2 = jnp.arange(160)[None, :]                # (1, 160)
    w_ = row // 10
    ci = row % 10
    ow2 = col2 // 20
    co = col2 % 20
    kj2 = w_ - ow2                                 # (120, 160)
    valid2 = (kj2 >= 0) & (kj2 < 5)
    kj2c = jnp.clip(kj2, 0, 4)
    w2m = jnp.stack(
        [jnp.where(valid2, w2[:, :, ki, :][co, ci, kj2c], 0.0) for ki in range(5)],
        axis=0)                                    # (5, 120, 160)

    # Biases tiled to the lane layouts (lane = ow*C + c  ->  bias[c]).
    b1t = jnp.tile(b1, 24).reshape(1, 240)
    b2t = jnp.tile(b2, 8).reshape(1, 160)

    # fc1 (50, 320): PyTorch flattens f2 as (c, h, w); kernel produces (h, w, c).
    wf1p = jnp.transpose(wf1.reshape(50, 20, 4, 4), (2, 3, 1, 0)).reshape(320, 50)
    wf2p = wf2.T                                   # (50, 10)

    return (w1m, b1t, w2m, b2t, wf1p, bf1.reshape(1, 50), wf2p, bf2.reshape(1, 10))


# ----------------------------------------------------------------------------
# Deterministic parameter init (shapes from Net1.__init__)
# ----------------------------------------------------------------------------

def init_params(key):
    ks = jax.random.split(key, 8)

    def u(k, shape, fan_in):
        bound = 1.0 / (fan_in ** 0.5)
        return jax.random.uniform(k, shape, jnp.float32, -bound, bound)

    w1 = u(ks[0], (10, 1, 5, 5), 1 * 5 * 5)
    b1 = u(ks[1], (10,), 1 * 5 * 5)
    w2 = u(ks[2], (20, 10, 5, 5), 10 * 5 * 5)
    b2 = u(ks[3], (20,), 10 * 5 * 5)
    wf1 = u(ks[4], (50, 320), 320)
    bf1 = u(ks[5], (50,), 320)
    wf2 = u(ks[6], (10, 50), 50)
    bf2 = u(ks[7], (10,), 50)
    return (w1, b1, w2, b2, wf1, bf1, wf2, bf2)


if __name__ == "__main__":
    key = jax.random.PRNGKey(0)
    k_x, k_p = jax.random.split(key)

    # Input size is fixed by fc1's in_features=320 -> 28x28 single-channel image.
    B = 2
    x = jax.random.normal(k_x, (B, 1, 28, 28), dtype=jnp.float32)
    params = init_params(k_p)
    prepped = prepare_params(params)          # hoisted, done once

    fwd = jax.jit(net1_forward)
    output, f1, f2 = fwd(x, prepped)
    jax.block_until_ready((output, f1, f2))

    assert output.shape == (B, 10)
    assert f1.shape == (B, 10, 12, 12)
    assert f2.shape == (B, 20, 4, 4)
    print("KERNEL_OK")
</pallas_src>

<mosaic_0001>
module attributes {stable_mosaic.version = 11 : i64} {
  func.func @net1_kernel(%arg0: i32, %arg1: memref<2x28x28xf32, #tpu.memory_space<vmem>>, %arg2: memref<5x28x240xf32, #tpu.memory_space<vmem>>, %arg3: memref<1x240xf32, #tpu.memory_space<vmem>>, %arg4: memref<5x120x160xf32, #tpu.memory_space<vmem>>, %arg5: memref<1x160xf32, #tpu.memory_space<vmem>>, %arg6: memref<320x50xf32, #tpu.memory_space<vmem>>, %arg7: memref<1x50xf32, #tpu.memory_space<vmem>>, %arg8: memref<50x10xf32, #tpu.memory_space<vmem>>, %arg9: memref<1x10xf32, #tpu.memory_space<vmem>>, %arg10: memref<2x10xf32, #tpu.memory_space<vmem>>, %arg11: memref<2x1440xf32, #tpu.memory_space<vmem>>, %arg12: memref<2x320xf32, #tpu.memory_space<vmem>>) attributes {dimension_semantics = [#tpu.dimension_semantics<parallel>], iteration_bounds = array<i64: 1>, scalar_prefetch = 0 : i64, scratch_operands = 0 : i64, tpu.core_type = #tpu.core_type<tc>, window_params = [{transform_indices = @transform_0, window_bounds = array<i64: 2, 28, 28>}, {pipeline_mode = #tpu.pipeline_mode<synchronous>, transform_indices = @transform_1, window_bounds = array<i64: 5, 28, 240>}, {pipeline_mode = #tpu.pipeline_mode<synchronous>, transform_indices = @transform_2, window_bounds = array<i64: 1, 240>}, {pipeline_mode = #tpu.pipeline_mode<synchronous>, transform_indices = @transform_3, window_bounds = array<i64: 5, 120, 160>}, {pipeline_mode = #tpu.pipeline_mode<synchronous>, transform_indices = @transform_4, window_bounds = array<i64: 1, 160>}, {pipeline_mode = #tpu.pipeline_mode<synchronous>, transform_indices = @transform_5, window_bounds = array<i64: 320, 50>}, {pipeline_mode = #tpu.pipeline_mode<synchronous>, transform_indices = @transform_6, window_bounds = array<i64: 1, 50>}, {pipeline_mode = #tpu.pipeline_mode<synchronous>, transform_indices = @transform_7, window_bounds = array<i64: 50, 10>}, {pipeline_mode = #tpu.pipeline_mode<synchronous>, transform_indices = @transform_8, window_bounds = array<i64: 1, 10>}, {transform_indices = @transform_9, window_bounds = array<i64: 2, 10>}, {transform_indices = @transform_10, window_bounds = array<i64: 2, 1440>}, {transform_indices = @transform_11, window_bounds = array<i64: 2, 320>}]} {
    %cst = arith.constant 0.000000e+00 : f32
    %0 = vector.broadcast %cst : f32 to vector<48x240xf32>
    %c0 = arith.constant 0 : index
    %c0_0 = arith.constant 0 : index
    %1 = vector.load %arg3[%c0, %c0_0] : memref<1x240xf32, #tpu.memory_space<vmem>>, vector<1x240xf32>
    %2 = vector.broadcast %1 : vector<1x240xf32> to vector<48x240xf32>
    %3 = arith.addf %0, %2 : vector<48x240xf32>
    %c0_1 = arith.constant 0 : index
    %c0_2 = arith.constant 0 : index
    %c0_3 = arith.constant 0 : index
    %4 = vector.load %arg1[%c0_1, %c0_2, %c0_3] : memref<2x28x28xf32, #tpu.memory_space<vmem>>, vector<2x24x28xf32>
    %5 = vector.shape_cast %4 : vector<2x24x28xf32> to vector<48x28xf32>
    %c0_4 = arith.constant 0 : index
    %c0_5 = arith.constant 0 : index
    %c0_6 = arith.constant 0 : index
    %6 = vector.load %arg2[%c0_4, %c0_5, %c0_6] : memref<5x28x240xf32, #tpu.memory_space<vmem>>, vector<1x28x240xf32>
    %7 = vector.shape_cast %6 : vector<1x28x240xf32> to vector<28x240xf32>
    %cst_7 = arith.constant dense<0.000000e+00> : vector<48x240xf32>
    %8 = tpu.matmul %5, %7, %cst_7 {dimension_numbers = #tpu.dot_dimension_numbers<[1], [0], [0], [1], [0, 0, 1, 1], [], []>} : vector<48x28xf32>, vector<28x240xf32>, vector<48x240xf32> -> vector<48x240xf32>
    %9 = arith.addf %3, %8 : vector<48x240xf32>
    %c0_8 = arith.constant 0 : index
    %c1 = arith.constant 1 : index
    %c0_9 = arith.constant 0 : index
    %10 = vector.load %arg1[%c0_8, %c1, %c0_9] : memref<2x28x28xf32, #tpu.memory_space<vmem>>, vector<2x24x28xf32>
    %11 = vector.shape_cast %10 : vector<2x24x28xf32> to vector<48x28xf32>
    %c1_10 = arith.constant 1 : index
    %c0_11 = arith.constant 0 : index
    %c0_12 = arith.constant 0 : index
    %12 = vector.load %arg2[%c1_10, %c0_11, %c0_12] : memref<5x28x240xf32, #tpu.memory_space<vmem>>, vector<1x28x240xf32>
    %13 = vector.shape_cast %12 : vector<1x28x240xf32> to vector<28x240xf32>
    %cst_13 = arith.constant dense<0.000000e+00> : vector<48x240xf32>
    %14 = tpu.matmul %11, %13, %cst_13 {dimension_numbers = #tpu.dot_dimension_numbers<[1], [0], [0], [1], [0, 0, 1, 1], [], []>} : vector<48x28xf32>, vector<28x240xf32>, vector<48x240xf32> -> vector<48x240xf32>
    %15 = arith.addf %9, %14 : vector<48x240xf32>
    %c0_14 = arith.constant 0 : index
    %c2 = arith.constant 2 : index
    %c0_15 = arith.constant 0 : index
    %16 = vector.load %arg1[%c0_14, %c2, %c0_15] : memref<2x28x28xf32, #tpu.memory_space<vmem>>, vector<2x24x28xf32>
    %17 = vector.shape_cast %16 : vector<2x24x28xf32> to vector<48x28xf32>
    %c2_16 = arith.constant 2 : index
    %c0_17 = arith.constant 0 : index
    %c0_18 = arith.constant 0 : index
    %18 = vector.load %arg2[%c2_16, %c0_17, %c0_18] : memref<5x28x240xf32, #tpu.memory_space<vmem>>, vector<1x28x240xf32>
    %19 = vector.shape_cast %18 : vector<1x28x240xf32> to vector<28x240xf32>
    %cst_19 = arith.constant dense<0.000000e+00> : vector<48x240xf32>
    %20 = tpu.matmul %17, %19, %cst_19 {dimension_numbers = #tpu.dot_dimension_numbers<[1], [0], [0], [1], [0, 0, 1, 1], [], []>} : vector<48x28xf32>, vector<28x240xf32>, vector<48x240xf32> -> vector<48x240xf32>
    %21 = arith.addf %15, %20 : vector<48x240xf32>
    %c0_20 = arith.constant 0 : index
    %c3 = arith.constant 3 : index
    %c0_21 = arith.constant 0 : index
    %22 = vector.load %arg1[%c0_20, %c3, %c0_21] : memref<2x28x28xf32, #tpu.memory_space<vmem>>, vector<2x24x28xf32>
    %23 = vector.shape_cast %22 : vector<2x24x28xf32> to vector<48x28xf32>
    %c3_22 = arith.constant 3 : index
    %c0_23 = arith.constant 0 : index
    %c0_24 = arith.constant 0 : index
    %24 = vector.load %arg2[%c3_22, %c0_23, %c0_24] : memref<5x28x240xf32, #tpu.memory_space<vmem>>, vector<1x28x240xf32>
    %25 = vector.shape_cast %24 : vector<1x28x240xf32> to vector<28x240xf32>
    %cst_25 = arith.constant dense<0.000000e+00> : vector<48x240xf32>
    %26 = tpu.matmul %23, %25, %cst_25 {dimension_numbers = #tpu.dot_dimension_numbers<[1], [0], [0], [1], [0, 0, 1, 1], [], []>} : vector<48x28xf32>, vector<28x240xf32>, vector<48x240xf32> -> vector<48x240xf32>
    %27 = arith.addf %21, %26 : vector<48x240xf32>
    %c0_26 = arith.constant 0 : index
    %c4 = arith.constant 4 : index
    %c0_27 = arith.constant 0 : index
    %28 = vector.load %arg1[%c0_26, %c4, %c0_27] : memref<2x28x28xf32, #tpu.memory_space<vmem>>, vector<2x24x28xf32>
    %29 = vector.shape_cast %28 : vector<2x24x28xf32> to vector<48x28xf32>
    %c4_28 = arith.constant 4 : index
    %c0_29 = arith.constant 0 : index
    %c0_30 = arith.constant 0 : index
    %30 = vector.load %arg2[%c4_28, %c0_29, %c0_30] : memref<5x28x240xf32, #tpu.memory_space<vmem>>, vector<1x28x240xf32>
    %31 = vector.shape_cast %30 : vector<1x28x240xf32> to vector<28x240xf32>
    %cst_31 = arith.constant dense<0.000000e+00> : vector<48x240xf32>
    %32 = tpu.matmul %29, %31, %cst_31 {dimension_numbers = #tpu.dot_dimension_numbers<[1], [0], [0], [1], [0, 0, 1, 1], [], []>} : vector<48x28xf32>, vector<28x240xf32>, vector<48x240xf32> -> vector<48x240xf32>
    %33 = arith.addf %27, %32 : vector<48x240xf32>
    %34 = vector.shape_cast %33 : vector<48x240xf32> to vector<2x12x2x240xf32>
    %35 = vector.extract_strided_slice %34 {offsets = [0, 0, 0, 0], sizes = [2, 12, 1, 240], strides = [1, 1, 1, 1]} : vector<2x12x2x240xf32> to vector<2x12x1x240xf32>
    %36 = vector.shape_cast %35 : vector<2x12x1x240xf32> to vector<2x12x240xf32>
    %37 = vector.extract_strided_slice %34 {offsets = [0, 0, 1, 0], sizes = [2, 12, 1, 240], strides = [1, 1, 1, 1]} : vector<2x12x2x240xf32> to vector<2x12x1x240xf32>
    %38 = vector.shape_cast %37 : vector<2x12x1x240xf32> to vector<2x12x240xf32>
    %39 = arith.maximumf %36, %38 : vector<2x12x240xf32>
    %40 = vector.extract_strided_slice %39 {offsets = [0, 0, 0], sizes = [2, 12, 10], strides = [1, 1, 1]} : vector<2x12x240xf32> to vector<2x12x10xf32>
    %41 = vector.extract_strided_slice %39 {offsets = [0, 0, 10], sizes = [2, 12, 10], strides = [1, 1, 1]} : vector<2x12x240xf32> to vector<2x12x10xf32>
    %42 = arith.maximumf %40, %41 : vector<2x12x10xf32>
    %43 = vector.extract_strided_slice %39 {offsets = [0, 0, 20], sizes = [2, 12, 10], strides = [1, 1, 1]} : vector<2x12x240xf32> to vector<2x12x10xf32>
    %44 = vector.extract_strided_slice %39 {offsets = [0, 0, 30], sizes = [2, 12, 10], strides = [1, 1, 1]} : vector<2x12x240xf32> to vector<2x12x10xf32>
    %45 = arith.maximumf %43, %44 : vector<2x12x10xf32>
    %46 = vector.extract_strided_slice %39 {offsets = [0, 0, 40], sizes = [2, 12, 10], strides = [1, 1, 1]} : vector<2x12x240xf32> to vector<2x12x10xf32>
    %47 = vector.extract_strided_slice %39 {offsets = [0, 0, 50], sizes = [2, 12, 10], strides = [1, 1, 1]} : vector<2x12x240xf32> to vector<2x12x10xf32>
    %48 = arith.maximumf %46, %47 : vector<2x12x10xf32>
    %49 = vector.extract_strided_slice %39 {offsets = [0, 0, 60], sizes = [2, 12, 10], strides = [1, 1, 1]} : vector<2x12x240xf32> to vector<2x12x10xf32>
    %50 = vector.extract_strided_slice %39 {offsets = [0, 0, 70], sizes = [2, 12, 10], strides = [1, 1, 1]} : vector<2x12x240xf32> to vector<2x12x10xf32>
    %51 = arith.maximumf %49, %50 : vector<2x12x10xf32>
    %52 = vector.extract_strided_slice %39 {offsets = [0, 0, 80], sizes = [2, 12, 10], strides = [1, 1, 1]} : vector<2x12x240xf32> to vector<2x12x10xf32>
    %53 = vector.extract_strided_slice %39 {offsets = [0, 0, 90], sizes = [2, 12, 10], strides = [1, 1, 1]} : vector<2x12x240xf32> to vector<2x12x10xf32>
    %54 = arith.maximumf %52, %53 : vector<2x12x10xf32>
    %55 = vector.extract_strided_slice %39 {offsets = [0, 0, 100], sizes = [2, 12, 10], strides = [1, 1, 1]} : vector<2x12x240xf32> to vector<2x12x10xf32>
    %56 = vector.extract_strided_slice %39 {offsets = [0, 0, 110], sizes = [2, 12, 10], strides = [1, 1, 1]} : vector<2x12x240xf32> to vector<2x12x10xf32>
    %57 = arith.maximumf %55, %56 : vector<2x12x10xf32>
    %58 = vector.extract_strided_slice %39 {offsets = [0, 0, 120], sizes = [2, 12, 10], strides = [1, 1, 1]} : vector<2x12x240xf32> to vector<2x12x10xf32>
    %59 = vector.extract_strided_slice %39 {offsets = [0, 0, 130], sizes = [2, 12, 10], strides = [1, 1, 1]} : vector<2x12x240xf32> to vector<2x12x10xf32>
    %60 = arith.maximumf %58, %59 : vector<2x12x10xf32>
    %61 = vector.extract_strided_slice %39 {offsets = [0, 0, 140], sizes = [2, 12, 10], strides = [1, 1, 1]} : vector<2x12x240xf32> to vector<2x12x10xf32>
    %62 = vector.extract_strided_slice %39 {offsets = [0, 0, 150], sizes = [2, 12, 10], strides = [1, 1, 1]} : vector<2x12x240xf32> to vector<2x12x10xf32>
    %63 = arith.maximumf %61, %62 : vector<2x12x10xf32>
    %64 = vector.extract_strided_slice %39 {offsets = [0, 0, 160], sizes = [2, 12, 10], strides = [1, 1, 1]} : vector<2x12x240xf32> to vector<2x12x10xf32>
    %65 = vector.extract_strided_slice %39 {offsets = [0, 0, 170], sizes = [2, 12, 10], strides = [1, 1, 1]} : vector<2x12x240xf32> to vector<2x12x10xf32>
    %66 = arith.maximumf %64, %65 : vector<2x12x10xf32>
    %67 = vector.extract_strided_slice %39 {offsets = [0, 0, 180], sizes = [2, 12, 10], strides = [1, 1, 1]} : vector<2x12x240xf32> to vector<2x12x10xf32>
    %68 = vector.extract_strided_slice %39 {offsets = [0, 0, 190], sizes = [2, 12, 10], strides = [1, 1, 1]} : vector<2x12x240xf32> to vector<2x12x10xf32>
    %69 = arith.maximumf %67, %68 : vector<2x12x10xf32>
    %70 = vector.extract_strided_slice %39 {offsets = [0, 0, 200], sizes = [2, 12, 10], strides = [1, 1, 1]} : vector<2x12x240xf32> to vector<2x12x10xf32>
    %71 = vector.extract_strided_slice %39 {offsets = [0, 0, 210], sizes = [2, 12, 10], strides = [1, 1, 1]} : vector<2x12x240xf32> to vector<2x12x10xf32>
    %72 = arith.maximumf %70, %71 : vector<2x12x10xf32>
    %73 = vector.extract_strided_slice %39 {offsets = [0, 0, 220], sizes = [2, 12, 10], strides = [1, 1, 1]} : vector<2x12x240xf32> to vector<2x12x10xf32>
    %74 = vector.extract_strided_slice %39 {offsets = [0, 0, 230], sizes = [2, 12, 10], strides = [1, 1, 1]} : vector<2x12x240xf32> to vector<2x12x10xf32>
    %75 = arith.maximumf %73, %74 : vector<2x12x10xf32>
    %76 = tpu.concatenate %42, %45, %48, %51, %54, %57, %60, %63, %66, %69, %72, %75 in 2 : vector<2x12x10xf32>, vector<2x12x10xf32>, vector<2x12x10xf32>, vector<2x12x10xf32>, vector<2x12x10xf32>, vector<2x12x10xf32>, vector<2x12x10xf32>, vector<2x12x10xf32>, vector<2x12x10xf32>, vector<2x12x10xf32>, vector<2x12x10xf32>, vector<2x12x10xf32> -> vector<2x12x120xf32>
    %cst_32 = arith.constant 0.000000e+00 : f32
    %77 = vector.broadcast %cst_32 : f32 to vector<2x12x120xf32>
    %78 = arith.maximumf %76, %77 : vector<2x12x120xf32>
    %79 = vector.shape_cast %78 : vector<2x12x120xf32> to vector<2x1440xf32>
    %c0_33 = arith.constant 0 : index
    %c0_34 = arith.constant 0 : index
    %80 = vector.load %arg11[%c0_33, %c0_34] : memref<2x1440xf32, #tpu.memory_space<vmem>>, vector<2x1440xf32>
    tpu.vector_store %arg11[%c0_33, %c0_34], %79 {strides = array<i32>} : memref<2x1440xf32, #tpu.memory_space<vmem>>, vector<2x1440xf32>,
    %cst_35 = arith.constant 0.000000e+00 : f32
    %81 = vector.broadcast %cst_35 : f32 to vector<16x160xf32>
    %c0_36 = arith.constant 0 : index
    %c0_37 = arith.constant 0 : index
    %82 = vector.load %arg5[%c0_36, %c0_37] : memref<1x160xf32, #tpu.memory_space<vmem>>, vector<1x160xf32>
    %83 = vector.broadcast %82 : vector<1x160xf32> to vector<16x160xf32>
    %84 = arith.addf %81, %83 : vector<16x160xf32>
    %85 = vector.extract_strided_slice %78 {offsets = [0, 0, 0], sizes = [2, 8, 120], strides = [1, 1, 1]} : vector<2x12x120xf32> to vector<2x8x120xf32>
    %86 = vector.shape_cast %85 : vector<2x8x120xf32> to vector<16x120xf32>
    %c0_38 = arith.constant 0 : index
    %c0_39 = arith.constant 0 : index
    %c0_40 = arith.constant 0 : index
    %87 = vector.load %arg4[%c0_38, %c0_39, %c0_40] : memref<5x120x160xf32, #tpu.memory_space<vmem>>, vector<1x120x160xf32>
    %88 = vector.shape_cast %87 : vector<1x120x160xf32> to vector<120x160xf32>
    %cst_41 = arith.constant dense<0.000000e+00> : vector<16x160xf32>
    %89 = tpu.matmul %86, %88, %cst_41 {dimension_numbers = #tpu.dot_dimension_numbers<[1], [0], [0], [1], [0, 0, 1, 1], [], []>} : vector<16x120xf32>, vector<120x160xf32>, vector<16x160xf32> -> vector<16x160xf32>
    %90 = arith.addf %84, %89 : vector<16x160xf32>
    %91 = vector.extract_strided_slice %78 {offsets = [0, 1, 0], sizes = [2, 8, 120], strides = [1, 1, 1]} : vector<2x12x120xf32> to vector<2x8x120xf32>
    %92 = vector.shape_cast %91 : vector<2x8x120xf32> to vector<16x120xf32>
    %c1_42 = arith.constant 1 : index
    %c0_43 = arith.constant 0 : index
    %c0_44 = arith.constant 0 : index
    %93 = vector.load %arg4[%c1_42, %c0_43, %c0_44] : memref<5x120x160xf32, #tpu.memory_space<vmem>>, vector<1x120x160xf32>
    %94 = vector.shape_cast %93 : vector<1x120x160xf32> to vector<120x160xf32>
    %cst_45 = arith.constant dense<0.000000e+00> : vector<16x160xf32>
    %95 = tpu.matmul %92, %94, %cst_45 {dimension_numbers = #tpu.dot_dimension_numbers<[1], [0], [0], [1], [0, 0, 1, 1], [], []>} : vector<16x120xf32>, vector<120x160xf32>, vector<16x160xf32> -> vector<16x160xf32>
    %96 = arith.addf %90, %95 : vector<16x160xf32>
    %97 = vector.extract_strided_slice %78 {offsets = [0, 2, 0], sizes = [2, 8, 120], strides = [1, 1, 1]} : vector<2x12x120xf32> to vector<2x8x120xf32>
    %98 = vector.shape_cast %97 : vector<2x8x120xf32> to vector<16x120xf32>
    %c2_46 = arith.constant 2 : index
    %c0_47 = arith.constant 0 : index
    %c0_48 = arith.constant 0 : index
    %99 = vector.load %arg4[%c2_46, %c0_47, %c0_48] : memref<5x120x160xf32, #tpu.memory_space<vmem>>, vector<1x120x160xf32>
    %100 = vector.shape_cast %99 : vector<1x120x160xf32> to vector<120x160xf32>
    %cst_49 = arith.constant dense<0.000000e+00> : vector<16x160xf32>
    %101 = tpu.matmul %98, %100, %cst_49 {dimension_numbers = #tpu.dot_dimension_numbers<[1], [0], [0], [1], [0, 0, 1, 1], [], []>} : vector<16x120xf32>, vector<120x160xf32>, vector<16x160xf32> -> vector<16x160xf32>
    %102 = arith.addf %96, %101 : vector<16x160xf32>
    %103 = vector.extract_strided_slice %78 {offsets = [0, 3, 0], sizes = [2, 8, 120], strides = [1, 1, 1]} : vector<2x12x120xf32> to vector<2x8x120xf32>
    %104 = vector.shape_cast %103 : vector<2x8x120xf32> to vector<16x120xf32>
    %c3_50 = arith.constant 3 : index
    %c0_51 = arith.constant 0 : index
    %c0_52 = arith.constant 0 : index
    %105 = vector.load %arg4[%c3_50, %c0_51, %c0_52] : memref<5x120x160xf32, #tpu.memory_space<vmem>>, vector<1x120x160xf32>
    %106 = vector.shape_cast %105 : vector<1x120x160xf32> to vector<120x160xf32>
    %cst_53 = arith.constant dense<0.000000e+00> : vector<16x160xf32>
    %107 = tpu.matmul %104, %106, %cst_53 {dimension_numbers = #tpu.dot_dimension_numbers<[1], [0], [0], [1], [0, 0, 1, 1], [], []>} : vector<16x120xf32>, vector<120x160xf32>, vector<16x160xf32> -> vector<16x160xf32>
    %108 = arith.addf %102, %107 : vector<16x160xf32>
    %109 = vector.extract_strided_slice %78 {offsets = [0, 4, 0], sizes = [2, 8, 120], strides = [1, 1, 1]} : vector<2x12x120xf32> to vector<2x8x120xf32>
    %110 = vector.shape_cast %109 : vector<2x8x120xf32> to vector<16x120xf32>
    %c4_54 = arith.constant 4 : index
    %c0_55 = arith.constant 0 : index
    %c0_56 = arith.constant 0 : index
    %111 = vector.load %arg4[%c4_54, %c0_55, %c0_56] : memref<5x120x160xf32, #tpu.memory_space<vmem>>, vector<1x120x160xf32>
    %112 = vector.shape_cast %111 : vector<1x120x160xf32> to vector<120x160xf32>
    %cst_57 = arith.constant dense<0.000000e+00> : vector<16x160xf32>
    %113 = tpu.matmul %110, %112, %cst_57 {dimension_numbers = #tpu.dot_dimension_numbers<[1], [0], [0], [1], [0, 0, 1, 1], [], []>} : vector<16x120xf32>, vector<120x160xf32>, vector<16x160xf32> -> vector<16x160xf32>
    %114 = arith.addf %108, %113 : vector<16x160xf32>
    %115 = vector.shape_cast %114 : vector<16x160xf32> to vector<2x4x2x160xf32>
    %116 = vector.extract_strided_slice %115 {offsets = [0, 0, 0, 0], sizes = [2, 4, 1, 160], strides = [1, 1, 1, 1]} : vector<2x4x2x160xf32> to vector<2x4x1x160xf32>
    %117 = vector.shape_cast %116 : vector<2x4x1x160xf32> to vector<2x4x160xf32>
    %118 = vector.extract_strided_slice %115 {offsets = [0, 0, 1, 0], sizes = [2, 4, 1, 160], strides = [1, 1, 1, 1]} : vector<2x4x2x160xf32> to vector<2x4x1x160xf32>
    %119 = vector.shape_cast %118 : vector<2x4x1x160xf32> to vector<2x4x160xf32>
    %120 = arith.maximumf %117, %119 : vector<2x4x160xf32>
    %121 = vector.extract_strided_slice %120 {offsets = [0, 0, 0], sizes = [2, 4, 20], strides = [1, 1, 1]} : vector<2x4x160xf32> to vector<2x4x20xf32>
    %122 = vector.extract_strided_slice %120 {offsets = [0, 0, 20], sizes = [2, 4, 20], strides = [1, 1, 1]} : vector<2x4x160xf32> to vector<2x4x20xf32>
    %123 = arith.maximumf %121, %122 : vector<2x4x20xf32>
    %124 = vector.extract_strided_slice %120 {offsets = [0, 0, 40], sizes = [2, 4, 20], strides = [1, 1, 1]} : vector<2x4x160xf32> to vector<2x4x20xf32>
    %125 = vector.extract_strided_slice %120 {offsets = [0, 0, 60], sizes = [2, 4, 20], strides = [1, 1, 1]} : vector<2x4x160xf32> to vector<2x4x20xf32>
    %126 = arith.maximumf %124, %125 : vector<2x4x20xf32>
    %127 = vector.extract_strided_slice %120 {offsets = [0, 0, 80], sizes = [2, 4, 20], strides = [1, 1, 1]} : vector<2x4x160xf32> to vector<2x4x20xf32>
    %128 = vector.extract_strided_slice %120 {offsets = [0, 0, 100], sizes = [2, 4, 20], strides = [1, 1, 1]} : vector<2x4x160xf32> to vector<2x4x20xf32>
    %129 = arith.maximumf %127, %128 : vector<2x4x20xf32>
    %130 = vector.extract_strided_slice %120 {offsets = [0, 0, 120], sizes = [2, 4, 20], strides = [1, 1, 1]} : vector<2x4x160xf32> to vector<2x4x20xf32>
    %131 = vector.extract_strided_slice %120 {offsets = [0, 0, 140], sizes = [2, 4, 20], strides = [1, 1, 1]} : vector<2x4x160xf32> to vector<2x4x20xf32>
    %132 = arith.maximumf %130, %131 : vector<2x4x20xf32>
    %133 = tpu.concatenate %123, %126, %129, %132 in 2 : vector<2x4x20xf32>, vector<2x4x20xf32>, vector<2x4x20xf32>, vector<2x4x20xf32> -> vector<2x4x80xf32>
    %cst_58 = arith.constant 0.000000e+00 : f32
    %134 = vector.broadcast %cst_58 : f32 to vector<2x4x80xf32>
    %135 = arith.maximumf %133, %134 : vector<2x4x80xf32>
    %136 = vector.shape_cast %135 : vector<2x4x80xf32> to vector<2x320xf32>
    %c0_59 = arith.constant 0 : index
    %c0_60 = arith.constant 0 : index
    %137 = vector.load %arg12[%c0_59, %c0_60] : memref<2x320xf32, #tpu.memory_space<vmem>>, vector<2x320xf32>
    tpu.vector_store %arg12[%c0_59, %c0_60], %136 {strides = array<i32>} : memref<2x320xf32, #tpu.memory_space<vmem>>, vector<2x320xf32>,
    %c0_61 = arith.constant 0 : index
    %c0_62 = arith.constant 0 : index
    %138 = vector.load %arg6[%c0_61, %c0_62] : memref<320x50xf32, #tpu.memory_space<vmem>>, vector<320x50xf32>
    %cst_63 = arith.constant dense<0.000000e+00> : vector<2x50xf32>
    %139 = tpu.matmul %136, %138, %cst_63 {dimension_numbers = #tpu.dot_dimension_numbers<[1], [0], [0], [1], [0, 0, 1, 1], [], []>} : vector<2x320xf32>, vector<320x50xf32>, vector<2x50xf32> -> vector<2x50xf32>
    %c0_64 = arith.constant 0 : index
    %c0_65 = arith.constant 0 : index
    %140 = vector.load %arg7[%c0_64, %c0_65] : memref<1x50xf32, #tpu.memory_space<vmem>>, vector<1x50xf32>
    %141 = vector.broadcast %140 : vector<1x50xf32> to vector<2x50xf32>
    %142 = arith.addf %139, %141 : vector<2x50xf32>
    %cst_66 = arith.constant 0.000000e+00 : f32
    %143 = vector.broadcast %cst_66 : f32 to vector<2x50xf32>
    %144 = arith.maximumf %142, %143 : vector<2x50xf32>
    %c0_67 = arith.constant 0 : index
    %c0_68 = arith.constant 0 : index
    %145 = vector.load %arg8[%c0_67, %c0_68] : memref<50x10xf32, #tpu.memory_space<vmem>>, vector<50x10xf32>
    %cst_69 = arith.constant dense<0.000000e+00> : vector<2x10xf32>
    %146 = tpu.matmul %144, %145, %cst_69 {dimension_numbers = #tpu.dot_dimension_numbers<[1], [0], [0], [1], [0, 0, 1, 1], [], []>} : vector<2x50xf32>, vector<50x10xf32>, vector<2x10xf32> -> vector<2x10xf32>
    %c0_70 = arith.constant 0 : index
    %c0_71 = arith.constant 0 : index
    %147 = vector.load %arg9[%c0_70, %c0_71] : memref<1x10xf32, #tpu.memory_space<vmem>>, vector<1x10xf32>
    %148 = vector.broadcast %147 : vector<1x10xf32> to vector<2x10xf32>
    %149 = arith.addf %146, %148 : vector<2x10xf32>
    %c0_72 = arith.constant 0 : index
    %c0_73 = arith.constant 0 : index
    %150 = vector.load %arg10[%c0_72, %c0_73] : memref<2x10xf32, #tpu.memory_space<vmem>>, vector<2x10xf32>
    tpu.vector_store %arg10[%c0_72, %c0_73], %149 {strides = array<i32>} : memref<2x10xf32, #tpu.memory_space<vmem>>, vector<2x10xf32>,
    return
  }
  func.func @transform_0(%arg0: i32) -> (i32, i32, i32) {
    %c0_i32 = arith.constant 0 : i32
    %c0_i32_0 = arith.constant 0 : i32
    %c0_i32_1 = arith.constant 0 : i32
    return %arg0, %c0_i32, %c0_i32_0 : i32, i32, i32
  }
  func.func @transform_1(%arg0: i32) -> (i32, i32, i32) {
    %c0_i32 = arith.constant 0 : i32
    %c0_i32_0 = arith.constant 0 : i32
    %c0_i32_1 = arith.constant 0 : i32
    %c0_i32_2 = arith.constant 0 : i32
    return %c0_i32, %c0_i32_0, %c0_i32_1 : i32, i32, i32
  }
  func.func @transform_2(%arg0: i32) -> (i32, i32) {
    %c0_i32 = arith.constant 0 : i32
    %c0_i32_0 = arith.constant 0 : i32
    %c0_i32_1 = arith.constant 0 : i32
    return %c0_i32, %c0_i32_0 : i32, i32
  }
  func.func @transform_3(%arg0: i32) -> (i32, i32, i32) {
    %c0_i32 = arith.constant 0 : i32
    %c0_i32_0 = arith.constant 0 : i32
    %c0_i32_1 = arith.constant 0 : i32
    %c0_i32_2 = arith.constant 0 : i32
    return %c0_i32, %c0_i32_0, %c0_i32_1 : i32, i32, i32
  }
  func.func @transform_4(%arg0: i32) -> (i32, i32) {
    %c0_i32 = arith.constant 0 : i32
    %c0_i32_0 = arith.constant 0 : i32
    %c0_i32_1 = arith.constant 0 : i32
    return %c0_i32, %c0_i32_0 : i32, i32
  }
  func.func @transform_5(%arg0: i32) -> (i32, i32) {
    %c0_i32 = arith.constant 0 : i32
    %c0_i32_0 = arith.constant 0 : i32
    %c0_i32_1 = arith.constant 0 : i32
    return %c0_i32, %c0_i32_0 : i32, i32
  }
  func.func @transform_6(%arg0: i32) -> (i32, i32) {
    %c0_i32 = arith.constant 0 : i32
    %c0_i32_0 = arith.constant 0 : i32
    %c0_i32_1 = arith.constant 0 : i32
    return %c0_i32, %c0_i32_0 : i32, i32
  }
  func.func @transform_7(%arg0: i32) -> (i32, i32) {
    %c0_i32 = arith.constant 0 : i32
    %c0_i32_0 = arith.constant 0 : i32
    %c0_i32_1 = arith.constant 0 : i32
    return %c0_i32, %c0_i32_0 : i32, i32
  }
  func.func @transform_8(%arg0: i32) -> (i32, i32) {
    %c0_i32 = arith.constant 0 : i32
    %c0_i32_0 = arith.constant 0 : i32
    %c0_i32_1 = arith.constant 0 : i32
    return %c0_i32, %c0_i32_0 : i32, i32
  }
  func.func @transform_9(%arg0: i32) -> (i32, i32) {
    %c0_i32 = arith.constant 0 : i32
    %c0_i32_0 = arith.constant 0 : i32
    return %arg0, %c0_i32 : i32, i32
  }
  func.func @transform_10(%arg0: i32) -> (i32, i32) {
    %c0_i32 = arith.constant 0 : i32
    %c0_i32_0 = arith.constant 0 : i32
    return %arg0, %c0_i32 : i32, i32
  }
  func.func @transform_11(%arg0: i32) -> (i32, i32) {
    %c0_i32 = arith.constant 0 : i32
    %c0_i32_0 = arith.constant 0 : i32
    return %arg0, %c0_i32 : i32, i32
  }
}

</mosaic_0001>

<llo_original>
// kernel: net1_forward.1
$region0: #{net1_forward.1}
  #allocation0 [shape = 'u32[]', space=smem, size = 0x4, offset = 0x4, fixed_abs, tag = 'smem constant byte address 0x4 - core index']
  #allocation1 [shape = 'u32[144,128]{1,0:T(1,128)}', space=vmem, size = 0x12000, scoped, tag = 'internal scratch']
  %s0 = inlined_call_operand.vmem [shape: f32[2,28,28], index: 0, kind: input, shape index: {}]
  %s1 = inlined_call_operand.vmem [shape: f32[5,28,240], index: 1, kind: input, shape index: {}]
  %s2 = inlined_call_operand.vmem [shape: f32[1,240], index: 2, kind: input, shape index: {}]
  %s3 = inlined_call_operand.vmem [shape: f32[5,120,160], index: 3, kind: input, shape index: {}]
  %s4 = inlined_call_operand.vmem [shape: f32[1,160], index: 4, kind: input, shape index: {}]
  %s5 = inlined_call_operand.vmem [shape: f32[320,50], index: 5, kind: input, shape index: {}]
  %s6 = inlined_call_operand.vmem [shape: f32[1,50], index: 6, kind: input, shape index: {}]
  %s7 = inlined_call_operand.vmem [shape: f32[50,10], index: 7, kind: input, shape index: {}]
  %s8 = inlined_call_operand.vmem [shape: f32[1,10], index: 8, kind: input, shape index: {}]
  %s9 = inlined_call_operand.hbm [shape: f32[2,10], index: 9, kind: output, shape index: {0}]
  %s10 = inlined_call_operand.vmem [shape: f32[2,1440], index: 10, kind: output, shape index: {1}]
  %s11 = inlined_call_operand.vmem [shape: f32[2,320], index: 11, kind: output, shape index: {2}]
  %12 = xla_tuple %s9, %s10, %s11
  %s13 = sld [smem:[#allocation0]]
  $region62: #{net1_forward.1} parent=0
    _
  %s15 = ssub.s32 1, %s13
  %s16 = scalar_select 0, %s15, %s13
  $region1: #{net1_forward.1} parent=0
    #allocation2 [shape = 'u8[1024]{0}', space=vmem, size = 0x400, scoped, tag = 'output window, operand 0, single buffered']
    #allocation3 [shape = 's32[1]{0}', space=sflag, size = 0x4, scoped, tag = 'scoped memory for net1_forward.1']
    %17 = vsyncpa [#allocation3], 0
    // Predicated region
    $region2: #{net1_forward.1} parent=1 // pred_check
      _
    $region3: #{net1_forward.1} parent=1 // pred_check_branch
      %19 = sbr.rel (0) target = $region5
    $region4: #{net1_forward.1} parent=1 // pred_region
      _
    $region5: #{net1_forward.1} parent=1 // pred_fallthru
      _
    // Predicated region
    $region6: #{net1_forward.1} parent=1 // pred_check
      _
    $region7: #{net1_forward.1} parent=1 // pred_check_branch
      %21 = sbr.rel (0) target = $region9
    $region8: #{net1_forward.1} parent=1 // pred_region
      _
    $region9: #{net1_forward.1} parent=1 // pred_fallthru
      _
    // Predicated region
    $region10: #{net1_forward.1} parent=1 // pred_check
      _
    $region11: #{net1_forward.1} parent=1 // pred_check_branch
      %23 = sbr.rel (0) target = $region13
    $region12: #{net1_forward.1} parent=1 // pred_region
      _
    $region13: #{net1_forward.1} parent=1 // pred_fallthru
      _
    // Predicated region
    $region14: #{net1_forward.1} parent=1 // pred_check
      _
    $region15: #{net1_forward.1} parent=1 // pred_check_branch
      %25 = sbr.rel (0) target = $region17
    $region16: #{net1_forward.1} parent=1 // pred_region
      _
    $region17: #{net1_forward.1} parent=1 // pred_fallthru
      _
    // Predicated region
    $region18: #{net1_forward.1} parent=1 // pred_check
      _
    $region19: #{net1_forward.1} parent=1 // pred_check_branch
      %27 = sbr.rel (0) target = $region21
    $region20: #{net1_forward.1} parent=1 // pred_region
      _
    $region21: #{net1_forward.1} parent=1 // pred_fallthru
      _
    // Predicated region
    $region22: #{net1_forward.1} parent=1 // pred_check
      _
    $region23: #{net1_forward.1} parent=1 // pred_check_branch
      %29 = sbr.rel (0) target = $region25
    $region24: #{net1_forward.1} parent=1 // pred_region
      _
    $region25: #{net1_forward.1} parent=1 // pred_fallthru
      _
    // Predicated region
    $region26: #{net1_forward.1} parent=1 // pred_check
      _
    $region27: #{net1_forward.1} parent=1 // pred_check_branch
      %31 = sbr.rel (0) target = $region29
    $region28: #{net1_forward.1} parent=1 // pred_region
      _
    $region29: #{net1_forward.1} parent=1 // pred_fallthru
      _
    // Predicated region
    $region30: #{net1_forward.1} parent=1 // pred_check
      _
    $region31: #{net1_forward.1} parent=1 // pred_check_branch
      %33 = sbr.rel (0) target = $region33
    $region32: #{net1_forward.1} parent=1 // pred_region
      _
    $region33: #{net1_forward.1} parent=1 // pred_fallthru
      _
    // Predicated region
    $region34: #{net1_forward.1} parent=1 // pred_check
      _
    $region35: #{net1_forward.1} parent=1 // pred_check_branch
      %35 = sbr.rel (0) target = $region37
    $region36: #{net1_forward.1} parent=1 // pred_region
      _
    $region37: #{net1_forward.1} parent=1 // pred_fallthru
      _
    %v36 = vld [vmem:[%s2] sm:$0x3]
    %v38 = vlaneseq
    %v39 = vshrl.u32 %v38, 7
    %v40 = vsub.s32 0, %v39
    %v41 = vrot.slane %v36, %v40
    %v42 = vlaneseq
    %v43 = vshrl.u32 %v42, 7
    %v44 = vsub.s32 1, %v43
    %v45 = vrot.slane %v36, %v44
    %v48 = vadd.f32 %v41, 0.0
    %v49 = vadd.f32 %v45, 0.0
    %v50 = vld [vmem:[%s0] sm:$0xff]
    %v51 = vld [vmem:[%s0 + $0x8] sm:$0xff]
    %v52 = vld [vmem:[%s0 + $0x10] sm:$0xff]
    %v53 = vld [vmem:[%s0 + $0x20] sm:$0xff]
    %v54 = vld [vmem:[%s0 + $0x28] sm:$0xff]
    %v55 = vld [vmem:[%s0 + $0x30] sm:$0xff]
    %v56 = vld [vmem:[%s1] sm:$0xff]
    %v57 = vld [vmem:[%s1 + $0x8] sm:$0xff]
    %v58 = vld [vmem:[%s1 + $0x10] sm:$0xff]
    %v59 = vld [vmem:[%s1 + $0x18] sm:$0xff]
    %v60 = vld [vmem:[%s1 + $0x20] sm:$0xff]
    %v61 = vld [vmem:[%s1 + $0x28] sm:$0xff]
    %v62 = vld [vmem:[%s1 + $0x30] sm:$0xf]
    %v63 = vld [vmem:[%s1 + $0x38] sm:$0xf]
    %vm64 = vcmask 228352
    %v66 = vsel %vm64, %v50, 0
    %v69 = vsel %vm64, %v51, 0
    %v72 = vsel %vm64, %v52, 0
    %v75 = vsel %vm64, %v53, 0
    %v78 = vsel %vm64, %v54, 0
    %v81 = vsel %vm64, %v55, 0
    %vm83 = vcmask 1043456
    %v85 = vsel %vm83, %v62, 0
    %v88 = vsel %vm83, %v63, 0
    %90 = vmatprep.subr.mxu0 %v57
    %91 = vmatpush1.msra.mxu0 %v56
    %92 = vmatprep.subr.mxu0 %v59
    %93 = vmatpush1.msra.mxu0 %v58
    %94 = vmatprep.subr.mxu0 %v61
    %95 = vmatpush1.msra.mxu0 %v60
    %96 = vmatprep.subr.mxu0 %v88
    %97 = vmatpush1.msra.mxu0 %v85
    %98 = vmatprep.subr.mxu0 0.0
    %99 = vmatpush1.msra.mxu0 0.0
    %100 = vmatprep.subr.mxu0 0.0
    %101 = vmatpush1.msra.mxu0 0.0
    %102 = vmatprep.subr.mxu0 0.0
    %103 = vmatpush1.msra.mxu0 0.0
    %104 = vmatprep.subr.mxu0 0.0
    %105 = vmatpush1.msra.mxu0 0.0
    %106 = vmatprep.subr.mxu0 0.0
    %107 = vmatpush1.msra.mxu0 0.0
    %108 = vmatprep.subr.mxu0 0.0
    %109 = vmatpush1.msra.mxu0 0.0
    %110 = vmatprep.subr.mxu0 0.0
    %111 = vmatpush1.msra.mxu0 0.0
    %112 = vmatprep.subr.mxu0 0.0
    %113 = vmatpush1.msra.mxu0 0.0
    %114 = vmatprep.subr.mxu0 0.0
    %115 = vmatpush1.msra.mxu0 0.0
    %116 = vmatprep.subr.mxu0 0.0
    %117 = vmatpush1.msra.mxu0 0.0
    %118 = vmatprep.subr.mxu0 0.0
    %119 = vmatpush1.msra.mxu0 0.0
    %120 = vmatprep.subr.mxu0 0.0
    %121 = vmatpush1.msra.mxu0 0.0
    %122 = vmatprep.subr.mxu0 0.0
    %123 = vmatpush1.msra.mxu0 0.0
    %124 = vmatprep.subr.mxu0 0.0
    %125 = vmatpush1.msra.mxu0 0.0
    %126 = vmatprep.subr.mxu0 0.0
    %127 = vmatpush1.msra.mxu0 0.0
    %128 = vmatprep.subr.mxu0 0.0
    %129 = vmatpush1.msra.mxu0 0.0
    %130 = vmatprep.subr.mxu0 0.0
    %131 = vmatpush1.msra.mxu0 0.0
    %132 = vmatprep.subr.mxu0 0.0
    %133 = vmatpush1.msra.mxu0 0.0
    %134 = vmatprep.subr.mxu0 0.0
    %135 = vmatpush1.msra.mxu0 0.0
    %136 = vmatprep.subr.mxu0 0.0
    %137 = vmatpush1.msra.mxu0 0.0
    %138 = vmatprep.subr.mxu0 0.0
    %139 = vmatpush1.msra.mxu0 0.0
    %140 = vmatprep.subr.mxu0 0.0
    %141 = vmatpush1.msra.mxu0 0.0
    %142 = vmatprep.subr.mxu0 0.0
    %143 = vmatpush1.msra.mxu0 0.0
    %144 = vmatprep.subr.mxu0 0.0
    %145 = vmatpush1.msra.mxu0 0.0
    %146 = vmatprep.subr.mxu0 0.0
    %147 = vmatpush1.msra.mxu0 0.0
    %148 = vmatprep.subr.mxu0 0.0
    %149 = vmatpush1.msra.mxu0 0.0
    %150 = vmatprep.subr.mxu0 0.0
    %151 = vmatpush1.msra.mxu0 0.0
    %152 = vmatprep.subr.mxu0 0.0
    %153 = vmatpush1.msra.mxu0 0.0
    %154 = vmatprep.mubr.f32.mxu0 0.0
    %155 = vmatmul.mubr.f32.gmra.mrb[0].mxu0 %v66
    %v156 = vpop.f32.mrb[0].mxu0
    %v157 = vadd.f32 0.0, %v156
    %v158 = vpop.f32.mrb[0].mxu0
    %v159 = vadd.f32 0.0, %v158
    %160 = vmatprep.mubr.f32.mxu0 0.0
    %161 = vmatmul.mubr.f32.gmra.mrb[0].mxu0 %v69
    %v162 = vpop.f32.mrb[0].mxu0
    %v163 = vadd.f32 0.0, %v162
    %v164 = vpop.f32.mrb[0].mxu0
    %v165 = vadd.f32 0.0, %v164
    %166 = vmatprep.mubr.f32.mxu0 0.0
    %167 = vmatmul.mubr.f32.gmra.mrb[0].mxu0 %v72
    %v168 = vpop.f32.mrb[0].mxu0
    %v169 = vadd.f32 0.0, %v168
    %v170 = vpop.f32.mrb[0].mxu0
    %v171 = vadd.f32 0.0, %v170
    %172 = vmatprep.mubr.f32.mxu0 0.0
    %173 = vmatmul.mubr.f32.gmra.mrb[0].mxu0 %v75
    %v174 = vpop.f32.mrb[0].mxu0
    %v175 = vadd.f32 0.0, %v174
    %v176 = vpop.f32.mrb[0].mxu0
    %v177 = vadd.f32 0.0, %v176
    %178 = vmatprep.mubr.f32.mxu0 0.0
    %179 = vmatmul.mubr.f32.gmra.mrb[0].mxu0 %v78
    %v180 = vpop.f32.mrb[0].mxu0
    %v181 = vadd.f32 0.0, %v180
    %v182 = vpop.f32.mrb[0].mxu0
    %v183 = vadd.f32 0.0, %v182
    %184 = vmatprep.mubr.f32.mxu0 0.0
    %185 = vmatmul.mubr.f32.gmra.mrb[0].mxu0 %v81
    %v186 = vpop.f32.mrb[0].mxu0
    %v187 = vadd.f32 0.0, %v186
    %v188 = vpop.f32.mrb[0].mxu0
    %v189 = vadd.f32 0.0, %v188
    %190 = vdwg.mxu0
    %v191 = vadd.f32 %v48, %v157
    %v192 = vadd.f32 %v49, %v159
    %v193 = vadd.f32 %v48, %v163
    %v194 = vadd.f32 %v49, %v165
    %v195 = vadd.f32 %v48, %v169
    %v196 = vadd.f32 %v49, %v171
    %v197 = vadd.f32 %v48, %v175
    %v198 = vadd.f32 %v49, %v177
    %v199 = vadd.f32 %v48, %v181
    %v200 = vadd.f32 %v49, %v183
    %v201 = vadd.f32 %v48, %v187
    %v202 = vadd.f32 %v49, %v189
    %v203 = vld [vmem:[%s0 + $0x1] sm:$0xff]
    %v204 = vld [vmem:[%s0 + $0x9] sm:$0xff]
    %v205 = vld [vmem:[%s0 + $0x11] sm:$0xff]
    %v206 = vld [vmem:[%s0 + $0x21] sm:$0xff]
    %v207 = vld [vmem:[%s0 + $0x29] sm:$0xff]
    %v208 = vld [vmem:[%s0 + $0x31] sm:$0xff]
    %s209 = scalar_lea.vmem %s1, 64
    %v210 = vld [vmem:[%s209] sm:$0xff]
    %v211 = vld [vmem:[%s209 + $0x8] sm:$0xff]
    %v212 = vld [vmem:[%s209 + $0x10] sm:$0xff]
    %v213 = vld [vmem:[%s209 + $0x18] sm:$0xff]
    %v214 = vld [vmem:[%s209 + $0x20] sm:$0xff]
    %v215 = vld [vmem:[%s209 + $0x28] sm:$0xff]
    %v216 = vld [vmem:[%s209 + $0x30] sm:$0xf]
    %v217 = vld [vmem:[%s209 + $0x38] sm:$0xf]
    %v219 = vsel %vm64, %v203, 0
    %v222 = vsel %vm64, %v204, 0
    %v225 = vsel %vm64, %v205, 0
    %v228 = vsel %vm64, %v206, 0
    %v231 = vsel %vm64, %v207, 0
    %v234 = vsel %vm64, %v208, 0
    %v237 = vsel %vm83, %v216, 0
    %v240 = vsel %vm83, %v217, 0
    %242 = vmatprep.subr.mxu0 %v211
    %243 = vmatpush1.msra.mxu0 %v210
    %244 = vmatprep.subr.mxu0 %v213
    %245 = vmatpush1.msra.mxu0 %v212
    %246 = vmatprep.subr.mxu0 %v215
    %247 = vmatpush1.msra.mxu0 %v214
    %248 = vmatprep.subr.mxu0 %v240
    %249 = vmatpush1.msra.mxu0 %v237
    %250 = vmatprep.subr.mxu0 0.0
    %251 = vmatpush1.msra.mxu0 0.0
    %252 = vmatprep.subr.mxu0 0.0
    %253 = vmatpush1.msra.mxu0 0.0
    %254 = vmatprep.subr.mxu0 0.0
    %255 = vmatpush1.msra.mxu0 0.0
    %256 = vmatprep.subr.mxu0 0.0
    %257 = vmatpush1.msra.mxu0 0.0
    %258 = vmatprep.subr.mxu0 0.0
    %259 = vmatpush1.msra.mxu0 0.0
    %260 = vmatprep.subr.mxu0 0.0
    %261 = vmatpush1.msra.mxu0 0.0
    %262 = vmatprep.subr.mxu0 0.0
    %263 = vmatpush1.msra.mxu0 0.0
    %264 = vmatprep.subr.mxu0 0.0
    %265 = vmatpush1.msra.mxu0 0.0
    %266 = vmatprep.subr.mxu0 0.0
    %267 = vmatpush1.msra.mxu0 0.0
    %268 = vmatprep.subr.mxu0 0.0
    %269 = vmatpush1.msra.mxu0 0.0
    %270 = vmatprep.subr.mxu0 0.0
    %271 = vmatpush1.msra.mxu0 0.0
    %272 = vmatprep.subr.mxu0 0.0
    %273 = vmatpush1.msra.mxu0 0.0
    %274 = vmatprep.subr.mxu0 0.0
    %275 = vmatpush1.msra.mxu0 0.0
    %276 = vmatprep.subr.mxu0 0.0
    %277 = vmatpush1.msra.mxu0 0.0
    %278 = vmatprep.subr.mxu0 0.0
    %279 = vmatpush1.msra.mxu0 0.0
    %280 = vmatprep.subr.mxu0 0.0
    %281 = vmatpush1.msra.mxu0 0.0
    %282 = vmatprep.subr.mxu0 0.0
    %283 = vmatpush1.msra.mxu0 0.0
    %284 = vmatprep.subr.mxu0 0.0
    %285 = vmatpush1.msra.mxu0 0.0
    %286 = vmatprep.subr.mxu0 0.0
    %287 = vmatpush1.msra.mxu0 0.0
    %288 = vmatprep.subr.mxu0 0.0
    %289 = vmatpush1.msra.mxu0 0.0
    %290 = vmatprep.subr.mxu0 0.0
    %291 = vmatpush1.msra.mxu0 0.0
    %292 = vmatprep.subr.mxu0 0.0
    %293 = vmatpush1.msra.mxu0 0.0
    %294 = vmatprep.subr.mxu0 0.0
    %295 = vmatpush1.msra.mxu0 0.0
    %296 = vmatprep.subr.mxu0 0.0
    %297 = vmatpush1.msra.mxu0 0.0
    %298 = vmatprep.subr.mxu0 0.0
    %299 = vmatpush1.msra.mxu0 0.0
    %300 = vmatprep.subr.mxu0 0.0
    %301 = vmatpush1.msra.mxu0 0.0
    %302 = vmatprep.subr.mxu0 0.0
    %303 = vmatpush1.msra.mxu0 0.0
    %304 = vmatprep.subr.mxu0 0.0
    %305 = vmatpush1.msra.mxu0 0.0
    %306 = vmatprep.mubr.f32.mxu0 0.0
    %307 = vmatmul.mubr.f32.gmra.mrb[0].mxu0 %v219
    %v308 = vpop.f32.mrb[0].mxu0
    %v309 = vadd.f32 0.0, %v308
    %v310 = vpop.f32.mrb[0].mxu0
    %v311 = vadd.f32 0.0, %v310
    %312 = vmatprep.mubr.f32.mxu0 0.0
    %313 = vmatmul.mubr.f32.gmra.mrb[0].mxu0 %v222
    %v314 = vpop.f32.mrb[0].mxu0
    %v315 = vadd.f32 0.0, %v314
    %v316 = vpop.f32.mrb[0].mxu0
    %v317 = vadd.f32 0.0, %v316
    %318 = vmatprep.mubr.f32.mxu0 0.0
    %319 = vmatmul.mubr.f32.gmra.mrb[0].mxu0 %v225
    %v320 = vpop.f32.mrb[0].mxu0
    %v321 = vadd.f32 0.0, %v320
    %v322 = vpop.f32.mrb[0].mxu0
    %v323 = vadd.f32 0.0, %v322
    %324 = vmatprep.mubr.f32.mxu0 0.0
    %325 = vmatmul.mubr.f32.gmra.mrb[0].mxu0 %v228
    %v326 = vpop.f32.mrb[0].mxu0
    %v327 = vadd.f32 0.0, %v326
    %v328 = vpop.f32.mrb[0].mxu0
    %v329 = vadd.f32 0.0, %v328
    %330 = vmatprep.mubr.f32.mxu0 0.0
    %331 = vmatmul.mubr.f32.gmra.mrb[0].mxu0 %v231
    %v332 = vpop.f32.mrb[0].mxu0
    %v333 = vadd.f32 0.0, %v332
    %v334 = vpop.f32.mrb[0].mxu0
    %v335 = vadd.f32 0.0, %v334
    %336 = vmatprep.mubr.f32.mxu0 0.0
    %337 = vmatmul.mubr.f32.gmra.mrb[0].mxu0 %v234
    %v338 = vpop.f32.mrb[0].mxu0
    %v339 = vadd.f32 0.0, %v338
    %v340 = vpop.f32.mrb[0].mxu0
    %v341 = vadd.f32 0.0, %v340
    %342 = vdwg.mxu0
    %v343 = vadd.f32 %v191, %v309
    %v344 = vadd.f32 %v192, %v311
    %v345 = vadd.f32 %v193, %v315
    %v346 = vadd.f32 %v194, %v317
    %v347 = vadd.f32 %v195, %v321
    %v348 = vadd.f32 %v196, %v323
    %v349 = vadd.f32 %v197, %v327
    %v350 = vadd.f32 %v198, %v329
    %v351 = vadd.f32 %v199, %v333
    %v352 = vadd.f32 %v200, %v335
    %v353 = vadd.f32 %v201, %v339
    %v354 = vadd.f32 %v202, %v341
    %v355 = vld [vmem:[%s0 + $0x2] sm:$0xff]
    %v356 = vld [vmem:[%s0 + $0xa] sm:$0xff]
    %v357 = vld [vmem:[%s0 + $0x12] sm:$0xff]
    %v358 = vld [vmem:[%s0 + $0x22] sm:$0xff]
    %v359 = vld [vmem:[%s0 + $0x2a] sm:$0xff]
    %v360 = vld [vmem:[%s0 + $0x32] sm:$0xff]
    %s361 = scalar_lea.vmem %s1, 128
    %v362 = vld [vmem:[%s361] sm:$0xff]
    %v363 = vld [vmem:[%s361 + $0x8] sm:$0xff]
    %v364 = vld [vmem:[%s361 + $0x10] sm:$0xff]
    %v365 = vld [vmem:[%s361 + $0x18] sm:$0xff]
    %v366 = vld [vmem:[%s361 + $0x20] sm:$0xff]
    %v367 = vld [vmem:[%s361 + $0x28] sm:$0xff]
    %v368 = vld [vmem:[%s361 + $0x30] sm:$0xf]
    %v369 = vld [vmem:[%s361 + $0x38] sm:$0xf]
    %v371 = vsel %vm64, %v355, 0
    %v374 = vsel %vm64, %v356, 0
    %v377 = vsel %vm64, %v357, 0
    %v380 = vsel %vm64, %v358, 0
    %v383 = vsel %vm64, %v359, 0
    %v386 = vsel %vm64, %v360, 0
    %v389 = vsel %vm83, %v368, 0
    %v392 = vsel %vm83, %v369, 0
    %394 = vmatprep.subr.mxu0 %v363
    %395 = vmatpush1.msra.mxu0 %v362
    %396 = vmatprep.subr.mxu0 %v365
    %397 = vmatpush1.msra.mxu0 %v364
    %398 = vmatprep.subr.mxu0 %v367
    %399 = vmatpush1.msra.mxu0 %v366
    %400 = vmatprep.subr.mxu0 %v392
    %401 = vmatpush1.msra.mxu0 %v389
    %402 = vmatprep.subr.mxu0 0.0
    %403 = vmatpush1.msra.mxu0 0.0
    %404 = vmatprep.subr.mxu0 0.0
    %405 = vmatpush1.msra.mxu0 0.0
    %406 = vmatprep.subr.mxu0 0.0
    %407 = vmatpush1.msra.mxu0 0.0
    %408 = vmatprep.subr.mxu0 0.0
    %409 = vmatpush1.msra.mxu0 0.0
    %410 = vmatprep.subr.mxu0 0.0
    %411 = vmatpush1.msra.mxu0 0.0
    %412 = vmatprep.subr.mxu0 0.0
    %413 = vmatpush1.msra.mxu0 0.0
    %414 = vmatprep.subr.mxu0 0.0
    %415 = vmatpush1.msra.mxu0 0.0
    %416 = vmatprep.subr.mxu0 0.0
    %417 = vmatpush1.msra.mxu0 0.0
    %418 = vmatprep.subr.mxu0 0.0
    %419 = vmatpush1.msra.mxu0 0.0
    %420 = vmatprep.subr.mxu0 0.0
    %421 = vmatpush1.msra.mxu0 0.0
    %422 = vmatprep.subr.mxu0 0.0
    %423 = vmatpush1.msra.mxu0 0.0
    %424 = vmatprep.subr.mxu0 0.0
    %425 = vmatpush1.msra.mxu0 0.0
    %426 = vmatprep.subr.mxu0 0.0
    %427 = vmatpush1.msra.mxu0 0.0
    %428 = vmatprep.subr.mxu0 0.0
    %429 = vmatpush1.msra.mxu0 0.0
    %430 = vmatprep.subr.mxu0 0.0
    %431 = vmatpush1.msra.mxu0 0.0
    %432 = vmatprep.subr.mxu0 0.0
    %433 = vmatpush1.msra.mxu0 0.0
    %434 = vmatprep.subr.mxu0 0.0
    %435 = vmatpush1.msra.mxu0 0.0
    %436 = vmatprep.subr.mxu0 0.0
    %437 = vmatpush1.msra.mxu0 0.0
    %438 = vmatprep.subr.mxu0 0.0
    %439 = vmatpush1.msra.mxu0 0.0
    %440 = vmatprep.subr.mxu0 0.0
    %441 = vmatpush1.msra.mxu0 0.0
    %442 = vmatprep.subr.mxu0 0.0
    %443 = vmatpush1.msra.mxu0 0.0
    %444 = vmatprep.subr.mxu0 0.0
    %445 = vmatpush1.msra.mxu0 0.0
    %446 = vmatprep.subr.mxu0 0.0
    %447 = vmatpush1.msra.mxu0 0.0
    %448 = vmatprep.subr.mxu0 0.0
    %449 = vmatpush1.msra.mxu0 0.0
    %450 = vmatprep.subr.mxu0 0.0
    %451 = vmatpush1.msra.mxu0 0.0
    %452 = vmatprep.subr.mxu0 0.0
    %453 = vmatpush1.msra.mxu0 0.0
    %454 = vmatprep.subr.mxu0 0.0
    %455 = vmatpush1.msra.mxu0 0.0
    %456 = vmatprep.subr.mxu0 0.0
    %457 = vmatpush1.msra.mxu0 0.0
    %458 = vmatprep.mubr.f32.mxu0 0.0
    %459 = vmatmul.mubr.f32.gmra.mrb[0].mxu0 %v371
    %v460 = vpop.f32.mrb[0].mxu0
    %v461 = vadd.f32 0.0, %v460
    %v462 = vpop.f32.mrb[0].mxu0
    %v463 = vadd.f32 0.0, %v462
    %464 = vmatprep.mubr.f32.mxu0 0.0
    %465 = vmatmul.mubr.f32.gmra.mrb[0].mxu0 %v374
    %v466 = vpop.f32.mrb[0].mxu0
    %v467 = vadd.f32 0.0, %v466
    %v468 = vpop.f32.mrb[0].mxu0
    %v469 = vadd.f32 0.0, %v468
    %470 = vmatprep.mubr.f32.mxu0 0.0
    %471 = vmatmul.mubr.f32.gmra.mrb[0].mxu0 %v377
    %v472 = vpop.f32.mrb[0].mxu0
    %v473 = vadd.f32 0.0, %v472
    %v474 = vpop.f32.mrb[0].mxu0
    %v475 = vadd.f32 0.0, %v474
    %476 = vmatprep.mubr.f32.mxu0 0.0
    %477 = vmatmul.mubr.f32.gmra.mrb[0].mxu0 %v380
    %v478 = vpop.f32.mrb[0].mxu0
    %v479 = vadd.f32 0.0, %v478
    %v480 = vpop.f32.mrb[0].mxu0
    %v481 = vadd.f32 0.0, %v480
    %482 = vmatprep.mubr.f32.mxu0 0.0
    %483 = vmatmul.mubr.f32.gmra.mrb[0].mxu0 %v383
    %v484 = vpop.f32.mrb[0].mxu0
    %v485 = vadd.f32 0.0, %v484
    %v486 = vpop.f32.mrb[0].mxu0
    %v487 = vadd.f32 0.0, %v486
    %488 = vmatprep.mubr.f32.mxu0 0.0
    %489 = vmatmul.mubr.f32.gmra.mrb[0].mxu0 %v386
    %v490 = vpop.f32.mrb[0].mxu0
    %v491 = vadd.f32 0.0, %v490
    %v492 = vpop.f32.mrb[0].mxu0
    %v493 = vadd.f32 0.0, %v492
    %494 = vdwg.mxu0
    %v495 = vadd.f32 %v343, %v461
    %v496 = vadd.f32 %v344, %v463
    %v497 = vadd.f32 %v345, %v467
    %v498 = vadd.f32 %v346, %v469
    %v499 = vadd.f32 %v347, %v473
    %v500 = vadd.f32 %v348, %v475
    %v501 = vadd.f32 %v349, %v479
    %v502 = vadd.f32 %v350, %v481
    %v503 = vadd.f32 %v351, %v485
    %v504 = vadd.f32 %v352, %v487
    %v505 = vadd.f32 %v353, %v491
    %v506 = vadd.f32 %v354, %v493
    %v507 = vld [vmem:[%s0 + $0x3] sm:$0xff]
    %v508 = vld [vmem:[%s0 + $0xb] sm:$0xff]
    %v509 = vld [vmem:[%s0 + $0x13] sm:$0xff]
    %v510 = vld [vmem:[%s0 + $0x23] sm:$0xff]
    %v511 = vld [vmem:[%s0 + $0x2b] sm:$0xff]
    %v512 = vld [vmem:[%s0 + $0x33] sm:$0xff]
    %s513 = scalar_lea.vmem %s1, 192
    %v514 = vld [vmem:[%s513] sm:$0xff]
    %v515 = vld [vmem:[%s513 + $0x8] sm:$0xff]
    %v516 = vld [vmem:[%s513 + $0x10] sm:$0xff]
    %v517 = vld [vmem:[%s513 + $0x18] sm:$0xff]
    %v518 = vld [vmem:[%s513 + $0x20] sm:$0xff]
    %v519 = vld [vmem:[%s513 + $0x28] sm:$0xff]
    %v520 = vld [vmem:[%s513 + $0x30] sm:$0xf]
    %v521 = vld [vmem:[%s513 + $0x38] sm:$0xf]
    %v523 = vsel %vm64, %v507, 0
    %v526 = vsel %vm64, %v508, 0
    %v529 = vsel %vm64, %v509, 0
    %v532 = vsel %vm64, %v510, 0
    %v535 = vsel %vm64, %v511, 0
    %v538 = vsel %vm64, %v512, 0
    %v541 = vsel %vm83, %v520, 0
    %v544 = vsel %vm83, %v521, 0
    %546 = vmatprep.subr.mxu0 %v515
    %547 = vmatpush1.msra.mxu0 %v514
    %548 = vmatprep.subr.mxu0 %v517
    %549 = vmatpush1.msra.mxu0 %v516
    %550 = vmatprep.subr.mxu0 %v519
    %551 = vmatpush1.msra.mxu0 %v518
    %552 = vmatprep.subr.mxu0 %v544
    %553 = vmatpush1.msra.mxu0 %v541
    %554 = vmatprep.subr.mxu0 0.0
    %555 = vmatpush1.msra.mxu0 0.0
    %556 = vmatprep.subr.mxu0 0.0
    %557 = vmatpush1.msra.mxu0 0.0
    %558 = vmatprep.subr.mxu0 0.0
    %559 = vmatpush1.msra.mxu0 0.0
    %560 = vmatprep.subr.mxu0 0.0
    %561 = vmatpush1.msra.mxu0 0.0
    %562 = vmatprep.subr.mxu0 0.0
    %563 = vmatpush1.msra.mxu0 0.0
    %564 = vmatprep.subr.mxu0 0.0
    %565 = vmatpush1.msra.mxu0 0.0
    %566 = vmatprep.subr.mxu0 0.0
    %567 = vmatpush1.msra.mxu0 0.0
    %568 = vmatprep.subr.mxu0 0.0
    %569 = vmatpush1.msra.mxu0 0.0
    %570 = vmatprep.subr.mxu0 0.0
    %571 = vmatpush1.msra.mxu0 0.0
    %572 = vmatprep.subr.mxu0 0.0
    %573 = vmatpush1.msra.mxu0 0.0
    %574 = vmatprep.subr.mxu0 0.0
    %575 = vmatpush1.msra.mxu0 0.0
    %576 = vmatprep.subr.mxu0 0.0
    %577 = vmatpush1.msra.mxu0 0.0
    %578 = vmatprep.subr.mxu0 0.0
    %579 = vmatpush1.msra.mxu0 0.0
    %580 = vmatprep.subr.mxu0 0.0
    %581 = vmatpush1.msra.mxu0 0.0
    %582 = vmatprep.subr.mxu0 0.0
    %583 = vmatpush1.msra.mxu0 0.0
    %584 = vmatprep.subr.mxu0 0.0
    %585 = vmatpush1.msra.mxu0 0.0
    %586 = vmatprep.subr.mxu0 0.0
    %587 = vmatpush1.msra.mxu0 0.0
    %588 = vmatprep.subr.mxu0 0.0
    %589 = vmatpush1.msra.mxu0 0.0
    %590 = vmatprep.subr.mxu0 0.0
    %591 = vmatpush1.msra.mxu0 0.0
    %592 = vmatprep.subr.mxu0 0.0
    %593 = vmatpush1.msra.mxu0 0.0
    %594 = vmatprep.subr.mxu0 0.0
    %595 = vmatpush1.msra.mxu0 0.0
    %596 = vmatprep.subr.mxu0 0.0
    %597 = vmatpush1.msra.mxu0 0.0
    %598 = vmatprep.subr.mxu0 0.0
    %599 = vmatpush1.msra.mxu0 0.0
    %600 = vmatprep.subr.mxu0 0.0
    %601 = vmatpush1.msra.mxu0 0.0
    %602 = vmatprep.subr.mxu0 0.0
    %603 = vmatpush1.msra.mxu0 0.0
    %604 = vmatprep.subr.mxu0 0.0
    %605 = vmatpush1.msra.mxu0 0.0
    %606 = vmatprep.subr.mxu0 0.0
    %607 = vmatpush1.msra.mxu0 0.0
    %608 = vmatprep.subr.mxu0 0.0
    %609 = vmatpush1.msra.mxu0 0.0
    %610 = vmatprep.mubr.f32.mxu0 0.0
    %611 = vmatmul.mubr.f32.gmra.mrb[0].mxu0 %v523
    %v612 = vpop.f32.mrb[0].mxu0
    %v613 = vadd.f32 0.0, %v612
    %v614 = vpop.f32.mrb[0].mxu0
    %v615 = vadd.f32 0.0, %v614
    %616 = vmatprep.mubr.f32.mxu0 0.0
    %617 = vmatmul.mubr.f32.gmra.mrb[0].mxu0 %v526
    %v618 = vpop.f32.mrb[0].mxu0
    %v619 = vadd.f32 0.0, %v618
    %v620 = vpop.f32.mrb[0].mxu0
    %v621 = vadd.f32 0.0, %v620
    %622 = vmatprep.mubr.f32.mxu0 0.0
    %623 = vmatmul.mubr.f32.gmra.mrb[0].mxu0 %v529
    %v624 = vpop.f32.mrb[0].mxu0
    %v625 = vadd.f32 0.0, %v624
    %v626 = vpop.f32.mrb[0].mxu0
    %v627 = vadd.f32 0.0, %v626
    %628 = vmatprep.mubr.f32.mxu0 0.0
    %629 = vmatmul.mubr.f32.gmra.mrb[0].mxu0 %v532
    %v630 = vpop.f32.mrb[0].mxu0
    %v631 = vadd.f32 0.0, %v630
    %v632 = vpop.f32.mrb[0].mxu0
    %v633 = vadd.f32 0.0, %v632
    %634 = vmatprep.mubr.f32.mxu0 0.0
    %635 = vmatmul.mubr.f32.gmra.mrb[0].mxu0 %v535
    %v636 = vpop.f32.mrb[0].mxu0
    %v637 = vadd.f32 0.0, %v636
    %v638 = vpop.f32.mrb[0].mxu0
    %v639 = vadd.f32 0.0, %v638
    %640 = vmatprep.mubr.f32.mxu0 0.0
    %641 = vmatmul.mubr.f32.gmra.mrb[0].mxu0 %v538
    %v642 = vpop.f32.mrb[0].mxu0
    %v643 = vadd.f32 0.0, %v642
    %v644 = vpop.f32.mrb[0].mxu0
    %v645 = vadd.f32 0.0, %v644
    %646 = vdwg.mxu0
    %v647 = vadd.f32 %v495, %v613
    %v648 = vadd.f32 %v496, %v615
    %v649 = vadd.f32 %v497, %v619
    %v650 = vadd.f32 %v498, %v621
    %v651 = vadd.f32 %v499, %v625
    %v652 = vadd.f32 %v500, %v627
    %v653 = vadd.f32 %v501, %v631
    %v654 = vadd.f32 %v502, %v633
    %v655 = vadd.f32 %v503, %v637
    %v656 = vadd.f32 %v504, %v639
    %v657 = vadd.f32 %v505, %v643
    %v658 = vadd.f32 %v506, %v645
    %v659 = vld [vmem:[%s0 + $0x4] sm:$0xff]
    %v660 = vld [vmem:[%s0 + $0xc] sm:$0xff]
    %v661 = vld [vmem:[%s0 + $0x14] sm:$0xff]
    %v662 = vld [vmem:[%s0 + $0x24] sm:$0xff]
    %v663 = vld [vmem:[%s0 + $0x2c] sm:$0xff]
    %v664 = vld [vmem:[%s0 + $0x34] sm:$0xff]
    %s665 = scalar_lea.vmem %s1, 256
    %v666 = vld [vmem:[%s665] sm:$0xff]
    %v667 = vld [vmem:[%s665 + $0x8] sm:$0xff]
    %v668 = vld [vmem:[%s665 + $0x10] sm:$0xff]
    %v669 = vld [vmem:[%s665 + $0x18] sm:$0xff]
    %v670 = vld [vmem:[%s665 + $0x20] sm:$0xff]
    %v671 = vld [vmem:[%s665 + $0x28] sm:$0xff]
    %v672 = vld [vmem:[%s665 + $0x30] sm:$0xf]
    %v673 = vld [vmem:[%s665 + $0x38] sm:$0xf]
    %v675 = vsel %vm64, %v659, 0
    %v678 = vsel %vm64, %v660, 0
    %v681 = vsel %vm64, %v661, 0
    %v684 = vsel %vm64, %v662, 0
    %v687 = vsel %vm64, %v663, 0
    %v690 = vsel %vm64, %v664, 0
    %v693 = vsel %vm83, %v672, 0
    %v696 = vsel %vm83, %v673, 0
    %698 = vmatprep.subr.mxu0 %v667
    %699 = vmatpush1.msra.mxu0 %v666
    %700 = vmatprep.subr.mxu0 %v669
    %701 = vmatpush1.msra.mxu0 %v668
    %702 = vmatprep.subr.mxu0 %v671
    %703 = vmatpush1.msra.mxu0 %v670
    %704 = vmatprep.subr.mxu0 %v696
    %705 = vmatpush1.msra.mxu0 %v693
    %706 = vmatprep.subr.mxu0 0.0
    %707 = vmatpush1.msra.mxu0 0.0
    %708 = vmatprep.subr.mxu0 0.0
    %709 = vmatpush1.msra.mxu0 0.0
    %710 = vmatprep.subr.mxu0 0.0
    %711 = vmatpush1.msra.mxu0 0.0
    %712 = vmatprep.subr.mxu0 0.0
    %713 = vmatpush1.msra.mxu0 0.0
    %714 = vmatprep.subr.mxu0 0.0
    %715 = vmatpush1.msra.mxu0 0.0
    %716 = vmatprep.subr.mxu0 0.0
    %717 = vmatpush1.msra.mxu0 0.0
    %718 = vmatprep.subr.mxu0 0.0
    %719 = vmatpush1.msra.mxu0 0.0
    %720 = vmatprep.subr.mxu0 0.0
    %721 = vmatpush1.msra.mxu0 0.0
    %722 = vmatprep.subr.mxu0 0.0
    %723 = vmatpush1.msra.mxu0 0.0
    %724 = vmatprep.subr.mxu0 0.0
    %725 = vmatpush1.msra.mxu0 0.0
    %726 = vmatprep.subr.mxu0 0.0
    %727 = vmatpush1.msra.mxu0 0.0
    %728 = vmatprep.subr.mxu0 0.0
    %729 = vmatpush1.msra.mxu0 0.0
    %730 = vmatprep.subr.mxu0 0.0
    %731 = vmatpush1.msra.mxu0 0.0
    %732 = vmatprep.subr.mxu0 0.0
    %733 = vmatpush1.msra.mxu0 0.0
    %734 = vmatprep.subr.mxu0 0.0
    %735 = vmatpush1.msra.mxu0 0.0
    %736 = vmatprep.subr.mxu0 0.0
    %737 = vmatpush1.msra.mxu0 0.0
    %738 = vmatprep.subr.mxu0 0.0
    %739 = vmatpush1.msra.mxu0 0.0
    %740 = vmatprep.subr.mxu0 0.0
    %741 = vmatpush1.msra.mxu0 0.0
    %742 = vmatprep.subr.mxu0 0.0
    %743 = vmatpush1.msra.mxu0 0.0
    %744 = vmatprep.subr.mxu0 0.0
    %745 = vmatpush1.msra.mxu0 0.0
    %746 = vmatprep.subr.mxu0 0.0
    %747 = vmatpush1.msra.mxu0 0.0
    %748 = vmatprep.subr.mxu0 0.0
    %749 = vmatpush1.msra.mxu0 0.0
    %750 = vmatprep.subr.mxu0 0.0
    %751 = vmatpush1.msra.mxu0 0.0
    %752 = vmatprep.subr.mxu0 0.0
    %753 = vmatpush1.msra.mxu0 0.0
    %754 = vmatprep.subr.mxu0 0.0
    %755 = vmatpush1.msra.mxu0 0.0
    %756 = vmatprep.subr.mxu0 0.0
    %757 = vmatpush1.msra.mxu0 0.0
    %758 = vmatprep.subr.mxu0 0.0
    %759 = vmatpush1.msra.mxu0 0.0
    %760 = vmatprep.subr.mxu0 0.0
    %761 = vmatpush1.msra.mxu0 0.0
    %762 = vmatprep.mubr.f32.mxu0 0.0
    %763 = vmatmul.mubr.f32.gmra.mrb[0].mxu0 %v675
    %v764 = vpop.f32.mrb[0].mxu0
    %v765 = vadd.f32 0.0, %v764
    %v766 = vpop.f32.mrb[0].mxu0
    %v767 = vadd.f32 0.0, %v766
    %768 = vmatprep.mubr.f32.mxu0 0.0
    %769 = vmatmul.mubr.f32.gmra.mrb[0].mxu0 %v678
    %v770 = vpop.f32.mrb[0].mxu0
    %v771 = vadd.f32 0.0, %v770
    %v772 = vpop.f32.mrb[0].mxu0
    %v773 = vadd.f32 0.0, %v772
    %774 = vmatprep.mubr.f32.mxu0 0.0
    %775 = vmatmul.mubr.f32.gmra.mrb[0].mxu0 %v681
    %v776 = vpop.f32.mrb[0].mxu0
    %v777 = vadd.f32 0.0, %v776
    %v778 = vpop.f32.mrb[0].mxu0
    %v779 = vadd.f32 0.0, %v778
    %780 = vmatprep.mubr.f32.mxu0 0.0
    %781 = vmatmul.mubr.f32.gmra.mrb[0].mxu0 %v684
    %v782 = vpop.f32.mrb[0].mxu0
    %v783 = vadd.f32 0.0, %v782
    %v784 = vpop.f32.mrb[0].mxu0
    %v785 = vadd.f32 0.0, %v784
    %786 = vmatprep.mubr.f32.mxu0 0.0
    %787 = vmatmul.mubr.f32.gmra.mrb[0].mxu0 %v687
    %v788 = vpop.f32.mrb[0].mxu0
    %v789 = vadd.f32 0.0, %v788
    %v790 = vpop.f32.mrb[0].mxu0
    %v791 = vadd.f32 0.0, %v790
    %792 = vmatprep.mubr.f32.mxu0 0.0
    %793 = vmatmul.mubr.f32.gmra.mrb[0].mxu0 %v690
    %v794 = vpop.f32.mrb[0].mxu0
    %v795 = vadd.f32 0.0, %v794
    %v796 = vpop.f32.mrb[0].mxu0
    %v797 = vadd.f32 0.0, %v796
    %798 = vdwg.mxu0
    %v799 = vadd.f32 %v647, %v765
    %v800 = vadd.f32 %v648, %v767
    %v801 = vadd.f32 %v649, %v771
    %v802 = vadd.f32 %v650, %v773
    %v803 = vadd.f32 %v651, %v777
    %v804 = vadd.f32 %v652, %v779
    %v805 = vadd.f32 %v653, %v783
    %v806 = vadd.f32 %v654, %v785
    %v807 = vadd.f32 %v655, %v789
    %v808 = vadd.f32 %v656, %v791
    %v809 = vadd.f32 %v657, %v795
    %v810 = vadd.f32 %v658, %v797
    %v823 = vcombine.low %v799, %v800
    %v824 = vcombine.high %v799, %v800
    %v826 = vunpack.c.l.s4 1983009808
    %v827 = vunpack.c.0.s8 %v826
    %v828 = vlaneseq
    %v829 = vshrl.u32 %v828, 7
    %v830 = vsub.s32 %v827, %v829
    %v831 = vrot.slane %v823, %v830
    %v833 = vunpack.c.l.s4 1983009808
    %v834 = vunpack.c.0.s8 %v833
    %v835 = vlaneseq
    %v836 = vshrl.u32 %v835, 7
    %v837 = vsub.s32 %v834, %v836
    %v838 = vrot.slane %v824, %v837
    %v839 = vcombine.high %v831, %v831
    %v840 = vcombine.high %v838, %v838
    %v841 = vcombine.low %v801, %v802
    %v842 = vcombine.high %v801, %v802
    %v844 = vunpack.c.l.s4 1983009808
    %v845 = vunpack.c.0.s8 %v844
    %v846 = vlaneseq
    %v847 = vshrl.u32 %v846, 7
    %v848 = vsub.s32 %v845, %v847
    %v849 = vrot.slane %v841, %v848
    %v851 = vunpack.c.l.s4 1983009808
    %v852 = vunpack.c.0.s8 %v851
    %v853 = vlaneseq
    %v854 = vshrl.u32 %v853, 7
    %v855 = vsub.s32 %v852, %v854
    %v856 = vrot.slane %v842, %v855
    %v857 = vcombine.high %v849, %v849
    %v858 = vcombine.high %v856, %v856
    %v859 = vcombine.low %v803, %v804
    %v860 = vcombine.high %v803, %v804
    %v862 = vunpack.c.l.s4 1983009808
    %v863 = vunpack.c.0.s8 %v862
    %v864 = vlaneseq
    %v865 = vshrl.u32 %v864, 7
    %v866 = vsub.s32 %v863, %v865
    %v867 = vrot.slane %v859, %v866
    %v869 = vunpack.c.l.s4 1983009808
    %v870 = vunpack.c.0.s8 %v869
    %v871 = vlaneseq
    %v872 = vshrl.u32 %v871, 7
    %v873 = vsub.s32 %v870, %v872
    %v874 = vrot.slane %v860, %v873
    %v875 = vcombine.high %v867, %v867
    %v876 = vcombine.high %v874, %v874
    %v877 = vcombine.low %v805, %v806
    %v878 = vcombine.high %v805, %v806
    %v880 = vunpack.c.l.s4 1983009808
    %v881 = vunpack.c.0.s8 %v880
    %v882 = vlaneseq
    %v883 = vshrl.u32 %v882, 7
    %v884 = vsub.s32 %v881, %v883
    %v885 = vrot.slane %v877, %v884
    %v887 = vunpack.c.l.s4 1983009808
    %v888 = vunpack.c.0.s8 %v887
    %v889 = vlaneseq
    %v890 = vshrl.u32 %v889, 7
    %v891 = vsub.s32 %v888, %v890
    %v892 = vrot.slane %v878, %v891
    %v893 = vcombine.high %v885, %v885
    %v894 = vcombine.high %v892, %v892
    %v895 = vcombine.low %v807, %v808
    %v896 = vcombine.high %v807, %v808
    %v898 = vunpack.c.l.s4 1983009808
    %v899 = vunpack.c.0.s8 %v898
    %v900 = vlaneseq
    %v901 = vshrl.u32 %v900, 7
    %v902 = vsub.s32 %v899, %v901
    %v903 = vrot.slane %v895, %v902
    %v905 = vunpack.c.l.s4 1983009808
    %v906 = vunpack.c.0.s8 %v905
    %v907 = vlaneseq
    %v908 = vshrl.u32 %v907, 7
    %v909 = vsub.s32 %v906, %v908
    %v910 = vrot.slane %v896, %v909
    %v911 = vcombine.high %v903, %v903
    %v912 = vcombine.high %v910, %v910
    %v913 = vcombine.low %v809, %v810
    %v914 = vcombine.high %v809, %v810
    %v916 = vunpack.c.l.s4 1983009808
    %v917 = vunpack.c.0.s8 %v916
    %v918 = vlaneseq
    %v919 = vshrl.u32 %v918, 7
    %v920 = vsub.s32 %v917, %v919
    %v921 = vrot.slane %v913, %v920
    %v923 = vunpack.c.l.s4 1983009808
    %v924 = vunpack.c.0.s8 %v923
    %v925 = vlaneseq
    %v926 = vshrl.u32 %v925, 7
    %v927 = vsub.s32 %v924, %v926
    %v928 = vrot.slane %v914, %v927
    %v929 = vcombine.high %v921, %v921
    %v930 = vcombine.high %v928, %v928
    %v955 = vrot.slane %v831, 7
    %v956 = vrot.slane %v955, 2
    %v957 = vrot.slane %v839, 7
    %v958 = vrot.slane %v957, 2
    %v959 = vrot.slane %v838, 7
    %v960 = vrot.slane %v959, 2
    %v961 = vrot.slane %v840, 7
    %v962 = vrot.slane %v961, 2
    %v963 = vrot.slane %v849, 7
    %v964 = vrot.slane %v963, 2
    %v965 = vrot.slane %v857, 7
    %v966 = vrot.slane %v965, 2
    %v967 = vrot.slane %v856, 7
    %v968 = vrot.slane %v967, 2
    %v969 = vrot.slane %v858, 7
    %v970 = vrot.slane %v969, 2
    %v971 = vrot.slane %v867, 7
    %v972 = vrot.slane %v971, 2
    %v973 = vrot.slane %v875, 7
    %v974 = vrot.slane %v973, 2
    %v975 = vrot.slane %v874, 7
    %v976 = vrot.slane %v975, 2
    %v977 = vrot.slane %v876, 7
    %v978 = vrot.slane %v977, 2
    %v979 = vrot.slane %v885, 7
    %v980 = vrot.slane %v979, 2
    %v981 = vrot.slane %v893, 7
    %v982 = vrot.slane %v981, 2
    %v983 = vrot.slane %v892, 7
    %v984 = vrot.slane %v983, 2
    %v985 = vrot.slane %v894, 7
    %v986 = vrot.slane %v985, 2
    %v987 = vrot.slane %v903, 7
    %v988 = vrot.slane %v987, 2
    %v989 = vrot.slane %v911, 7
    %v990 = vrot.slane %v989, 2
    %v991 = vrot.slane %v910, 7
    %v992 = vrot.slane %v991, 2
    %v993 = vrot.slane %v912, 7
    %v994 = vrot.slane %v993, 2
    %v995 = vrot.slane %v921, 7
    %v996 = vrot.slane %v995, 2
    %v997 = vrot.slane %v929, 7
    %v998 = vrot.slane %v997, 2
    %v999 = vrot.slane %v928, 7
    %v1000 = vrot.slane %v999, 2
    %v1001 = vrot.slane %v930, 7
    %v1002 = vrot.slane %v1001, 2
    %v1027 = vmax.f32 %v831, %v956
    %v1028 = vmax.f32 %v839, %v958
    %v1029 = vmax.f32 %v838, %v960
    %v1030 = vmax.f32 %v840, %v962
    %v1031 = vmax.f32 %v849, %v964
    %v1032 = vmax.f32 %v857, %v966
    %v1033 = vmax.f32 %v856, %v968
    %v1034 = vmax.f32 %v858, %v970
    %v1035 = vmax.f32 %v867, %v972
    %v1036 = vmax.f32 %v875, %v974
    %v1037 = vmax.f32 %v874, %v976
    %v1038 = vmax.f32 %v876, %v978
    %v1039 = vmax.f32 %v885, %v980
    %v1040 = vmax.f32 %v893, %v982
    %v1041 = vmax.f32 %v892, %v984
    %v1042 = vmax.f32 %v894, %v986
    %v1043 = vmax.f32 %v903, %v988
    %v1044 = vmax.f32 %v911, %v990
    %v1045 = vmax.f32 %v910, %v992
    %v1046 = vmax.f32 %v912, %v994
    %v1047 = vmax.f32 %v921, %v996
    %v1048 = vmax.f32 %v929, %v998
    %v1049 = vmax.f32 %v928, %v1000
    %v1050 = vmax.f32 %v930, %v1002
    %1075 = vrot.lane.b32.xlu0 %v1027, 118
    %v1076 = vpop.permute.xlu0 %1075
    %1077 = vrot.lane.b32.xlu0 %v1028, 118
    %v1078 = vpop.permute.xlu0 %1077
    %1079 = vrot.lane.b32.xlu0 %v1029, 118
    %v1080 = vpop.permute.xlu0 %1079
    %1081 = vrot.lane.b32.xlu0 %v1030, 118
    %v1082 = vpop.permute.xlu0 %1081
    %1083 = vrot.lane.b32.xlu0 %v1031, 118
    %v1084 = vpop.permute.xlu0 %1083
    %1085 = vrot.lane.b32.xlu0 %v1032, 118
    %v1086 = vpop.permute.xlu0 %1085
    %1087 = vrot.lane.b32.xlu0 %v1033, 118
    %v1088 = vpop.permute.xlu0 %1087
    %1089 = vrot.lane.b32.xlu0 %v1034, 118
    %v1090 = vpop.permute.xlu0 %1089
    %1091 = vrot.lane.b32.xlu0 %v1035, 118
    %v1092 = vpop.permute.xlu0 %1091
    %1093 = vrot.lane.b32.xlu0 %v1036, 118
    %v1094 = vpop.permute.xlu0 %1093
    %1095 = vrot.lane.b32.xlu0 %v1037, 118
    %v1096 = vpop.permute.xlu0 %1095
    %1097 = vrot.lane.b32.xlu0 %v1038, 118
    %v1098 = vpop.permute.xlu0 %1097
    %1099 = vrot.lane.b32.xlu0 %v1039, 118
    %v1100 = vpop.permute.xlu0 %1099
    %1101 = vrot.lane.b32.xlu0 %v1040, 118
    %v1102 = vpop.permute.xlu0 %1101
    %1103 = vrot.lane.b32.xlu0 %v1041, 118
    %v1104 = vpop.permute.xlu0 %1103
    %1105 = vrot.lane.b32.xlu0 %v1042, 118
    %v1106 = vpop.permute.xlu0 %1105
    %1107 = vrot.lane.b32.xlu0 %v1043, 118
    %v1108 = vpop.permute.xlu0 %1107
    %1109 = vrot.lane.b32.xlu0 %v1044, 118
    %v1110 = vpop.permute.xlu0 %1109
    %1111 = vrot.lane.b32.xlu0 %v1045, 118
    %v1112 = vpop.permute.xlu0 %1111
    %1113 = vrot.lane.b32.xlu0 %v1046, 118
    %v1114 = vpop.permute.xlu0 %1113
    %1115 = vrot.lane.b32.xlu0 %v1047, 118
    %v1116 = vpop.permute.xlu0 %1115
    %1117 = vrot.lane.b32.xlu0 %v1048, 118
    %v1118 = vpop.permute.xlu0 %1117
    %1119 = vrot.lane.b32.xlu0 %v1049, 118
    %v1120 = vpop.permute.xlu0 %1119
    %1121 = vrot.lane.b32.xlu0 %v1050, 118
    %v1122 = vpop.permute.xlu0 %1121
    %v1147 = vmax.f32 %v1027, %v1076
    %v1148 = vmax.f32 %v1028, %v1078
    %v1149 = vmax.f32 %v1029, %v1080
    %v1150 = vmax.f32 %v1030, %v1082
    %v1151 = vmax.f32 %v1031, %v1084
    %v1152 = vmax.f32 %v1032, %v1086
    %v1153 = vmax.f32 %v1033, %v1088
    %v1154 = vmax.f32 %v1034, %v1090
    %v1155 = vmax.f32 %v1035, %v1092
    %v1156 = vmax.f32 %v1036, %v1094
    %v1157 = vmax.f32 %v1037, %v1096
    %v1158 = vmax.f32 %v1038, %v1098
    %v1159 = vmax.f32 %v1039, %v1100
    %v1160 = vmax.f32 %v1040, %v1102
    %v1161 = vmax.f32 %v1041, %v1104
    %v1162 = vmax.f32 %v1042, %v1106
    %v1163 = vmax.f32 %v1043, %v1108
    %v1164 = vmax.f32 %v1044, %v1110
    %v1165 = vmax.f32 %v1045, %v1112
    %v1166 = vmax.f32 %v1046, %v1114
    %v1167 = vmax.f32 %v1047, %v1116
    %v1168 = vmax.f32 %v1048, %v1118
    %v1169 = vmax.f32 %v1049, %v1120
    %v1170 = vmax.f32 %v1050, %v1122
    %v1171 = vrot.slane %v1076, 2
    %v1172 = vrot.slane %v1078, 2
    %v1173 = vrot.slane %v1080, 2
    %v1174 = vrot.slane %v1082, 2
    %v1175 = vrot.slane %v1084, 2
    %v1176 = vrot.slane %v1086, 2
    %v1177 = vrot.slane %v1088, 2
    %v1178 = vrot.slane %v1090, 2
    %v1179 = vrot.slane %v1092, 2
    %v1180 = vrot.slane %v1094, 2
    %v1181 = vrot.slane %v1096, 2
    %v1182 = vrot.slane %v1098, 2
    %v1183 = vrot.slane %v1100, 2
    %v1184 = vrot.slane %v1102, 2
    %v1185 = vrot.slane %v1104, 2
    %v1186 = vrot.slane %v1106, 2
    %v1187 = vrot.slane %v1108, 2
    %v1188 = vrot.slane %v1110, 2
    %v1189 = vrot.slane %v1112, 2
    %v1190 = vrot.slane %v1114, 2
    %v1191 = vrot.slane %v1116, 2
    %v1192 = vrot.slane %v1118, 2
    %v1193 = vrot.slane %v1120, 2
    %v1194 = vrot.slane %v1122, 2
    %vm1195 = vcmask 965632
    %v1196 = vsel %vm1195, %v1076, %v1171
    %v1197 = vsel %vm1195, %v1078, %v1172
    %v1198 = vsel %vm1195, %v1080, %v1173
    %v1199 = vsel %vm1195, %v1082, %v1174
    %v1200 = vsel %vm1195, %v1084, %v1175
    %v1201 = vsel %vm1195, %v1086, %v1176
    %v1202 = vsel %vm1195, %v1088, %v1177
    %v1203 = vsel %vm1195, %v1090, %v1178
    %v1204 = vsel %vm1195, %v1092, %v1179
    %v1205 = vsel %vm1195, %v1094, %v1180
    %v1206 = vsel %vm1195, %v1096, %v1181
    %v1207 = vsel %vm1195, %v1098, %v1182
    %v1208 = vsel %vm1195, %v1100, %v1183
    %v1209 = vsel %vm1195, %v1102, %v1184
    %v1210 = vsel %vm1195, %v1104, %v1185
    %v1211 = vsel %vm1195, %v1106, %v1186
    %v1212 = vsel %vm1195, %v1108, %v1187
    %v1213 = vsel %vm1195, %v1110, %v1188
    %v1214 = vsel %vm1195, %v1112, %v1189
    %v1215 = vsel %vm1195, %v1114, %v1190
    %v1216 = vsel %vm1195, %v1116, %v1191
    %v1217 = vsel %vm1195, %v1118, %v1192
    %v1218 = vsel %vm1195, %v1120, %v1193
    %v1219 = vsel %vm1195, %v1122, %v1194
    %v1244 = vmax.f32 %v1027, %v1196
    %v1245 = vmax.f32 %v1028, %v1197
    %v1246 = vmax.f32 %v1029, %v1198
    %v1247 = vmax.f32 %v1030, %v1199
    %v1248 = vmax.f32 %v1031, %v1200
    %v1249 = vmax.f32 %v1032, %v1201
    %v1250 = vmax.f32 %v1033, %v1202
    %v1251 = vmax.f32 %v1034, %v1203
    %v1252 = vmax.f32 %v1035, %v1204
    %v1253 = vmax.f32 %v1036, %v1205
    %v1254 = vmax.f32 %v1037, %v1206
    %v1255 = vmax.f32 %v1038, %v1207
    %v1256 = vmax.f32 %v1039, %v1208
    %v1257 = vmax.f32 %v1040, %v1209
    %v1258 = vmax.f32 %v1041, %v1210
    %v1259 = vmax.f32 %v1042, %v1211
    %v1260 = vmax.f32 %v1043, %v1212
    %v1261 = vmax.f32 %v1044, %v1213
    %v1262 = vmax.f32 %v1045, %v1214
    %v1263 = vmax.f32 %v1046, %v1215
    %v1264 = vmax.f32 %v1047, %v1216
    %v1265 = vmax.f32 %v1048, %v1217
    %v1266 = vmax.f32 %v1049, %v1218
    %v1267 = vmax.f32 %v1050, %v1219
    %1268 = vrot.lane.b32.xlu0 %v1027, 116
    %v1269 = vpop.permute.xlu0 %1268
    %1270 = vrot.lane.b32.xlu0 %v1028, 116
    %v1271 = vpop.permute.xlu0 %1270
    %1272 = vrot.lane.b32.xlu0 %v1029, 116
    %v1273 = vpop.permute.xlu0 %1272
    %1274 = vrot.lane.b32.xlu0 %v1030, 116
    %v1275 = vpop.permute.xlu0 %1274
    %1276 = vrot.lane.b32.xlu0 %v1031, 116
    %v1277 = vpop.permute.xlu0 %1276
    %1278 = vrot.lane.b32.xlu0 %v1032, 116
    %v1279 = vpop.permute.xlu0 %1278
    %1280 = vrot.lane.b32.xlu0 %v1033, 116
    %v1281 = vpop.permute.xlu0 %1280
    %1282 = vrot.lane.b32.xlu0 %v1034, 116
    %v1283 = vpop.permute.xlu0 %1282
    %1284 = vrot.lane.b32.xlu0 %v1035, 116
    %v1285 = vpop.permute.xlu0 %1284
    %1286 = vrot.lane.b32.xlu0 %v1036, 116
    %v1287 = vpop.permute.xlu0 %1286
    %1288 = vrot.lane.b32.xlu0 %v1037, 116
    %v1289 = vpop.permute.xlu0 %1288
    %1290 = vrot.lane.b32.xlu0 %v1038, 116
    %v1291 = vpop.permute.xlu0 %1290
    %1292 = vrot.lane.b32.xlu0 %v1039, 116
    %v1293 = vpop.permute.xlu0 %1292
    %1294 = vrot.lane.b32.xlu0 %v1040, 116
    %v1295 = vpop.permute.xlu0 %1294
    %1296 = vrot.lane.b32.xlu0 %v1041, 116
    %v1297 = vpop.permute.xlu0 %1296
    %1298 = vrot.lane.b32.xlu0 %v1042, 116
    %v1299 = vpop.permute.xlu0 %1298
    %1300 = vrot.lane.b32.xlu0 %v1043, 116
    %v1301 = vpop.permute.xlu0 %1300
    %1302 = vrot.lane.b32.xlu0 %v1044, 116
    %v1303 = vpop.permute.xlu0 %1302
    %1304 = vrot.lane.b32.xlu0 %v1045, 116
    %v1305 = vpop.permute.xlu0 %1304
    %1306 = vrot.lane.b32.xlu0 %v1046, 116
    %v1307 = vpop.permute.xlu0 %1306
    %1308 = vrot.lane.b32.xlu0 %v1047, 116
    %v1309 = vpop.permute.xlu0 %1308
    %1310 = vrot.lane.b32.xlu0 %v1048, 116
    %v1311 = vpop.permute.xlu0 %1310
    %1312 = vrot.lane.b32.xlu0 %v1049, 116
    %v1313 = vpop.permute.xlu0 %1312
    %1314 = vrot.lane.b32.xlu0 %v1050, 116
    %v1315 = vpop.permute.xlu0 %1314
    %v1316 = vrot.slane %v1269, 2
    %v1317 = vrot.slane %v1271, 2
    %v1318 = vrot.slane %v1273, 2
    %v1319 = vrot.slane %v1275, 2
    %v1320 = vrot.slane %v1277, 2
    %v1321 = vrot.slane %v1279, 2
    %v1322 = vrot.slane %v1281, 2
    %v1323 = vrot.slane %v1283, 2
    %v1324 = vrot.slane %v1285, 2
    %v1325 = vrot.slane %v1287, 2
    %v1326 = vrot.slane %v1289, 2
    %v1327 = vrot.slane %v1291, 2
    %v1328 = vrot.slane %v1293, 2
    %v1329 = vrot.slane %v1295, 2
    %v1330 = vrot.slane %v1297, 2
    %v1331 = vrot.slane %v1299, 2
    %v1332 = vrot.slane %v1301, 2
    %v1333 = vrot.slane %v1303, 2
    %v1334 = vrot.slane %v1305, 2
    %v1335 = vrot.slane %v1307, 2
    %v1336 = vrot.slane %v1309, 2
    %v1337 = vrot.slane %v1311, 2
    %v1338 = vrot.slane %v1313, 2
    %v1339 = vrot.slane %v1315, 2
    %1364 = vrot.lane.b32.xlu0 %v1027, 106
    %v1365 = vpop.permute.xlu0 %1364
    %1366 = vrot.lane.b32.xlu0 %v1028, 106
    %v1367 = vpop.permute.xlu0 %1366
    %1368 = vrot.lane.b32.xlu0 %v1029, 106
    %v1369 = vpop.permute.xlu0 %1368
    %1370 = vrot.lane.b32.xlu0 %v1030, 106
    %v1371 = vpop.permute.xlu0 %1370
    %1372 = vrot.lane.b32.xlu0 %v1031, 106
    %v1373 = vpop.permute.xlu0 %1372
    %1374 = vrot.lane.b32.xlu0 %v1032, 106
    %v1375 = vpop.permute.xlu0 %1374
    %1376 = vrot.lane.b32.xlu0 %v1033, 106
    %v1377 = vpop.permute.xlu0 %1376
    %1378 = vrot.lane.b32.xlu0 %v1034, 106
    %v1379 = vpop.permute.xlu0 %1378
    %1380 = vrot.lane.b32.xlu0 %v1035, 106
    %v1381 = vpop.permute.xlu0 %1380
    %1382 = vrot.lane.b32.xlu0 %v1036, 106
    %v1383 = vpop.permute.xlu0 %1382
    %1384 = vrot.lane.b32.xlu0 %v1037, 106
    %v1385 = vpop.permute.xlu0 %1384
    %1386 = vrot.lane.b32.xlu0 %v1038, 106
    %v1387 = vpop.permute.xlu0 %1386
    %1388 = vrot.lane.b32.xlu0 %v1039, 106
    %v1389 = vpop.permute.xlu0 %1388
    %1390 = vrot.lane.b32.xlu0 %v1040, 106
    %v1391 = vpop.permute.xlu0 %1390
    %1392 = vrot.lane.b32.xlu0 %v1041, 106
    %v1393 = vpop.permute.xlu0 %1392
    %1394 = vrot.lane.b32.xlu0 %v1042, 106
    %v1395 = vpop.permute.xlu0 %1394
    %1396 = vrot.lane.b32.xlu0 %v1043, 106
    %v1397 = vpop.permute.xlu0 %1396
    %1398 = vrot.lane.b32.xlu0 %v1044, 106
    %v1399 = vpop.permute.xlu0 %1398
    %1400 = vrot.lane.b32.xlu0 %v1045, 106
    %v1401 = vpop.permute.xlu0 %1400
    %1402 = vrot.lane.b32.xlu0 %v1046, 106
    %v1403 = vpop.permute.xlu0 %1402
    %1404 = vrot.lane.b32.xlu0 %v1047, 106
    %v1405 = vpop.permute.xlu0 %1404
    %1406 = vrot.lane.b32.xlu0 %v1048, 106
    %v1407 = vpop.permute.xlu0 %1406
    %1408 = vrot.lane.b32.xlu0 %v1049, 106
    %v1409 = vpop.permute.xlu0 %1408
    %1410 = vrot.lane.b32.xlu0 %v1050, 106
    %v1411 = vpop.permute.xlu0 %1410
    %v1412 = vrot.slane %v1365, 2
    %v1413 = vrot.slane %v1367, 2
    %v1414 = vrot.slane %v1369, 2
    %v1415 = vrot.slane %v1371, 2
    %v1416 = vrot.slane %v1373, 2
    %v1417 = vrot.slane %v1375, 2
    %v1418 = vrot.slane %v1377, 2
    %v1419 = vrot.slane %v1379, 2
    %v1420 = vrot.slane %v1381, 2
    %v1421 = vrot.slane %v1383, 2
    %v1422 = vrot.slane %v1385, 2
    %v1423 = vrot.slane %v1387, 2
    %v1424 = vrot.slane %v1389, 2
    %v1425 = vrot.slane %v1391, 2
    %v1426 = vrot.slane %v1393, 2
    %v1427 = vrot.slane %v1395, 2
    %v1428 = vrot.slane %v1397, 2
    %v1429 = vrot.slane %v1399, 2
    %v1430 = vrot.slane %v1401, 2
    %v1431 = vrot.slane %v1403, 2
    %v1432 = vrot.slane %v1405, 2
    %v1433 = vrot.slane %v1407, 2
    %v1434 = vrot.slane %v1409, 2
    %v1435 = vrot.slane %v1411, 2
    %v1460 = vmax.f32 %v1316, %v1412
    %v1461 = vmax.f32 %v1317, %v1413
    %v1462 = vmax.f32 %v1318, %v1414
    %v1463 = vmax.f32 %v1319, %v1415
    %v1464 = vmax.f32 %v1320, %v1416
    %v1465 = vmax.f32 %v1321, %v1417
    %v1466 = vmax.f32 %v1322, %v1418
    %v1467 = vmax.f32 %v1323, %v1419
    %v1468 = vmax.f32 %v1324, %v1420
    %v1469 = vmax.f32 %v1325, %v1421
    %v1470 = vmax.f32 %v1326, %v1422
    %v1471 = vmax.f32 %v1327, %v1423
    %v1472 = vmax.f32 %v1328, %v1424
    %v1473 = vmax.f32 %v1329, %v1425
    %v1474 = vmax.f32 %v1330, %v1426
    %v1475 = vmax.f32 %v1331, %v1427
    %v1476 = vmax.f32 %v1332, %v1428
    %v1477 = vmax.f32 %v1333, %v1429
    %v1478 = vmax.f32 %v1334, %v1430
    %v1479 = vmax.f32 %v1335, %v1431
    %v1480 = vmax.f32 %v1336, %v1432
    %v1481 = vmax.f32 %v1337, %v1433
    %v1482 = vmax.f32 %v1338, %v1434
    %v1483 = vmax.f32 %v1339, %v1435
    %1484 = vrot.lane.b32.xlu0 %v1027, 96
    %v1485 = vpop.permute.xlu0 %1484
    %1486 = vrot.lane.b32.xlu0 %v1028, 96
    %v1487 = vpop.permute.xlu0 %1486
    %1488 = vrot.lane.b32.xlu0 %v1029, 96
    %v1489 = vpop.permute.xlu0 %1488
    %1490 = vrot.lane.b32.xlu0 %v1030, 96
    %v1491 = vpop.permute.xlu0 %1490
    %1492 = vrot.lane.b32.xlu0 %v1031, 96
    %v1493 = vpop.permute.xlu0 %1492
    %1494 = vrot.lane.b32.xlu0 %v1032, 96
    %v1495 = vpop.permute.xlu0 %1494
    %1496 = vrot.lane.b32.xlu0 %v1033, 96
    %v1497 = vpop.permute.xlu0 %1496
    %1498 = vrot.lane.b32.xlu0 %v1034, 96
    %v1499 = vpop.permute.xlu0 %1498
    %1500 = vrot.lane.b32.xlu0 %v1035, 96
    %v1501 = vpop.permute.xlu0 %1500
    %1502 = vrot.lane.b32.xlu0 %v1036, 96
    %v1503 = vpop.permute.xlu0 %1502
    %1504 = vrot.lane.b32.xlu0 %v1037, 96
    %v1505 = vpop.permute.xlu0 %1504
    %1506 = vrot.lane.b32.xlu0 %v1038, 96
    %v1507 = vpop.permute.xlu0 %1506
    %1508 = vrot.lane.b32.xlu0 %v1039, 96
    %v1509 = vpop.permute.xlu0 %1508
    %1510 = vrot.lane.b32.xlu0 %v1040, 96
    %v1511 = vpop.permute.xlu0 %1510
    %1512 = vrot.lane.b32.xlu0 %v1041, 96
    %v1513 = vpop.permute.xlu0 %1512
    %1514 = vrot.lane.b32.xlu0 %v1042, 96
    %v1515 = vpop.permute.xlu0 %1514
    %1516 = vrot.lane.b32.xlu0 %v1043, 96
    %v1517 = vpop.permute.xlu0 %1516
    %1518 = vrot.lane.b32.xlu0 %v1044, 96
    %v1519 = vpop.permute.xlu0 %1518
    %1520 = vrot.lane.b32.xlu0 %v1045, 96
    %v1521 = vpop.permute.xlu0 %1520
    %1522 = vrot.lane.b32.xlu0 %v1046, 96
    %v1523 = vpop.permute.xlu0 %1522
    %1524 = vrot.lane.b32.xlu0 %v1047, 96
    %v1525 = vpop.permute.xlu0 %1524
    %1526 = vrot.lane.b32.xlu0 %v1048, 96
    %v1527 = vpop.permute.xlu0 %1526
    %1528 = vrot.lane.b32.xlu0 %v1049, 96
    %v1529 = vpop.permute.xlu0 %1528
    %1530 = vrot.lane.b32.xlu0 %v1050, 96
    %v1531 = vpop.permute.xlu0 %1530
    %v1532 = vrot.slane %v1485, 2
    %v1533 = vrot.slane %v1487, 2
    %v1534 = vrot.slane %v1489, 2
    %v1535 = vrot.slane %v1491, 2
    %v1536 = vrot.slane %v1493, 2
    %v1537 = vrot.slane %v1495, 2
    %v1538 = vrot.slane %v1497, 2
    %v1539 = vrot.slane %v1499, 2
    %v1540 = vrot.slane %v1501, 2
    %v1541 = vrot.slane %v1503, 2
    %v1542 = vrot.slane %v1505, 2
    %v1543 = vrot.slane %v1507, 2
    %v1544 = vrot.slane %v1509, 2
    %v1545 = vrot.slane %v1511, 2
    %v1546 = vrot.slane %v1513, 2
    %v1547 = vrot.slane %v1515, 2
    %v1548 = vrot.slane %v1517, 2
    %v1549 = vrot.slane %v1519, 2
    %v1550 = vrot.slane %v1521, 2
    %v1551 = vrot.slane %v1523, 2
    %v1552 = vrot.slane %v1525, 2
    %v1553 = vrot.slane %v1527, 2
    %v1554 = vrot.slane %v1529, 2
    %v1555 = vrot.slane %v1531, 2
    %1580 = vrot.lane.b32.xlu0 %v1027, 86
    %v1581 = vpop.permute.xlu0 %1580
    %1582 = vrot.lane.b32.xlu0 %v1028, 86
    %v1583 = vpop.permute.xlu0 %1582
    %1584 = vrot.lane.b32.xlu0 %v1029, 86
    %v1585 = vpop.permute.xlu0 %1584
    %1586 = vrot.lane.b32.xlu0 %v1030, 86
    %v1587 = vpop.permute.xlu0 %1586
    %1588 = vrot.lane.b32.xlu0 %v1031, 86
    %v1589 = vpop.permute.xlu0 %1588
    %1590 = vrot.lane.b32.xlu0 %v1032, 86
    %v1591 = vpop.permute.xlu0 %1590
    %1592 = vrot.lane.b32.xlu0 %v1033, 86
    %v1593 = vpop.permute.xlu0 %1592
    %1594 = vrot.lane.b32.xlu0 %v1034, 86
    %v1595 = vpop.permute.xlu0 %1594
    %1596 = vrot.lane.b32.xlu0 %v1035, 86
    %v1597 = vpop.permute.xlu0 %1596
    %1598 = vrot.lane.b32.xlu0 %v1036, 86
    %v1599 = vpop.permute.xlu0 %1598
    %1600 = vrot.lane.b32.xlu0 %v1037, 86
    %v1601 = vpop.permute.xlu0 %1600
    %1602 = vrot.lane.b32.xlu0 %v1038, 86
    %v1603 = vpop.permute.xlu0 %1602
    %1604 = vrot.lane.b32.xlu0 %v1039, 86
    %v1605 = vpop.permute.xlu0 %1604
    %1606 = vrot.lane.b32.xlu0 %v1040, 86
    %v1607 = vpop.permute.xlu0 %1606
    %1608 = vrot.lane.b32.xlu0 %v1041, 86
    %v1609 = vpop.permute.xlu0 %1608
    %1610 = vrot.lane.b32.xlu0 %v1042, 86
    %v1611 = vpop.permute.xlu0 %1610
    %1612 = vrot.lane.b32.xlu0 %v1043, 86
    %v1613 = vpop.permute.xlu0 %1612
    %1614 = vrot.lane.b32.xlu0 %v1044, 86
    %v1615 = vpop.permute.xlu0 %1614
    %1616 = vrot.lane.b32.xlu0 %v1045, 86
    %v1617 = vpop.permute.xlu0 %1616
    %1618 = vrot.lane.b32.xlu0 %v1046, 86
    %v1619 = vpop.permute.xlu0 %1618
    %1620 = vrot.lane.b32.xlu0 %v1047, 86
    %v1621 = vpop.permute.xlu0 %1620
    %1622 = vrot.lane.b32.xlu0 %v1048, 86
    %v1623 = vpop.permute.xlu0 %1622
    %1624 = vrot.lane.b32.xlu0 %v1049, 86
    %v1625 = vpop.permute.xlu0 %1624
    %1626 = vrot.lane.b32.xlu0 %v1050, 86
    %v1627 = vpop.permute.xlu0 %1626
    %v1628 = vrot.slane %v1581, 2
    %v1629 = vrot.slane %v1583, 2
    %v1630 = vrot.slane %v1585, 2
    %v1631 = vrot.slane %v1587, 2
    %v1632 = vrot.slane %v1589, 2
    %v1633 = vrot.slane %v1591, 2
    %v1634 = vrot.slane %v1593, 2
    %v1635 = vrot.slane %v1595, 2
    %v1636 = vrot.slane %v1597, 2
    %v1637 = vrot.slane %v1599, 2
    %v1638 = vrot.slane %v1601, 2
    %v1639 = vrot.slane %v1603, 2
    %v1640 = vrot.slane %v1605, 2
    %v1641 = vrot.slane %v1607, 2
    %v1642 = vrot.slane %v1609, 2
    %v1643 = vrot.slane %v1611, 2
    %v1644 = vrot.slane %v1613, 2
    %v1645 = vrot.slane %v1615, 2
    %v1646 = vrot.slane %v1617, 2
    %v1647 = vrot.slane %v1619, 2
    %v1648 = vrot.slane %v1621, 2
    %v1649 = vrot.slane %v1623, 2
    %v1650 = vrot.slane %v1625, 2
    %v1651 = vrot.slane %v1627, 2
    %v1676 = vmax.f32 %v1532, %v1628
    %v1677 = vmax.f32 %v1533, %v1629
    %v1678 = vmax.f32 %v1534, %v1630
    %v1679 = vmax.f32 %v1535, %v1631
    %v1680 = vmax.f32 %v1536, %v1632
    %v1681 = vmax.f32 %v1537, %v1633
    %v1682 = vmax.f32 %v1538, %v1634
    %v1683 = vmax.f32 %v1539, %v1635
    %v1684 = vmax.f32 %v1540, %v1636
    %v1685 = vmax.f32 %v1541, %v1637
    %v1686 = vmax.f32 %v1542, %v1638
    %v1687 = vmax.f32 %v1543, %v1639
    %v1688 = vmax.f32 %v1544, %v1640
    %v1689 = vmax.f32 %v1545, %v1641
    %v1690 = vmax.f32 %v1546, %v1642
    %v1691 = vmax.f32 %v1547, %v1643
    %v1692 = vmax.f32 %v1548, %v1644
    %v1693 = vmax.f32 %v1549, %v1645
    %v1694 = vmax.f32 %v1550, %v1646
    %v1695 = vmax.f32 %v1551, %v1647
    %v1696 = vmax.f32 %v1552, %v1648
    %v1697 = vmax.f32 %v1553, %v1649
    %v1698 = vmax.f32 %v1554, %v1650
    %v1699 = vmax.f32 %v1555, %v1651
    %1700 = vrot.lane.b32.xlu0 %v1027, 76
    %v1701 = vpop.permute.xlu0 %1700
    %1702 = vrot.lane.b32.xlu0 %v1028, 76
    %v1703 = vpop.permute.xlu0 %1702
    %1704 = vrot.lane.b32.xlu0 %v1029, 76
    %v1705 = vpop.permute.xlu0 %1704
    %1706 = vrot.lane.b32.xlu0 %v1030, 76
    %v1707 = vpop.permute.xlu0 %1706
    %1708 = vrot.lane.b32.xlu0 %v1031, 76
    %v1709 = vpop.permute.xlu0 %1708
    %1710 = vrot.lane.b32.xlu0 %v1032, 76
    %v1711 = vpop.permute.xlu0 %1710
    %1712 = vrot.lane.b32.xlu0 %v1033, 76
    %v1713 = vpop.permute.xlu0 %1712
    %1714 = vrot.lane.b32.xlu0 %v1034, 76
    %v1715 = vpop.permute.xlu0 %1714
    %1716 = vrot.lane.b32.xlu0 %v1035, 76
    %v1717 = vpop.permute.xlu0 %1716
    %1718 = vrot.lane.b32.xlu0 %v1036, 76
    %v1719 = vpop.permute.xlu0 %1718
    %1720 = vrot.lane.b32.xlu0 %v1037, 76
    %v1721 = vpop.permute.xlu0 %1720
    %1722 = vrot.lane.b32.xlu0 %v1038, 76
    %v1723 = vpop.permute.xlu0 %1722
    %1724 = vrot.lane.b32.xlu0 %v1039, 76
    %v1725 = vpop.permute.xlu0 %1724
    %1726 = vrot.lane.b32.xlu0 %v1040, 76
    %v1727 = vpop.permute.xlu0 %1726
    %1728 = vrot.lane.b32.xlu0 %v1041, 76
    %v1729 = vpop.permute.xlu0 %1728
    %1730 = vrot.lane.b32.xlu0 %v1042, 76
    %v1731 = vpop.permute.xlu0 %1730
    %1732 = vrot.lane.b32.xlu0 %v1043, 76
    %v1733 = vpop.permute.xlu0 %1732
    %1734 = vrot.lane.b32.xlu0 %v1044, 76
    %v1735 = vpop.permute.xlu0 %1734
    %1736 = vrot.lane.b32.xlu0 %v1045, 76
    %v1737 = vpop.permute.xlu0 %1736
    %1738 = vrot.lane.b32.xlu0 %v1046, 76
    %v1739 = vpop.permute.xlu0 %1738
    %1740 = vrot.lane.b32.xlu0 %v1047, 76
    %v1741 = vpop.permute.xlu0 %1740
    %1742 = vrot.lane.b32.xlu0 %v1048, 76
    %v1743 = vpop.permute.xlu0 %1742
    %1744 = vrot.lane.b32.xlu0 %v1049, 76
    %v1745 = vpop.permute.xlu0 %1744
    %1746 = vrot.lane.b32.xlu0 %v1050, 76
    %v1747 = vpop.permute.xlu0 %1746
    %v1748 = vrot.slane %v1701, 2
    %v1749 = vrot.slane %v1703, 2
    %v1750 = vrot.slane %v1705, 2
    %v1751 = vrot.slane %v1707, 2
    %v1752 = vrot.slane %v1709, 2
    %v1753 = vrot.slane %v1711, 2
    %v1754 = vrot.slane %v1713, 2
    %v1755 = vrot.slane %v1715, 2
    %v1756 = vrot.slane %v1717, 2
    %v1757 = vrot.slane %v1719, 2
    %v1758 = vrot.slane %v1721, 2
    %v1759 = vrot.slane %v1723, 2
    %v1760 = vrot.slane %v1725, 2
    %v1761 = vrot.slane %v1727, 2
    %v1762 = vrot.slane %v1729, 2
    %v1763 = vrot.slane %v1731, 2
    %v1764 = vrot.slane %v1733, 2
    %v1765 = vrot.slane %v1735, 2
    %v1766 = vrot.slane %v1737, 2
    %v1767 = vrot.slane %v1739, 2
    %v1768 = vrot.slane %v1741, 2
    %v1769 = vrot.slane %v1743, 2
    %v1770 = vrot.slane %v1745, 2
    %v1771 = vrot.slane %v1747, 2
    %1796 = vrot.lane.b32.xlu0 %v1027, 66
    %v1797 = vpop.permute.xlu0 %1796
    %1798 = vrot.lane.b32.xlu0 %v1028, 66
    %v1799 = vpop.permute.xlu0 %1798
    %1800 = vrot.lane.b32.xlu0 %v1029, 66
    %v1801 = vpop.permute.xlu0 %1800
    %1802 = vrot.lane.b32.xlu0 %v1030, 66
    %v1803 = vpop.permute.xlu0 %1802
    %1804 = vrot.lane.b32.xlu0 %v1031, 66
    %v1805 = vpop.permute.xlu0 %1804
    %1806 = vrot.lane.b32.xlu0 %v1032, 66
    %v1807 = vpop.permute.xlu0 %1806
    %1808 = vrot.lane.b32.xlu0 %v1033, 66
    %v1809 = vpop.permute.xlu0 %1808
    %1810 = vrot.lane.b32.xlu0 %v1034, 66
    %v1811 = vpop.permute.xlu0 %1810
    %1812 = vrot.lane.b32.xlu0 %v1035, 66
    %v1813 = vpop.permute.xlu0 %1812
    %1814 = vrot.lane.b32.xlu0 %v1036, 66
    %v1815 = vpop.permute.xlu0 %1814
    %1816 = vrot.lane.b32.xlu0 %v1037, 66
    %v1817 = vpop.permute.xlu0 %1816
    %1818 = vrot.lane.b32.xlu0 %v1038, 66
    %v1819 = vpop.permute.xlu0 %1818
    %1820 = vrot.lane.b32.xlu0 %v1039, 66
    %v1821 = vpop.permute.xlu0 %1820
    %1822 = vrot.lane.b32.xlu0 %v1040, 66
    %v1823 = vpop.permute.xlu0 %1822
    %1824 = vrot.lane.b32.xlu0 %v1041, 66
    %v1825 = vpop.permute.xlu0 %1824
    %1826 = vrot.lane.b32.xlu0 %v1042, 66
    %v1827 = vpop.permute.xlu0 %1826
    %1828 = vrot.lane.b32.xlu0 %v1043, 66
    %v1829 = vpop.permute.xlu0 %1828
    %1830 = vrot.lane.b32.xlu0 %v1044, 66
    %v1831 = vpop.permute.xlu0 %1830
    %1832 = vrot.lane.b32.xlu0 %v1045, 66
    %v1833 = vpop.permute.xlu0 %1832
    %1834 = vrot.lane.b32.xlu0 %v1046, 66
    %v1835 = vpop.permute.xlu0 %1834
    %1836 = vrot.lane.b32.xlu0 %v1047, 66
    %v1837 = vpop.permute.xlu0 %1836
    %1838 = vrot.lane.b32.xlu0 %v1048, 66
    %v1839 = vpop.permute.xlu0 %1838
    %1840 = vrot.lane.b32.xlu0 %v1049, 66
    %v1841 = vpop.permute.xlu0 %1840
    %1842 = vrot.lane.b32.xlu0 %v1050, 66
    %v1843 = vpop.permute.xlu0 %1842
    %v1844 = vrot.slane %v1797, 2
    %v1845 = vrot.slane %v1799, 2
    %v1846 = vrot.slane %v1801, 2
    %v1847 = vrot.slane %v1803, 2
    %v1848 = vrot.slane %v1805, 2
    %v1849 = vrot.slane %v1807, 2
    %v1850 = vrot.slane %v1809, 2
    %v1851 = vrot.slane %v1811, 2
    %v1852 = vrot.slane %v1813, 2
    %v1853 = vrot.slane %v1815, 2
    %v1854 = vrot.slane %v1817, 2
    %v1855 = vrot.slane %v1819, 2
    %v1856 = vrot.slane %v1821, 2
    %v1857 = vrot.slane %v1823, 2
    %v1858 = vrot.slane %v1825, 2
    %v1859 = vrot.slane %v1827, 2
    %v1860 = vrot.slane %v1829, 2
    %v1861 = vrot.slane %v1831, 2
    %v1862 = vrot.slane %v1833, 2
    %v1863 = vrot.slane %v1835, 2
    %v1864 = vrot.slane %v1837, 2
    %v1865 = vrot.slane %v1839, 2
    %v1866 = vrot.slane %v1841, 2
    %v1867 = vrot.slane %v1843, 2
    %v1892 = vmax.f32 %v1748, %v1844
    %v1893 = vmax.f32 %v1749, %v1845
    %v1894 = vmax.f32 %v1750, %v1846
    %v1895 = vmax.f32 %v1751, %v1847
    %v1896 = vmax.f32 %v1752, %v1848
    %v1897 = vmax.f32 %v1753, %v1849
    %v1898 = vmax.f32 %v1754, %v1850
    %v1899 = vmax.f32 %v1755, %v1851
    %v1900 = vmax.f32 %v1756, %v1852
    %v1901 = vmax.f32 %v1757, %v1853
    %v1902 = vmax.f32 %v1758, %v1854
    %v1903 = vmax.f32 %v1759, %v1855
    %v1904 = vmax.f32 %v1760, %v1856
    %v1905 = vmax.f32 %v1761, %v1857
    %v1906 = vmax.f32 %v1762, %v1858
    %v1907 = vmax.f32 %v1763, %v1859
    %v1908 = vmax.f32 %v1764, %v1860
    %v1909 = vmax.f32 %v1765, %v1861
    %v1910 = vmax.f32 %v1766, %v1862
    %v1911 = vmax.f32 %v1767, %v1863
    %v1912 = vmax.f32 %v1768, %v1864
    %v1913 = vmax.f32 %v1769, %v1865
    %v1914 = vmax.f32 %v1770, %v1866
    %v1915 = vmax.f32 %v1771, %v1867
    %1916 = vrot.lane.b32.xlu0 %v1027, 56
    %v1917 = vpop.permute.xlu0 %1916
    %1918 = vrot.lane.b32.xlu0 %v1028, 56
    %v1919 = vpop.permute.xlu0 %1918
    %1920 = vrot.lane.b32.xlu0 %v1029, 56
    %v1921 = vpop.permute.xlu0 %1920
    %1922 = vrot.lane.b32.xlu0 %v1030, 56
    %v1923 = vpop.permute.xlu0 %1922
    %1924 = vrot.lane.b32.xlu0 %v1031, 56
    %v1925 = vpop.permute.xlu0 %1924
    %1926 = vrot.lane.b32.xlu0 %v1032, 56
    %v1927 = vpop.permute.xlu0 %1926
    %1928 = vrot.lane.b32.xlu0 %v1033, 56
    %v1929 = vpop.permute.xlu0 %1928
    %1930 = vrot.lane.b32.xlu0 %v1034, 56
    %v1931 = vpop.permute.xlu0 %1930
    %1932 = vrot.lane.b32.xlu0 %v1035, 56
    %v1933 = vpop.permute.xlu0 %1932
    %1934 = vrot.lane.b32.xlu0 %v1036, 56
    %v1935 = vpop.permute.xlu0 %1934
    %1936 = vrot.lane.b32.xlu0 %v1037, 56
    %v1937 = vpop.permute.xlu0 %1936
    %1938 = vrot.lane.b32.xlu0 %v1038, 56
    %v1939 = vpop.permute.xlu0 %1938
    %1940 = vrot.lane.b32.xlu0 %v1039, 56
    %v1941 = vpop.permute.xlu0 %1940
    %1942 = vrot.lane.b32.xlu0 %v1040, 56
    %v1943 = vpop.permute.xlu0 %1942
    %1944 = vrot.lane.b32.xlu0 %v1041, 56
    %v1945 = vpop.permute.xlu0 %1944
    %1946 = vrot.lane.b32.xlu0 %v1042, 56
    %v1947 = vpop.permute.xlu0 %1946
    %1948 = vrot.lane.b32.xlu0 %v1043, 56
    %v1949 = vpop.permute.xlu0 %1948
    %1950 = vrot.lane.b32.xlu0 %v1044, 56
    %v1951 = vpop.permute.xlu0 %1950
    %1952 = vrot.lane.b32.xlu0 %v1045, 56
    %v1953 = vpop.permute.xlu0 %1952
    %1954 = vrot.lane.b32.xlu0 %v1046, 56
    %v1955 = vpop.permute.xlu0 %1954
    %1956 = vrot.lane.b32.xlu0 %v1047, 56
    %v1957 = vpop.permute.xlu0 %1956
    %1958 = vrot.lane.b32.xlu0 %v1048, 56
    %v1959 = vpop.permute.xlu0 %1958
    %1960 = vrot.lane.b32.xlu0 %v1049, 56
    %v1961 = vpop.permute.xlu0 %1960
    %1962 = vrot.lane.b32.xlu0 %v1050, 56
    %v1963 = vpop.permute.xlu0 %1962
    %v1964 = vrot.slane %v1917, 2
    %v1965 = vrot.slane %v1919, 2
    %v1966 = vrot.slane %v1921, 2
    %v1967 = vrot.slane %v1923, 2
    %v1968 = vrot.slane %v1925, 2
    %v1969 = vrot.slane %v1927, 2
    %v1970 = vrot.slane %v1929, 2
    %v1971 = vrot.slane %v1931, 2
    %v1972 = vrot.slane %v1933, 2
    %v1973 = vrot.slane %v1935, 2
    %v1974 = vrot.slane %v1937, 2
    %v1975 = vrot.slane %v1939, 2
    %v1976 = vrot.slane %v1941, 2
    %v1977 = vrot.slane %v1943, 2
    %v1978 = vrot.slane %v1945, 2
    %v1979 = vrot.slane %v1947, 2
    %v1980 = vrot.slane %v1949, 2
    %v1981 = vrot.slane %v1951, 2
    %v1982 = vrot.slane %v1953, 2
    %v1983 = vrot.slane %v1955, 2
    %v1984 = vrot.slane %v1957, 2
    %v1985 = vrot.slane %v1959, 2
    %v1986 = vrot.slane %v1961, 2
    %v1987 = vrot.slane %v1963, 2
    %2012 = vrot.lane.b32.xlu0 %v1027, 46
    %v2013 = vpop.permute.xlu0 %2012
    %2014 = vrot.lane.b32.xlu0 %v1028, 46
    %v2015 = vpop.permute.xlu0 %2014
    %2016 = vrot.lane.b32.xlu0 %v1029, 46
    %v2017 = vpop.permute.xlu0 %2016
    %2018 = vrot.lane.b32.xlu0 %v1030, 46
    %v2019 = vpop.permute.xlu0 %2018
    %2020 = vrot.lane.b32.xlu0 %v1031, 46
    %v2021 = vpop.permute.xlu0 %2020
    %2022 = vrot.lane.b32.xlu0 %v1032, 46
    %v2023 = vpop.permute.xlu0 %2022
    %2024 = vrot.lane.b32.xlu0 %v1033, 46
    %v2025 = vpop.permute.xlu0 %2024
    %2026 = vrot.lane.b32.xlu0 %v1034, 46
    %v2027 = vpop.permute.xlu0 %2026
    %2028 = vrot.lane.b32.xlu0 %v1035, 46
    %v2029 = vpop.permute.xlu0 %2028
    %2030 = vrot.lane.b32.xlu0 %v1036, 46
    %v2031 = vpop.permute.xlu0 %2030
    %2032 = vrot.lane.b32.xlu0 %v1037, 46
    %v2033 = vpop.permute.xlu0 %2032
    %2034 = vrot.lane.b32.xlu0 %v1038, 46
    %v2035 = vpop.permute.xlu0 %2034
    %2036 = vrot.lane.b32.xlu0 %v1039, 46
    %v2037 = vpop.permute.xlu0 %2036
    %2038 = vrot.lane.b32.xlu0 %v1040, 46
    %v2039 = vpop.permute.xlu0 %2038
    %2040 = vrot.lane.b32.xlu0 %v1041, 46
    %v2041 = vpop.permute.xlu0 %2040
    %2042 = vrot.lane.b32.xlu0 %v1042, 46
    %v2043 = vpop.permute.xlu0 %2042
    %2044 = vrot.lane.b32.xlu0 %v1043, 46
    %v2045 = vpop.permute.xlu0 %2044
    %2046 = vrot.lane.b32.xlu0 %v1044, 46
    %v2047 = vpop.permute.xlu0 %2046
    %2048 = vrot.lane.b32.xlu0 %v1045, 46
    %v2049 = vpop.permute.xlu0 %2048
    %2050 = vrot.lane.b32.xlu0 %v1046, 46
    %v2051 = vpop.permute.xlu0 %2050
    %2052 = vrot.lane.b32.xlu0 %v1047, 46
    %v2053 = vpop.permute.xlu0 %2052
    %2054 = vrot.lane.b32.xlu0 %v1048, 46
    %v2055 = vpop.permute.xlu0 %2054
    %2056 = vrot.lane.b32.xlu0 %v1049, 46
    %v2057 = vpop.permute.xlu0 %2056
    %2058 = vrot.lane.b32.xlu0 %v1050, 46
    %v2059 = vpop.permute.xlu0 %2058
    %v2060 = vrot.slane %v2013, 2
    %v2061 = vrot.slane %v2015, 2
    %v2062 = vrot.slane %v2017, 2
    %v2063 = vrot.slane %v2019, 2
    %v2064 = vrot.slane %v2021, 2
    %v2065 = vrot.slane %v2023, 2
    %v2066 = vrot.slane %v2025, 2
    %v2067 = vrot.slane %v2027, 2
    %v2068 = vrot.slane %v2029, 2
    %v2069 = vrot.slane %v2031, 2
    %v2070 = vrot.slane %v2033, 2
    %v2071 = vrot.slane %v2035, 2
    %v2072 = vrot.slane %v2037, 2
    %v2073 = vrot.slane %v2039, 2
    %v2074 = vrot.slane %v2041, 2
    %v2075 = vrot.slane %v2043, 2
    %v2076 = vrot.slane %v2045, 2
    %v2077 = vrot.slane %v2047, 2
    %v2078 = vrot.slane %v2049, 2
    %v2079 = vrot.slane %v2051, 2
    %v2080 = vrot.slane %v2053, 2
    %v2081 = vrot.slane %v2055, 2
    %v2082 = vrot.slane %v2057, 2
    %v2083 = vrot.slane %v2059, 2
    %v2108 = vmax.f32 %v1964, %v2060
    %v2109 = vmax.f32 %v1965, %v2061
    %v2110 = vmax.f32 %v1966, %v2062
    %v2111 = vmax.f32 %v1967, %v2063
    %v2112 = vmax.f32 %v1968, %v2064
    %v2113 = vmax.f32 %v1969, %v2065
    %v2114 = vmax.f32 %v1970, %v2066
    %v2115 = vmax.f32 %v1971, %v2067
    %v2116 = vmax.f32 %v1972, %v2068
    %v2117 = vmax.f32 %v1973, %v2069
    %v2118 = vmax.f32 %v1974, %v2070
    %v2119 = vmax.f32 %v1975, %v2071
    %v2120 = vmax.f32 %v1976, %v2072
    %v2121 = vmax.f32 %v1977, %v2073
    %v2122 = vmax.f32 %v1978, %v2074
    %v2123 = vmax.f32 %v1979, %v2075
    %v2124 = vmax.f32 %v1980, %v2076
    %v2125 = vmax.f32 %v1981, %v2077
    %v2126 = vmax.f32 %v1982, %v2078
    %v2127 = vmax.f32 %v1983, %v2079
    %v2128 = vmax.f32 %v1984, %v2080
    %v2129 = vmax.f32 %v1985, %v2081
    %v2130 = vmax.f32 %v1986, %v2082
    %v2131 = vmax.f32 %v1987, %v2083
    %2132 = vrot.lane.b32.xlu0 %v1027, 36
    %v2133 = vpop.permute.xlu0 %2132
    %2134 = vrot.lane.b32.xlu0 %v1028, 36
    %v2135 = vpop.permute.xlu0 %2134
    %2136 = vrot.lane.b32.xlu0 %v1029, 36
    %v2137 = vpop.permute.xlu0 %2136
    %2138 = vrot.lane.b32.xlu0 %v1030, 36
    %v2139 = vpop.permute.xlu0 %2138
    %2140 = vrot.lane.b32.xlu0 %v1031, 36
    %v2141 = vpop.permute.xlu0 %2140
    %2142 = vrot.lane.b32.xlu0 %v1032, 36
    %v2143 = vpop.permute.xlu0 %2142
    %2144 = vrot.lane.b32.xlu0 %v1033, 36
    %v2145 = vpop.permute.xlu0 %2144
    %2146 = vrot.lane.b32.xlu0 %v1034, 36
    %v2147 = vpop.permute.xlu0 %2146
    %2148 = vrot.lane.b32.xlu0 %v1035, 36
    %v2149 = vpop.permute.xlu0 %2148
    %2150 = vrot.lane.b32.xlu0 %v1036, 36
    %v2151 = vpop.permute.xlu0 %2150
    %2152 = vrot.lane.b32.xlu0 %v1037, 36
    %v2153 = vpop.permute.xlu0 %2152
    %2154 = vrot.lane.b32.xlu0 %v1038, 36
    %v2155 = vpop.permute.xlu0 %2154
    %2156 = vrot.lane.b32.xlu0 %v1039, 36
    %v2157 = vpop.permute.xlu0 %2156
    %2158 = vrot.lane.b32.xlu0 %v1040, 36
    %v2159 = vpop.permute.xlu0 %2158
    %2160 = vrot.lane.b32.xlu0 %v1041, 36
    %v2161 = vpop.permute.xlu0 %2160
    %2162 = vrot.lane.b32.xlu0 %v1042, 36
    %v2163 = vpop.permute.xlu0 %2162
    %2164 = vrot.lane.b32.xlu0 %v1043, 36
    %v2165 = vpop.permute.xlu0 %2164
    %2166 = vrot.lane.b32.xlu0 %v1044, 36
    %v2167 = vpop.permute.xlu0 %2166
    %2168 = vrot.lane.b32.xlu0 %v1045, 36
    %v2169 = vpop.permute.xlu0 %2168
    %2170 = vrot.lane.b32.xlu0 %v1046, 36
    %v2171 = vpop.permute.xlu0 %2170
    %2172 = vrot.lane.b32.xlu0 %v1047, 36
    %v2173 = vpop.permute.xlu0 %2172
    %2174 = vrot.lane.b32.xlu0 %v1048, 36
    %v2175 = vpop.permute.xlu0 %2174
    %2176 = vrot.lane.b32.xlu0 %v1049, 36
    %v2177 = vpop.permute.xlu0 %2176
    %2178 = vrot.lane.b32.xlu0 %v1050, 36
    %v2179 = vpop.permute.xlu0 %2178
    %v2180 = vrot.slane %v2133, 2
    %v2181 = vrot.slane %v2135, 2
    %v2182 = vrot.slane %v2137, 2
    %v2183 = vrot.slane %v2139, 2
    %v2184 = vrot.slane %v2141, 2
    %v2185 = vrot.slane %v2143, 2
    %v2186 = vrot.slane %v2145, 2
    %v2187 = vrot.slane %v2147, 2
    %v2188 = vrot.slane %v2149, 2
    %v2189 = vrot.slane %v2151, 2
    %v2190 = vrot.slane %v2153, 2
    %v2191 = vrot.slane %v2155, 2
    %v2192 = vrot.slane %v2157, 2
    %v2193 = vrot.slane %v2159, 2
    %v2194 = vrot.slane %v2161, 2
    %v2195 = vrot.slane %v2163, 2
    %v2196 = vrot.slane %v2165, 2
    %v2197 = vrot.slane %v2167, 2
    %v2198 = vrot.slane %v2169, 2
    %v2199 = vrot.slane %v2171, 2
    %v2200 = vrot.slane %v2173, 2
    %v2201 = vrot.slane %v2175, 2
    %v2202 = vrot.slane %v2177, 2
    %v2203 = vrot.slane %v2179, 2
    %2228 = vrot.lane.b32.xlu0 %v1027, 26
    %v2229 = vpop.permute.xlu0 %2228
    %2230 = vrot.lane.b32.xlu0 %v1028, 26
    %v2231 = vpop.permute.xlu0 %2230
    %2232 = vrot.lane.b32.xlu0 %v1029, 26
    %v2233 = vpop.permute.xlu0 %2232
    %2234 = vrot.lane.b32.xlu0 %v1030, 26
    %v2235 = vpop.permute.xlu0 %2234
    %2236 = vrot.lane.b32.xlu0 %v1031, 26
    %v2237 = vpop.permute.xlu0 %2236
    %2238 = vrot.lane.b32.xlu0 %v1032, 26
    %v2239 = vpop.permute.xlu0 %2238
    %2240 = vrot.lane.b32.xlu0 %v1033, 26
    %v2241 = vpop.permute.xlu0 %2240
    %2242 = vrot.lane.b32.xlu0 %v1034, 26
    %v2243 = vpop.permute.xlu0 %2242
    %2244 = vrot.lane.b32.xlu0 %v1035, 26
    %v2245 = vpop.permute.xlu0 %2244
    %2246 = vrot.lane.b32.xlu0 %v1036, 26
    %v2247 = vpop.permute.xlu0 %2246
    %2248 = vrot.lane.b32.xlu0 %v1037, 26
    %v2249 = vpop.permute.xlu0 %2248
    %2250 = vrot.lane.b32.xlu0 %v1038, 26
    %v2251 = vpop.permute.xlu0 %2250
    %2252 = vrot.lane.b32.xlu0 %v1039, 26
    %v2253 = vpop.permute.xlu0 %2252
    %2254 = vrot.lane.b32.xlu0 %v1040, 26
    %v2255 = vpop.permute.xlu0 %2254
    %2256 = vrot.lane.b32.xlu0 %v1041, 26
    %v2257 = vpop.permute.xlu0 %2256
    %2258 = vrot.lane.b32.xlu0 %v1042, 26
    %v2259 = vpop.permute.xlu0 %2258
    %2260 = vrot.lane.b32.xlu0 %v1043, 26
    %v2261 = vpop.permute.xlu0 %2260
    %2262 = vrot.lane.b32.xlu0 %v1044, 26
    %v2263 = vpop.permute.xlu0 %2262
    %2264 = vrot.lane.b32.xlu0 %v1045, 26
    %v2265 = vpop.permute.xlu0 %2264
    %2266 = vrot.lane.b32.xlu0 %v1046, 26
    %v2267 = vpop.permute.xlu0 %2266
    %2268 = vrot.lane.b32.xlu0 %v1047, 26
    %v2269 = vpop.permute.xlu0 %2268
    %2270 = vrot.lane.b32.xlu0 %v1048, 26
    %v2271 = vpop.permute.xlu0 %2270
    %2272 = vrot.lane.b32.xlu0 %v1049, 26
    %v2273 = vpop.permute.xlu0 %2272
    %2274 = vrot.lane.b32.xlu0 %v1050, 26
    %v2275 = vpop.permute.xlu0 %2274
    %v2276 = vrot.slane %v2229, 2
    %v2277 = vrot.slane %v2231, 2
    %v2278 = vrot.slane %v2233, 2
    %v2279 = vrot.slane %v2235, 2
    %v2280 = vrot.slane %v2237, 2
    %v2281 = vrot.slane %v2239, 2
    %v2282 = vrot.slane %v2241, 2
    %v2283 = vrot.slane %v2243, 2
    %v2284 = vrot.slane %v2245, 2
    %v2285 = vrot.slane %v2247, 2
    %v2286 = vrot.slane %v2249, 2
    %v2287 = vrot.slane %v2251, 2
    %v2288 = vrot.slane %v2253, 2
    %v2289 = vrot.slane %v2255, 2
    %v2290 = vrot.slane %v2257, 2
    %v2291 = vrot.slane %v2259, 2
    %v2292 = vrot.slane %v2261, 2
    %v2293 = vrot.slane %v2263, 2
    %v2294 = vrot.slane %v2265, 2
    %v2295 = vrot.slane %v2267, 2
    %v2296 = vrot.slane %v2269, 2
    %v2297 = vrot.slane %v2271, 2
    %v2298 = vrot.slane %v2273, 2
    %v2299 = vrot.slane %v2275, 2
    %v2324 = vmax.f32 %v2180, %v2276
    %v2325 = vmax.f32 %v2181, %v2277
    %v2326 = vmax.f32 %v2182, %v2278
    %v2327 = vmax.f32 %v2183, %v2279
    %v2328 = vmax.f32 %v2184, %v2280
    %v2329 = vmax.f32 %v2185, %v2281
    %v2330 = vmax.f32 %v2186, %v2282
    %v2331 = vmax.f32 %v2187, %v2283
    %v2332 = vmax.f32 %v2188, %v2284
    %v2333 = vmax.f32 %v2189, %v2285
    %v2334 = vmax.f32 %v2190, %v2286
    %v2335 = vmax.f32 %v2191, %v2287
    %v2336 = vmax.f32 %v2192, %v2288
    %v2337 = vmax.f32 %v2193, %v2289
    %v2338 = vmax.f32 %v2194, %v2290
    %v2339 = vmax.f32 %v2195, %v2291
    %v2340 = vmax.f32 %v2196, %v2292
    %v2341 = vmax.f32 %v2197, %v2293
    %v2342 = vmax.f32 %v2198, %v2294
    %v2343 = vmax.f32 %v2199, %v2295
    %v2344 = vmax.f32 %v2200, %v2296
    %v2345 = vmax.f32 %v2201, %v2297
    %v2346 = vmax.f32 %v2202, %v2298
    %v2347 = vmax.f32 %v2203, %v2299
    %v2372 = vlaneseq
    %v2373 = vshrl.u32 %v2372, 7
    %v2374 = vsub.s32 0, %v2373
    %v2375 = vrot.slane %v1147, %v2374
    %v2376 = vlaneseq
    %v2377 = vshrl.u32 %v2376, 7
    %v2378 = vsub.s32 0, %v2377
    %v2379 = vrot.slane %v1148, %v2378
    %v2380 = vlaneseq
    %v2381 = vshrl.u32 %v2380, 7
    %v2382 = vsub.s32 0, %v2381
    %v2383 = vrot.slane %v1149, %v2382
    %v2384 = vlaneseq
    %v2385 = vshrl.u32 %v2384, 7
    %v2386 = vsub.s32 0, %v2385
    %v2387 = vrot.slane %v1150, %v2386
    %v2388 = vlaneseq
    %v2389 = vshrl.u32 %v2388, 7
    %v2390 = vsub.s32 0, %v2389
    %v2391 = vrot.slane %v1151, %v2390
    %v2392 = vlaneseq
    %v2393 = vshrl.u32 %v2392, 7
    %v2394 = vsub.s32 0, %v2393
    %v2395 = vrot.slane %v1152, %v2394
    %v2396 = vlaneseq
    %v2397 = vshrl.u32 %v2396, 7
    %v2398 = vsub.s32 0, %v2397
    %v2399 = vrot.slane %v1153, %v2398
    %v2400 = vlaneseq
    %v2401 = vshrl.u32 %v2400, 7
    %v2402 = vsub.s32 0, %v2401
    %v2403 = vrot.slane %v1154, %v2402
    %v2404 = vlaneseq
    %v2405 = vshrl.u32 %v2404, 7
    %v2406 = vsub.s32 0, %v2405
    %v2407 = vrot.slane %v1155, %v2406
    %v2408 = vlaneseq
    %v2409 = vshrl.u32 %v2408, 7
    %v2410 = vsub.s32 0, %v2409
    %v2411 = vrot.slane %v1156, %v2410
    %v2412 = vlaneseq
    %v2413 = vshrl.u32 %v2412, 7
    %v2414 = vsub.s32 0, %v2413
    %v2415 = vrot.slane %v1157, %v2414
    %v2416 = vlaneseq
    %v2417 = vshrl.u32 %v2416, 7
    %v2418 = vsub.s32 0, %v2417
    %v2419 = vrot.slane %v1158, %v2418
    %v2420 = vlaneseq
    %v2421 = vshrl.u32 %v2420, 7
    %v2422 = vsub.s32 0, %v2421
    %v2423 = vrot.slane %v1159, %v2422
    %v2424 = vlaneseq
    %v2425 = vshrl.u32 %v2424, 7
    %v2426 = vsub.s32 0, %v2425
    %v2427 = vrot.slane %v1160, %v2426
    %v2428 = vlaneseq
    %v2429 = vshrl.u32 %v2428, 7
    %v2430 = vsub.s32 0, %v2429
    %v2431 = vrot.slane %v1161, %v2430
    %v2432 = vlaneseq
    %v2433 = vshrl.u32 %v2432, 7
    %v2434 = vsub.s32 0, %v2433
    %v2435 = vrot.slane %v1162, %v2434
    %v2436 = vlaneseq
    %v2437 = vshrl.u32 %v2436, 7
    %v2438 = vsub.s32 0, %v2437
    %v2439 = vrot.slane %v1163, %v2438
    %v2440 = vlaneseq
    %v2441 = vshrl.u32 %v2440, 7
    %v2442 = vsub.s32 0, %v2441
    %v2443 = vrot.slane %v1164, %v2442
    %v2444 = vlaneseq
    %v2445 = vshrl.u32 %v2444, 7
    %v2446 = vsub.s32 0, %v2445
    %v2447 = vrot.slane %v1165, %v2446
    %v2448 = vlaneseq
    %v2449 = vshrl.u32 %v2448, 7
    %v2450 = vsub.s32 0, %v2449
    %v2451 = vrot.slane %v1166, %v2450
    %v2452 = vlaneseq
    %v2453 = vshrl.u32 %v2452, 7
    %v2454 = vsub.s32 0, %v2453
    %v2455 = vrot.slane %v1167, %v2454
    %v2456 = vlaneseq
    %v2457 = vshrl.u32 %v2456, 7
    %v2458 = vsub.s32 0, %v2457
    %v2459 = vrot.slane %v1168, %v2458
    %v2460 = vlaneseq
    %v2461 = vshrl.u32 %v2460, 7
    %v2462 = vsub.s32 0, %v2461
    %v2463 = vrot.slane %v1169, %v2462
    %v2464 = vlaneseq
    %v2465 = vshrl.u32 %v2464, 7
    %v2466 = vsub.s32 0, %v2465
    %v2467 = vrot.slane %v1170, %v2466
    %vm2468 = vcmask 1041409
    %v2469 = vsel %vm2468, %v2379, %v2375
    %vm2470 = vcmask 1042434
    %v2471 = vsel %vm2470, %v2383, %v2469
    %vm2472 = vcmask 1043459
    %v2473 = vsel %vm2472, %v2387, %v2471
    %vm2474 = vcmask 1044484
    %v2475 = vsel %vm2474, %v2391, %v2473
    %vm2476 = vcmask 1045509
    %v2477 = vsel %vm2476, %v2395, %v2475
    %vm2478 = vcmask 1046534
    %v2479 = vsel %vm2478, %v2399, %v2477
    %vm2480 = vcmask 1047559
    %v2481 = vsel %vm2480, %v2403, %v2479
    %v2482 = vsel %vm2468, %v2411, %v2407
    %v2483 = vsel %vm2470, %v2415, %v2482
    %v2484 = vsel %vm2472, %v2419, %v2483
    %v2485 = vsel %vm2468, %v2427, %v2423
    %v2486 = vsel %vm2470, %v2431, %v2485
    %v2487 = vsel %vm2472, %v2435, %v2486
    %v2488 = vsel %vm2474, %v2439, %v2487
    %v2489 = vsel %vm2476, %v2443, %v2488
    %v2490 = vsel %vm2478, %v2447, %v2489
    %v2491 = vsel %vm2480, %v2451, %v2490
    %v2492 = vsel %vm2468, %v2459, %v2455
    %v2493 = vsel %vm2470, %v2463, %v2492
    %v2494 = vsel %vm2472, %v2467, %v2493
    %2499 = vrot.lane.b32.xlu0 %v2481, 118
    %v2500 = vpop.permute.xlu0 %2499
    %2501 = vrot.lane.b32.xlu0 %v2484, 118
    %v2502 = vpop.permute.xlu0 %2501
    %2503 = vrot.lane.b32.xlu0 %v2491, 118
    %v2504 = vpop.permute.xlu0 %2503
    %2505 = vrot.lane.b32.xlu0 %v2494, 118
    %v2506 = vpop.permute.xlu0 %2505
    %2511 = vrot.lane.b32.xlu0 %v2481, 108
    %v2512 = vpop.permute.xlu0 %2511
    %2513 = vrot.lane.b32.xlu0 %v2484, 108
    %v2514 = vpop.permute.xlu0 %2513
    %2515 = vrot.lane.b32.xlu0 %v2491, 108
    %v2516 = vpop.permute.xlu0 %2515
    %2517 = vrot.lane.b32.xlu0 %v2494, 108
    %v2518 = vpop.permute.xlu0 %2517
    %2523 = vrot.lane.b32.xlu0 %v2481, 98
    %v2524 = vpop.permute.xlu0 %2523
    %2525 = vrot.lane.b32.xlu0 %v2484, 98
    %v2526 = vpop.permute.xlu0 %2525
    %2527 = vrot.lane.b32.xlu0 %v2491, 98
    %v2528 = vpop.permute.xlu0 %2527
    %2529 = vrot.lane.b32.xlu0 %v2494, 98
    %v2530 = vpop.permute.xlu0 %2529
    %2535 = vrot.lane.b32.xlu0 %v2481, 88
    %v2536 = vpop.permute.xlu0 %2535
    %2537 = vrot.lane.b32.xlu0 %v2484, 88
    %v2538 = vpop.permute.xlu0 %2537
    %2539 = vrot.lane.b32.xlu0 %v2491, 88
    %v2540 = vpop.permute.xlu0 %2539
    %2541 = vrot.lane.b32.xlu0 %v2494, 88
    %v2542 = vpop.permute.xlu0 %2541
    %2547 = vrot.lane.b32.xlu0 %v2481, 78
    %v2548 = vpop.permute.xlu0 %2547
    %2549 = vrot.lane.b32.xlu0 %v2484, 78
    %v2550 = vpop.permute.xlu0 %2549
    %2551 = vrot.lane.b32.xlu0 %v2491, 78
    %v2552 = vpop.permute.xlu0 %2551
    %2553 = vrot.lane.b32.xlu0 %v2494, 78
    %v2554 = vpop.permute.xlu0 %2553
    %v2583 = vlaneseq
    %v2584 = vshrl.u32 %v2583, 7
    %v2585 = vsub.s32 0, %v2584
    %v2586 = vrot.slane %v1244, %v2585
    %v2587 = vlaneseq
    %v2588 = vshrl.u32 %v2587, 7
    %v2589 = vsub.s32 2, %v2588
    %v2590 = vrot.slane %v1244, %v2589
    %v2591 = vlaneseq
    %v2592 = vshrl.u32 %v2591, 7
    %v2593 = vsub.s32 0, %v2592
    %v2594 = vrot.slane %v1245, %v2593
    %v2595 = vlaneseq
    %v2596 = vshrl.u32 %v2595, 7
    %v2597 = vsub.s32 2, %v2596
    %v2598 = vrot.slane %v1245, %v2597
    %v2599 = vlaneseq
    %v2600 = vshrl.u32 %v2599, 7
    %v2601 = vsub.s32 0, %v2600
    %v2602 = vrot.slane %v1246, %v2601
    %v2603 = vlaneseq
    %v2604 = vshrl.u32 %v2603, 7
    %v2605 = vsub.s32 2, %v2604
    %v2606 = vrot.slane %v1246, %v2605
    %v2607 = vlaneseq
    %v2608 = vshrl.u32 %v2607, 7
    %v2609 = vsub.s32 0, %v2608
    %v2610 = vrot.slane %v1247, %v2609
    %v2611 = vlaneseq
    %v2612 = vshrl.u32 %v2611, 7
    %v2613 = vsub.s32 2, %v2612
    %v2614 = vrot.slane %v1247, %v2613
    %v2615 = vlaneseq
    %v2616 = vshrl.u32 %v2615, 7
    %v2617 = vsub.s32 0, %v2616
    %v2618 = vrot.slane %v1248, %v2617
    %v2619 = vlaneseq
    %v2620 = vshrl.u32 %v2619, 7
    %v2621 = vsub.s32 2, %v2620
    %v2622 = vrot.slane %v1248, %v2621
    %v2623 = vlaneseq
    %v2624 = vshrl.u32 %v2623, 7
    %v2625 = vsub.s32 0, %v2624
    %v2626 = vrot.slane %v1249, %v2625
    %v2627 = vlaneseq
    %v2628 = vshrl.u32 %v2627, 7
    %v2629 = vsub.s32 2, %v2628
    %v2630 = vrot.slane %v1249, %v2629
    %v2631 = vlaneseq
    %v2632 = vshrl.u32 %v2631, 7
    %v2633 = vsub.s32 0, %v2632
    %v2634 = vrot.slane %v1250, %v2633
    %v2635 = vlaneseq
    %v2636 = vshrl.u32 %v2635, 7
    %v2637 = vsub.s32 2, %v2636
    %v2638 = vrot.slane %v1250, %v2637
    %v2639 = vlaneseq
    %v2640 = vshrl.u32 %v2639, 7
    %v2641 = vsub.s32 0, %v2640
    %v2642 = vrot.slane %v1251, %v2641
    %v2643 = vlaneseq
    %v2644 = vshrl.u32 %v2643, 7
    %v2645 = vsub.s32 2, %v2644
    %v2646 = vrot.slane %v1251, %v2645
    %v2647 = vlaneseq
    %v2648 = vshrl.u32 %v2647, 7
    %v2649 = vsub.s32 0, %v2648
    %v2650 = vrot.slane %v1252, %v2649
    %v2651 = vlaneseq
    %v2652 = vshrl.u32 %v2651, 7
    %v2653 = vsub.s32 2, %v2652
    %v2654 = vrot.slane %v1252, %v2653
    %v2655 = vlaneseq
    %v2656 = vshrl.u32 %v2655, 7
    %v2657 = vsub.s32 0, %v2656
    %v2658 = vrot.slane %v1253, %v2657
    %v2659 = vlaneseq
    %v2660 = vshrl.u32 %v2659, 7
    %v2661 = vsub.s32 2, %v2660
    %v2662 = vrot.slane %v1253, %v2661
    %v2663 = vlaneseq
    %v2664 = vshrl.u32 %v2663, 7
    %v2665 = vsub.s32 0, %v2664
    %v2666 = vrot.slane %v1254, %v2665
    %v2667 = vlaneseq
    %v2668 = vshrl.u32 %v2667, 7
    %v2669 = vsub.s32 2, %v2668
    %v2670 = vrot.slane %v1254, %v2669
    %v2671 = vlaneseq
    %v2672 = vshrl.u32 %v2671, 7
    %v2673 = vsub.s32 0, %v2672
    %v2674 = vrot.slane %v1255, %v2673
    %v2675 = vlaneseq
    %v2676 = vshrl.u32 %v2675, 7
    %v2677 = vsub.s32 2, %v2676
    %v2678 = vrot.slane %v1255, %v2677
    %v2679 = vlaneseq
    %v2680 = vshrl.u32 %v2679, 7
    %v2681 = vsub.s32 0, %v2680
    %v2682 = vrot.slane %v1256, %v2681
    %v2683 = vlaneseq
    %v2684 = vshrl.u32 %v2683, 7
    %v2685 = vsub.s32 2, %v2684
    %v2686 = vrot.slane %v1256, %v2685
    %v2687 = vlaneseq
    %v2688 = vshrl.u32 %v2687, 7
    %v2689 = vsub.s32 0, %v2688
    %v2690 = vrot.slane %v1257, %v2689
    %v2691 = vlaneseq
    %v2692 = vshrl.u32 %v2691, 7
    %v2693 = vsub.s32 2, %v2692
    %v2694 = vrot.slane %v1257, %v2693
    %v2695 = vlaneseq
    %v2696 = vshrl.u32 %v2695, 7
    %v2697 = vsub.s32 0, %v2696
    %v2698 = vrot.slane %v1258, %v2697
    %v2699 = vlaneseq
    %v2700 = vshrl.u32 %v2699, 7
    %v2701 = vsub.s32 2, %v2700
    %v2702 = vrot.slane %v1258, %v2701
    %v2703 = vlaneseq
    %v2704 = vshrl.u32 %v2703, 7
    %v2705 = vsub.s32 0, %v2704
    %v2706 = vrot.slane %v1259, %v2705
    %v2707 = vlaneseq
    %v2708 = vshrl.u32 %v2707, 7
    %v2709 = vsub.s32 2, %v2708
    %v2710 = vrot.slane %v1259, %v2709
    %v2711 = vlaneseq
    %v2712 = vshrl.u32 %v2711, 7
    %v2713 = vsub.s32 0, %v2712
    %v2714 = vrot.slane %v1260, %v2713
    %v2715 = vlaneseq
    %v2716 = vshrl.u32 %v2715, 7
    %v2717 = vsub.s32 2, %v2716
    %v2718 = vrot.slane %v1260, %v2717
    %v2719 = vlaneseq
    %v2720 = vshrl.u32 %v2719, 7
    %v2721 = vsub.s32 0, %v2720
    %v2722 = vrot.slane %v1261, %v2721
    %v2723 = vlaneseq
    %v2724 = vshrl.u32 %v2723, 7
    %v2725 = vsub.s32 2, %v2724
    %v2726 = vrot.slane %v1261, %v2725
    %v2727 = vlaneseq
    %v2728 = vshrl.u32 %v2727, 7
    %v2729 = vsub.s32 0, %v2728
    %v2730 = vrot.slane %v1262, %v2729
    %v2731 = vlaneseq
    %v2732 = vshrl.u32 %v2731, 7
    %v2733 = vsub.s32 2, %v2732
    %v2734 = vrot.slane %v1262, %v2733
    %v2735 = vlaneseq
    %v2736 = vshrl.u32 %v2735, 7
    %v2737 = vsub.s32 0, %v2736
    %v2738 = vrot.slane %v1263, %v2737
    %v2739 = vlaneseq
    %v2740 = vshrl.u32 %v2739, 7
    %v2741 = vsub.s32 2, %v2740
    %v2742 = vrot.slane %v1263, %v2741
    %v2743 = vlaneseq
    %v2744 = vshrl.u32 %v2743, 7
    %v2745 = vsub.s32 0, %v2744
    %v2746 = vrot.slane %v1264, %v2745
    %v2747 = vlaneseq
    %v2748 = vshrl.u32 %v2747, 7
    %v2749 = vsub.s32 2, %v2748
    %v2750 = vrot.slane %v1264, %v2749
    %v2751 = vlaneseq
    %v2752 = vshrl.u32 %v2751, 7
    %v2753 = vsub.s32 0, %v2752
    %v2754 = vrot.slane %v1265, %v2753
    %v2755 = vlaneseq
    %v2756 = vshrl.u32 %v2755, 7
    %v2757 = vsub.s32 2, %v2756
    %v2758 = vrot.slane %v1265, %v2757
    %v2759 = vlaneseq
    %v2760 = vshrl.u32 %v2759, 7
    %v2761 = vsub.s32 0, %v2760
    %v2762 = vrot.slane %v1266, %v2761
    %v2763 = vlaneseq
    %v2764 = vshrl.u32 %v2763, 7
    %v2765 = vsub.s32 2, %v2764
    %v2766 = vrot.slane %v1266, %v2765
    %v2767 = vlaneseq
    %v2768 = vshrl.u32 %v2767, 7
    %v2769 = vsub.s32 0, %v2768
    %v2770 = vrot.slane %v1267, %v2769
    %v2771 = vlaneseq
    %v2772 = vshrl.u32 %v2771, 7
    %v2773 = vsub.s32 2, %v2772
    %v2774 = vrot.slane %v1267, %v2773
    %v2775 = vsel %vm2468, %v2594, %v2586
    %v2776 = vsel %vm2470, %v2602, %v2775
    %v2777 = vsel %vm2472, %v2610, %v2776
    %v2778 = vsel %vm2474, %v2618, %v2777
    %v2779 = vsel %vm2476, %v2626, %v2778
    %v2780 = vsel %vm2478, %v2634, %v2779
    %v2781 = vsel %vm2480, %v2642, %v2780
    %v2782 = vsel %vm2468, %v2598, %v2590
    %v2783 = vsel %vm2470, %v2606, %v2782
    %v2784 = vsel %vm2472, %v2614, %v2783
    %v2785 = vsel %vm2474, %v2622, %v2784
    %v2786 = vsel %vm2476, %v2630, %v2785
    %v2787 = vsel %vm2478, %v2638, %v2786
    %v2788 = vsel %vm2480, %v2646, %v2787
    %v2789 = vsel %vm2468, %v2658, %v2650
    %v2790 = vsel %vm2470, %v2666, %v2789
    %v2791 = vsel %vm2472, %v2674, %v2790
    %v2792 = vsel %vm2468, %v2662, %v2654
    %v2793 = vsel %vm2470, %v2670, %v2792
    %v2794 = vsel %vm2472, %v2678, %v2793
    %v2795 = vsel %vm2468, %v2690, %v2682
    %v2796 = vsel %vm2470, %v2698, %v2795
    %v2797 = vsel %vm2472, %v2706, %v2796
    %v2798 = vsel %vm2474, %v2714, %v2797
    %v2799 = vsel %vm2476, %v2722, %v2798
    %v2800 = vsel %vm2478, %v2730, %v2799
    %v2801 = vsel %vm2480, %v2738, %v2800
    %v2802 = vsel %vm2468, %v2694, %v2686
    %v2803 = vsel %vm2470, %v2702, %v2802
    %v2804 = vsel %vm2472, %v2710, %v2803
    %v2805 = vsel %vm2474, %v2718, %v2804
    %v2806 = vsel %vm2476, %v2726, %v2805
    %v2807 = vsel %vm2478, %v2734, %v2806
    %v2808 = vsel %vm2480, %v2742, %v2807
    %v2809 = vsel %vm2468, %v2754, %v2746
    %v2810 = vsel %vm2470, %v2762, %v2809
    %v2811 = vsel %vm2472, %v2770, %v2810
    %v2812 = vsel %vm2468, %v2758, %v2750
    %v2813 = vsel %vm2470, %v2766, %v2812
    %v2814 = vsel %vm2472, %v2774, %v2813
    %2815 = vrot.lane.b32.xlu0 %v2781, 68
    %v2816 = vpop.permute.xlu0 %2815
    %2817 = vrot.lane.b32.xlu0 %v2788, 68
    %v2818 = vpop.permute.xlu0 %2817
    %2819 = vrot.lane.b32.xlu0 %v2791, 68
    %v2820 = vpop.permute.xlu0 %2819
    %2821 = vrot.lane.b32.xlu0 %v2794, 68
    %v2822 = vpop.permute.xlu0 %2821
    %2823 = vrot.lane.b32.xlu0 %v2801, 68
    %v2824 = vpop.permute.xlu0 %2823
    %2825 = vrot.lane.b32.xlu0 %v2808, 68
    %v2826 = vpop.permute.xlu0 %2825
    %2827 = vrot.lane.b32.xlu0 %v2811, 68
    %v2828 = vpop.permute.xlu0 %2827
    %2829 = vrot.lane.b32.xlu0 %v2814, 68
    %v2830 = vpop.permute.xlu0 %2829
    %vm2831 = vcmask 556032
    %v2832 = vsel %vm2831, %v2816, %v2818
    %v2833 = vsel %vm2831, %v2820, %v2822
    %v2834 = vsel %vm2831, %v2824, %v2826
    %v2835 = vsel %vm2831, %v2828, %v2830
    %v2864 = vlaneseq
    %v2865 = vshrl.u32 %v2864, 7
    %v2866 = vsub.s32 0, %v2865
    %v2867 = vrot.slane %v1460, %v2866
    %v2868 = vlaneseq
    %v2869 = vshrl.u32 %v2868, 7
    %v2870 = vsub.s32 0, %v2869
    %v2871 = vrot.slane %v1461, %v2870
    %v2872 = vlaneseq
    %v2873 = vshrl.u32 %v2872, 7
    %v2874 = vsub.s32 0, %v2873
    %v2875 = vrot.slane %v1462, %v2874
    %v2876 = vlaneseq
    %v2877 = vshrl.u32 %v2876, 7
    %v2878 = vsub.s32 0, %v2877
    %v2879 = vrot.slane %v1463, %v2878
    %v2880 = vlaneseq
    %v2881 = vshrl.u32 %v2880, 7
    %v2882 = vsub.s32 0, %v2881
    %v2883 = vrot.slane %v1464, %v2882
    %v2884 = vlaneseq
    %v2885 = vshrl.u32 %v2884, 7
    %v2886 = vsub.s32 0, %v2885
    %v2887 = vrot.slane %v1465, %v2886
    %v2888 = vlaneseq
    %v2889 = vshrl.u32 %v2888, 7
    %v2890 = vsub.s32 0, %v2889
    %v2891 = vrot.slane %v1466, %v2890
    %v2892 = vlaneseq
    %v2893 = vshrl.u32 %v2892, 7
    %v2894 = vsub.s32 0, %v2893
    %v2895 = vrot.slane %v1467, %v2894
    %v2896 = vlaneseq
    %v2897 = vshrl.u32 %v2896, 7
    %v2898 = vsub.s32 0, %v2897
    %v2899 = vrot.slane %v1468, %v2898
    %v2900 = vlaneseq
    %v2901 = vshrl.u32 %v2900, 7
    %v2902 = vsub.s32 0, %v2901
    %v2903 = vrot.slane %v1469, %v2902
    %v2904 = vlaneseq
    %v2905 = vshrl.u32 %v2904, 7
    %v2906 = vsub.s32 0, %v2905
    %v2907 = vrot.slane %v1470, %v2906
    %v2908 = vlaneseq
    %v2909 = vshrl.u32 %v2908, 7
    %v2910 = vsub.s32 0, %v2909
    %v2911 = vrot.slane %v1471, %v2910
    %v2912 = vlaneseq
    %v2913 = vshrl.u32 %v2912, 7
    %v2914 = vsub.s32 0, %v2913
    %v2915 = vrot.slane %v1472, %v2914
    %v2916 = vlaneseq
    %v2917 = vshrl.u32 %v2916, 7
    %v2918 = vsub.s32 0, %v2917
    %v2919 = vrot.slane %v1473, %v2918
    %v2920 = vlaneseq
    %v2921 = vshrl.u32 %v2920, 7
    %v2922 = vsub.s32 0, %v2921
    %v2923 = vrot.slane %v1474, %v2922
    %v2924 = vlaneseq
    %v2925 = vshrl.u32 %v2924, 7
    %v2926 = vsub.s32 0, %v2925
    %v2927 = vrot.slane %v1475, %v2926
    %v2928 = vlaneseq
    %v2929 = vshrl.u32 %v2928, 7
    %v2930 = vsub.s32 0, %v2929
    %v2931 = vrot.slane %v1476, %v2930
    %v2932 = vlaneseq
    %v2933 = vshrl.u32 %v2932, 7
    %v2934 = vsub.s32 0, %v2933
    %v2935 = vrot.slane %v1477, %v2934
    %v2936 = vlaneseq
    %v2937 = vshrl.u32 %v2936, 7
    %v2938 = vsub.s32 0, %v2937
    %v2939 = vrot.slane %v1478, %v2938
    %v2940 = vlaneseq
    %v2941 = vshrl.u32 %v2940, 7
    %v2942 = vsub.s32 0, %v2941
    %v2943 = vrot.slane %v1479, %v2942
    %v2944 = vlaneseq
    %v2945 = vshrl.u32 %v2944, 7
    %v2946 = vsub.s32 0, %v2945
    %v2947 = vrot.slane %v1480, %v2946
    %v2948 = vlaneseq
    %v2949 = vshrl.u32 %v2948, 7
    %v2950 = vsub.s32 0, %v2949
    %v2951 = vrot.slane %v1481, %v2950
    %v2952 = vlaneseq
    %v2953 = vshrl.u32 %v2952, 7
    %v2954 = vsub.s32 0, %v2953
    %v2955 = vrot.slane %v1482, %v2954
    %v2956 = vlaneseq
    %v2957 = vshrl.u32 %v2956, 7
    %v2958 = vsub.s32 0, %v2957
    %v2959 = vrot.slane %v1483, %v2958
    %v2960 = vsel %vm2468, %v2871, %v2867
    %v2961 = vsel %vm2470, %v2875, %v2960
    %v2962 = vsel %vm2472, %v2879, %v2961
    %v2963 = vsel %vm2474, %v2883, %v2962
    %v2964 = vsel %vm2476, %v2887, %v2963
    %v2965 = vsel %vm2478, %v2891, %v2964
    %v2966 = vsel %vm2480, %v2895, %v2965
    %v2967 = vsel %vm2468, %v2903, %v2899
    %v2968 = vsel %vm2470, %v2907, %v2967
    %v2969 = vsel %vm2472, %v2911, %v2968
    %v2970 = vsel %vm2468, %v2919, %v2915
    %v2971 = vsel %vm2470, %v2923, %v2970
    %v2972 = vsel %vm2472, %v2927, %v2971
    %v2973 = vsel %vm2474, %v2931, %v2972
    %v2974 = vsel %vm2476, %v2935, %v2973
    %v2975 = vsel %vm2478, %v2939, %v2974
    %v2976 = vsel %vm2480, %v2943, %v2975
    %v2977 = vsel %vm2468, %v2951, %v2947
    %v2978 = vsel %vm2470, %v2955, %v2977
    %v2979 = vsel %vm2472, %v2959, %v2978
    %2980 = vrot.lane.b32.xlu0 %v2966, 70
    %v2981 = vpop.permute.xlu0 %2980
    %2982 = vrot.lane.b32.xlu0 %v2969, 70
    %v2983 = vpop.permute.xlu0 %2982
    %2984 = vrot.lane.b32.xlu0 %v2976, 70
    %v2985 = vpop.permute.xlu0 %2984
    %2986 = vrot.lane.b32.xlu0 %v2979, 70
    %v2987 = vpop.permute.xlu0 %2986
    %v3016 = vlaneseq
    %v3017 = vshrl.u32 %v3016, 7
    %v3018 = vsub.s32 0, %v3017
    %v3019 = vrot.slane %v1676, %v3018
    %v3020 = vlaneseq
    %v3021 = vshrl.u32 %v3020, 7
    %v3022 = vsub.s32 0, %v3021
    %v3023 = vrot.slane %v1677, %v3022
    %v3024 = vlaneseq
    %v3025 = vshrl.u32 %v3024, 7
    %v3026 = vsub.s32 0, %v3025
    %v3027 = vrot.slane %v1678, %v3026
    %v3028 = vlaneseq
    %v3029 = vshrl.u32 %v3028, 7
    %v3030 = vsub.s32 0, %v3029
    %v3031 = vrot.slane %v1679, %v3030
    %v3032 = vlaneseq
    %v3033 = vshrl.u32 %v3032, 7
    %v3034 = vsub.s32 0, %v3033
    %v3035 = vrot.slane %v1680, %v3034
    %v3036 = vlaneseq
    %v3037 = vshrl.u32 %v3036, 7
    %v3038 = vsub.s32 0, %v3037
    %v3039 = vrot.slane %v1681, %v3038
    %v3040 = vlaneseq
    %v3041 = vshrl.u32 %v3040, 7
    %v3042 = vsub.s32 0, %v3041
    %v3043 = vrot.slane %v1682, %v3042
    %v3044 = vlaneseq
    %v3045 = vshrl.u32 %v3044, 7
    %v3046 = vsub.s32 0, %v3045
    %v3047 = vrot.slane %v1683, %v3046
    %v3048 = vlaneseq
    %v3049 = vshrl.u32 %v3048, 7
    %v3050 = vsub.s32 0, %v3049
    %v3051 = vrot.slane %v1684, %v3050
    %v3052 = vlaneseq
    %v3053 = vshrl.u32 %v3052, 7
    %v3054 = vsub.s32 0, %v3053
    %v3055 = vrot.slane %v1685, %v3054
    %v3056 = vlaneseq
    %v3057 = vshrl.u32 %v3056, 7
    %v3058 = vsub.s32 0, %v3057
    %v3059 = vrot.slane %v1686, %v3058
    %v3060 = vlaneseq
    %v3061 = vshrl.u32 %v3060, 7
    %v3062 = vsub.s32 0, %v3061
    %v3063 = vrot.slane %v1687, %v3062
    %v3064 = vlaneseq
    %v3065 = vshrl.u32 %v3064, 7
    %v3066 = vsub.s32 0, %v3065
    %v3067 = vrot.slane %v1688, %v3066
    %v3068 = vlaneseq
    %v3069 = vshrl.u32 %v3068, 7
    %v3070 = vsub.s32 0, %v3069
    %v3071 = vrot.slane %v1689, %v3070
    %v3072 = vlaneseq
    %v3073 = vshrl.u32 %v3072, 7
    %v3074 = vsub.s32 0, %v3073
    %v3075 = vrot.slane %v1690, %v3074
    %v3076 = vlaneseq
    %v3077 = vshrl.u32 %v3076, 7
    %v3078 = vsub.s32 0, %v3077
    %v3079 = vrot.slane %v1691, %v3078
    %v3080 = vlaneseq
    %v3081 = vshrl.u32 %v3080, 7
    %v3082 = vsub.s32 0, %v3081
    %v3083 = vrot.slane %v1692, %v3082
    %v3084 = vlaneseq
    %v3085 = vshrl.u32 %v3084, 7
    %v3086 = vsub.s32 0, %v3085
    %v3087 = vrot.slane %v1693, %v3086
    %v3088 = vlaneseq
    %v3089 = vshrl.u32 %v3088, 7
    %v3090 = vsub.s32 0, %v3089
    %v3091 = vrot.slane %v1694, %v3090
    %v3092 = vlaneseq
    %v3093 = vshrl.u32 %v3092, 7
    %v3094 = vsub.s32 0, %v3093
    %v3095 = vrot.slane %v1695, %v3094
    %v3096 = vlaneseq
    %v3097 = vshrl.u32 %v3096, 7
    %v3098 = vsub.s32 0, %v3097
    %v3099 = vrot.slane %v1696, %v3098
    %v3100 = vlaneseq
    %v3101 = vshrl.u32 %v3100, 7
    %v3102 = vsub.s32 0, %v3101
    %v3103 = vrot.slane %v1697, %v3102
    %v3104 = vlaneseq
    %v3105 = vshrl.u32 %v3104, 7
    %v3106 = vsub.s32 0, %v3105
    %v3107 = vrot.slane %v1698, %v3106
    %v3108 = vlaneseq
    %v3109 = vshrl.u32 %v3108, 7
    %v3110 = vsub.s32 0, %v3109
    %v3111 = vrot.slane %v1699, %v3110
    %v3112 = vsel %vm2468, %v3023, %v3019
    %v3113 = vsel %vm2470, %v3027, %v3112
    %v3114 = vsel %vm2472, %v3031, %v3113
    %v3115 = vsel %vm2474, %v3035, %v3114
    %v3116 = vsel %vm2476, %v3039, %v3115
    %v3117 = vsel %vm2478, %v3043, %v3116
    %v3118 = vsel %vm2480, %v3047, %v3117
    %v3119 = vsel %vm2468, %v3055, %v3051
    %v3120 = vsel %vm2470, %v3059, %v3119
    %v3121 = vsel %vm2472, %v3063, %v3120
    %v3122 = vsel %vm2468, %v3071, %v3067
    %v3123 = vsel %vm2470, %v3075, %v3122
    %v3124 = vsel %vm2472, %v3079, %v3123
    %v3125 = vsel %vm2474, %v3083, %v3124
    %v3126 = vsel %vm2476, %v3087, %v3125
    %v3127 = vsel %vm2478, %v3091, %v3126
    %v3128 = vsel %vm2480, %v3095, %v3127
    %v3129 = vsel %vm2468, %v3103, %v3099
    %v3130 = vsel %vm2470, %v3107, %v3129
    %v3131 = vsel %vm2472, %v3111, %v3130
    %3132 = vrot.lane.b32.xlu0 %v3118, 80
    %v3133 = vpop.permute.xlu0 %3132
    %3134 = vrot.lane.b32.xlu0 %v3121, 80
    %v3135 = vpop.permute.xlu0 %3134
    %3136 = vrot.lane.b32.xlu0 %v3128, 80
    %v3137 = vpop.permute.xlu0 %3136
    %3138 = vrot.lane.b32.xlu0 %v3131, 80
    %v3139 = vpop.permute.xlu0 %3138
    %v3168 = vlaneseq
    %v3169 = vshrl.u32 %v3168, 7
    %v3170 = vsub.s32 0, %v3169
    %v3171 = vrot.slane %v1892, %v3170
    %v3172 = vlaneseq
    %v3173 = vshrl.u32 %v3172, 7
    %v3174 = vsub.s32 0, %v3173
    %v3175 = vrot.slane %v1893, %v3174
    %v3176 = vlaneseq
    %v3177 = vshrl.u32 %v3176, 7
    %v3178 = vsub.s32 0, %v3177
    %v3179 = vrot.slane %v1894, %v3178
    %v3180 = vlaneseq
    %v3181 = vshrl.u32 %v3180, 7
    %v3182 = vsub.s32 0, %v3181
    %v3183 = vrot.slane %v1895, %v3182
    %v3184 = vlaneseq
    %v3185 = vshrl.u32 %v3184, 7
    %v3186 = vsub.s32 0, %v3185
    %v3187 = vrot.slane %v1896, %v3186
    %v3188 = vlaneseq
    %v3189 = vshrl.u32 %v3188, 7
    %v3190 = vsub.s32 0, %v3189
    %v3191 = vrot.slane %v1897, %v3190
    %v3192 = vlaneseq
    %v3193 = vshrl.u32 %v3192, 7
    %v3194 = vsub.s32 0, %v3193
    %v3195 = vrot.slane %v1898, %v3194
    %v3196 = vlaneseq
    %v3197 = vshrl.u32 %v3196, 7
    %v3198 = vsub.s32 0, %v3197
    %v3199 = vrot.slane %v1899, %v3198
    %v3200 = vlaneseq
    %v3201 = vshrl.u32 %v3200, 7
    %v3202 = vsub.s32 0, %v3201
    %v3203 = vrot.slane %v1900, %v3202
    %v3204 = vlaneseq
    %v3205 = vshrl.u32 %v3204, 7
    %v3206 = vsub.s32 0, %v3205
    %v3207 = vrot.slane %v1901, %v3206
    %v3208 = vlaneseq
    %v3209 = vshrl.u32 %v3208, 7
    %v3210 = vsub.s32 0, %v3209
    %v3211 = vrot.slane %v1902, %v3210
    %v3212 = vlaneseq
    %v3213 = vshrl.u32 %v3212, 7
    %v3214 = vsub.s32 0, %v3213
    %v3215 = vrot.slane %v1903, %v3214
    %v3216 = vlaneseq
    %v3217 = vshrl.u32 %v3216, 7
    %v3218 = vsub.s32 0, %v3217
    %v3219 = vrot.slane %v1904, %v3218
    %v3220 = vlaneseq
    %v3221 = vshrl.u32 %v3220, 7
    %v3222 = vsub.s32 0, %v3221
    %v3223 = vrot.slane %v1905, %v3222
    %v3224 = vlaneseq
    %v3225 = vshrl.u32 %v3224, 7
    %v3226 = vsub.s32 0, %v3225
    %v3227 = vrot.slane %v1906, %v3226
    %v3228 = vlaneseq
    %v3229 = vshrl.u32 %v3228, 7
    %v3230 = vsub.s32 0, %v3229
    %v3231 = vrot.slane %v1907, %v3230
    %v3232 = vlaneseq
    %v3233 = vshrl.u32 %v3232, 7
    %v3234 = vsub.s32 0, %v3233
    %v3235 = vrot.slane %v1908, %v3234
    %v3236 = vlaneseq
    %v3237 = vshrl.u32 %v3236, 7
    %v3238 = vsub.s32 0, %v3237
    %v3239 = vrot.slane %v1909, %v3238
    %v3240 = vlaneseq
    %v3241 = vshrl.u32 %v3240, 7
    %v3242 = vsub.s32 0, %v3241
    %v3243 = vrot.slane %v1910, %v3242
    %v3244 = vlaneseq
    %v3245 = vshrl.u32 %v3244, 7
    %v3246 = vsub.s32 0, %v3245
    %v3247 = vrot.slane %v1911, %v3246
    %v3248 = vlaneseq
    %v3249 = vshrl.u32 %v3248, 7
    %v3250 = vsub.s32 0, %v3249
    %v3251 = vrot.slane %v1912, %v3250
    %v3252 = vlaneseq
    %v3253 = vshrl.u32 %v3252, 7
    %v3254 = vsub.s32 0, %v3253
    %v3255 = vrot.slane %v1913, %v3254
    %v3256 = vlaneseq
    %v3257 = vshrl.u32 %v3256, 7
    %v3258 = vsub.s32 0, %v3257
    %v3259 = vrot.slane %v1914, %v3258
    %v3260 = vlaneseq
    %v3261 = vshrl.u32 %v3260, 7
    %v3262 = vsub.s32 0, %v3261
    %v3263 = vrot.slane %v1915, %v3262
    %v3264 = vsel %vm2468, %v3175, %v3171
    %v3265 = vsel %vm2470, %v3179, %v3264
    %v3266 = vsel %vm2472, %v3183, %v3265
    %v3267 = vsel %vm2474, %v3187, %v3266
    %v3268 = vsel %vm2476, %v3191, %v3267
    %v3269 = vsel %vm2478, %v3195, %v3268
    %v3270 = vsel %vm2480, %v3199, %v3269
    %v3271 = vsel %vm2468, %v3207, %v3203
    %v3272 = vsel %vm2470, %v3211, %v3271
    %v3273 = vsel %vm2472, %v3215, %v3272
    %v3274 = vsel %vm2468, %v3223, %v3219
    %v3275 = vsel %vm2470, %v3227, %v3274
    %v3276 = vsel %vm2472, %v3231, %v3275
    %v3277 = vsel %vm2474, %v3235, %v3276
    %v3278 = vsel %vm2476, %v3239, %v3277
    %v3279 = vsel %vm2478, %v3243, %v3278
    %v3280 = vsel %vm2480, %v3247, %v3279
    %v3281 = vsel %vm2468, %v3255, %v3251
    %v3282 = vsel %vm2470, %v3259, %v3281
    %v3283 = vsel %vm2472, %v3263, %v3282
    %3284 = vrot.lane.b32.xlu0 %v3270, 90
    %v3285 = vpop.permute.xlu0 %3284
    %3286 = vrot.lane.b32.xlu0 %v3273, 90
    %v3287 = vpop.permute.xlu0 %3286
    %3288 = vrot.lane.b32.xlu0 %v3280, 90
    %v3289 = vpop.permute.xlu0 %3288
    %3290 = vrot.lane.b32.xlu0 %v3283, 90
    %v3291 = vpop.permute.xlu0 %3290
    %v3320 = vlaneseq
    %v3321 = vshrl.u32 %v3320, 7
    %v3322 = vsub.s32 0, %v3321
    %v3323 = vrot.slane %v2108, %v3322
    %v3324 = vlaneseq
    %v3325 = vshrl.u32 %v3324, 7
    %v3326 = vsub.s32 0, %v3325
    %v3327 = vrot.slane %v2109, %v3326
    %v3328 = vlaneseq
    %v3329 = vshrl.u32 %v3328, 7
    %v3330 = vsub.s32 0, %v3329
    %v3331 = vrot.slane %v2110, %v3330
    %v3332 = vlaneseq
    %v3333 = vshrl.u32 %v3332, 7
    %v3334 = vsub.s32 0, %v3333
    %v3335 = vrot.slane %v2111, %v3334
    %v3336 = vlaneseq
    %v3337 = vshrl.u32 %v3336, 7
    %v3338 = vsub.s32 0, %v3337
    %v3339 = vrot.slane %v2112, %v3338
    %v3340 = vlaneseq
    %v3341 = vshrl.u32 %v3340, 7
    %v3342 = vsub.s32 0, %v3341
    %v3343 = vrot.slane %v2113, %v3342
    %v3344 = vlaneseq
    %v3345 = vshrl.u32 %v3344, 7
    %v3346 = vsub.s32 0, %v3345
    %v3347 = vrot.slane %v2114, %v3346
    %v3348 = vlaneseq
    %v3349 = vshrl.u32 %v3348, 7
    %v3350 = vsub.s32 0, %v3349
    %v3351 = vrot.slane %v2115, %v3350
    %v3352 = vlaneseq
    %v3353 = vshrl.u32 %v3352, 7
    %v3354 = vsub.s32 0, %v3353
    %v3355 = vrot.slane %v2116, %v3354
    %v3356 = vlaneseq
    %v3357 = vshrl.u32 %v3356, 7
    %v3358 = vsub.s32 0, %v3357
    %v3359 = vrot.slane %v2117, %v3358
    %v3360 = vlaneseq
    %v3361 = vshrl.u32 %v3360, 7
    %v3362 = vsub.s32 0, %v3361
    %v3363 = vrot.slane %v2118, %v3362
    %v3364 = vlaneseq
    %v3365 = vshrl.u32 %v3364, 7
    %v3366 = vsub.s32 0, %v3365
    %v3367 = vrot.slane %v2119, %v3366
    %v3368 = vlaneseq
    %v3369 = vshrl.u32 %v3368, 7
    %v3370 = vsub.s32 0, %v3369
    %v3371 = vrot.slane %v2120, %v3370
    %v3372 = vlaneseq
    %v3373 = vshrl.u32 %v3372, 7
    %v3374 = vsub.s32 0, %v3373
    %v3375 = vrot.slane %v2121, %v3374
    %v3376 = vlaneseq
    %v3377 = vshrl.u32 %v3376, 7
    %v3378 = vsub.s32 0, %v3377
    %v3379 = vrot.slane %v2122, %v3378
    %v3380 = vlaneseq
    %v3381 = vshrl.u32 %v3380, 7
    %v3382 = vsub.s32 0, %v3381
    %v3383 = vrot.slane %v2123, %v3382
    %v3384 = vlaneseq
    %v3385 = vshrl.u32 %v3384, 7
    %v3386 = vsub.s32 0, %v3385
    %v3387 = vrot.slane %v2124, %v3386
    %v3388 = vlaneseq
    %v3389 = vshrl.u32 %v3388, 7
    %v3390 = vsub.s32 0, %v3389
    %v3391 = vrot.slane %v2125, %v3390
    %v3392 = vlaneseq
    %v3393 = vshrl.u32 %v3392, 7
    %v3394 = vsub.s32 0, %v3393
    %v3395 = vrot.slane %v2126, %v3394
    %v3396 = vlaneseq
    %v3397 = vshrl.u32 %v3396, 7
    %v3398 = vsub.s32 0, %v3397
    %v3399 = vrot.slane %v2127, %v3398
    %v3400 = vlaneseq
    %v3401 = vshrl.u32 %v3400, 7
    %v3402 = vsub.s32 0, %v3401
    %v3403 = vrot.slane %v2128, %v3402
    %v3404 = vlaneseq
    %v3405 = vshrl.u32 %v3404, 7
    %v3406 = vsub.s32 0, %v3405
    %v3407 = vrot.slane %v2129, %v3406
    %v3408 = vlaneseq
    %v3409 = vshrl.u32 %v3408, 7
    %v3410 = vsub.s32 0, %v3409
    %v3411 = vrot.slane %v2130, %v3410
    %v3412 = vlaneseq
    %v3413 = vshrl.u32 %v3412, 7
    %v3414 = vsub.s32 0, %v3413
    %v3415 = vrot.slane %v2131, %v3414
    %v3416 = vsel %vm2468, %v3327, %v3323
    %v3417 = vsel %vm2470, %v3331, %v3416
    %v3418 = vsel %vm2472, %v3335, %v3417
    %v3419 = vsel %vm2474, %v3339, %v3418
    %v3420 = vsel %vm2476, %v3343, %v3419
    %v3421 = vsel %vm2478, %v3347, %v3420
    %v3422 = vsel %vm2480, %v3351, %v3421
    %v3423 = vsel %vm2468, %v3359, %v3355
    %v3424 = vsel %vm2470, %v3363, %v3423
    %v3425 = vsel %vm2472, %v3367, %v3424
    %v3426 = vsel %vm2468, %v3375, %v3371
    %v3427 = vsel %vm2470, %v3379, %v3426
    %v3428 = vsel %vm2472, %v3383, %v3427
    %v3429 = vsel %vm2474, %v3387, %v3428
    %v3430 = vsel %vm2476, %v3391, %v3429
    %v3431 = vsel %vm2478, %v3395, %v3430
    %v3432 = vsel %vm2480, %v3399, %v3431
    %v3433 = vsel %vm2468, %v3407, %v3403
    %v3434 = vsel %vm2470, %v3411, %v3433
    %v3435 = vsel %vm2472, %v3415, %v3434
    %3436 = vrot.lane.b32.xlu0 %v3422, 100
    %v3437 = vpop.permute.xlu0 %3436
    %3438 = vrot.lane.b32.xlu0 %v3425, 100
    %v3439 = vpop.permute.xlu0 %3438
    %3440 = vrot.lane.b32.xlu0 %v3432, 100
    %v3441 = vpop.permute.xlu0 %3440
    %3442 = vrot.lane.b32.xlu0 %v3435, 100
    %v3443 = vpop.permute.xlu0 %3442
    %v3472 = vlaneseq
    %v3473 = vshrl.u32 %v3472, 7
    %v3474 = vsub.s32 0, %v3473
    %v3475 = vrot.slane %v2324, %v3474
    %v3476 = vlaneseq
    %v3477 = vshrl.u32 %v3476, 7
    %v3478 = vsub.s32 0, %v3477
    %v3479 = vrot.slane %v2325, %v3478
    %v3480 = vlaneseq
    %v3481 = vshrl.u32 %v3480, 7
    %v3482 = vsub.s32 0, %v3481
    %v3483 = vrot.slane %v2326, %v3482
    %v3484 = vlaneseq
    %v3485 = vshrl.u32 %v3484, 7
    %v3486 = vsub.s32 0, %v3485
    %v3487 = vrot.slane %v2327, %v3486
    %v3488 = vlaneseq
    %v3489 = vshrl.u32 %v3488, 7
    %v3490 = vsub.s32 0, %v3489
    %v3491 = vrot.slane %v2328, %v3490
    %v3492 = vlaneseq
    %v3493 = vshrl.u32 %v3492, 7
    %v3494 = vsub.s32 0, %v3493
    %v3495 = vrot.slane %v2329, %v3494
    %v3496 = vlaneseq
    %v3497 = vshrl.u32 %v3496, 7
    %v3498 = vsub.s32 0, %v3497
    %v3499 = vrot.slane %v2330, %v3498
    %v3500 = vlaneseq
    %v3501 = vshrl.u32 %v3500, 7
    %v3502 = vsub.s32 0, %v3501
    %v3503 = vrot.slane %v2331, %v3502
    %v3504 = vlaneseq
    %v3505 = vshrl.u32 %v3504, 7
    %v3506 = vsub.s32 0, %v3505
    %v3507 = vrot.slane %v2332, %v3506
    %v3508 = vlaneseq
    %v3509 = vshrl.u32 %v3508, 7
    %v3510 = vsub.s32 0, %v3509
    %v3511 = vrot.slane %v2333, %v3510
    %v3512 = vlaneseq
    %v3513 = vshrl.u32 %v3512, 7
    %v3514 = vsub.s32 0, %v3513
    %v3515 = vrot.slane %v2334, %v3514
    %v3516 = vlaneseq
    %v3517 = vshrl.u32 %v3516, 7
    %v3518 = vsub.s32 0, %v3517
    %v3519 = vrot.slane %v2335, %v3518
    %v3520 = vlaneseq
    %v3521 = vshrl.u32 %v3520, 7
    %v3522 = vsub.s32 0, %v3521
    %v3523 = vrot.slane %v2336, %v3522
    %v3524 = vlaneseq
    %v3525 = vshrl.u32 %v3524, 7
    %v3526 = vsub.s32 0, %v3525
    %v3527 = vrot.slane %v2337, %v3526
    %v3528 = vlaneseq
    %v3529 = vshrl.u32 %v3528, 7
    %v3530 = vsub.s32 0, %v3529
    %v3531 = vrot.slane %v2338, %v3530
    %v3532 = vlaneseq
    %v3533 = vshrl.u32 %v3532, 7
    %v3534 = vsub.s32 0, %v3533
    %v3535 = vrot.slane %v2339, %v3534
    %v3536 = vlaneseq
    %v3537 = vshrl.u32 %v3536, 7
    %v3538 = vsub.s32 0, %v3537
    %v3539 = vrot.slane %v2340, %v3538
    %v3540 = vlaneseq
    %v3541 = vshrl.u32 %v3540, 7
    %v3542 = vsub.s32 0, %v3541
    %v3543 = vrot.slane %v2341, %v3542
    %v3544 = vlaneseq
    %v3545 = vshrl.u32 %v3544, 7
    %v3546 = vsub.s32 0, %v3545
    %v3547 = vrot.slane %v2342, %v3546
    %v3548 = vlaneseq
    %v3549 = vshrl.u32 %v3548, 7
    %v3550 = vsub.s32 0, %v3549
    %v3551 = vrot.slane %v2343, %v3550
    %v3552 = vlaneseq
    %v3553 = vshrl.u32 %v3552, 7
    %v3554 = vsub.s32 0, %v3553
    %v3555 = vrot.slane %v2344, %v3554
    %v3556 = vlaneseq
    %v3557 = vshrl.u32 %v3556, 7
    %v3558 = vsub.s32 0, %v3557
    %v3559 = vrot.slane %v2345, %v3558
    %v3560 = vlaneseq
    %v3561 = vshrl.u32 %v3560, 7
    %v3562 = vsub.s32 0, %v3561
    %v3563 = vrot.slane %v2346, %v3562
    %v3564 = vlaneseq
    %v3565 = vshrl.u32 %v3564, 7
    %v3566 = vsub.s32 0, %v3565
    %v3567 = vrot.slane %v2347, %v3566
    %v3568 = vsel %vm2468, %v3479, %v3475
    %v3569 = vsel %vm2470, %v3483, %v3568
    %v3570 = vsel %vm2472, %v3487, %v3569
    %v3571 = vsel %vm2474, %v3491, %v3570
    %v3572 = vsel %vm2476, %v3495, %v3571
    %v3573 = vsel %vm2478, %v3499, %v3572
    %v3574 = vsel %vm2480, %v3503, %v3573
    %v3575 = vsel %vm2468, %v3511, %v3507
    %v3576 = vsel %vm2470, %v3515, %v3575
    %v3577 = vsel %vm2472, %v3519, %v3576
    %v3578 = vsel %vm2468, %v3527, %v3523
    %v3579 = vsel %vm2470, %v3531, %v3578
    %v3580 = vsel %vm2472, %v3535, %v3579
    %v3581 = vsel %vm2474, %v3539, %v3580
    %v3582 = vsel %vm2476, %v3543, %v3581
    %v3583 = vsel %vm2478, %v3547, %v3582
    %v3584 = vsel %vm2480, %v3551, %v3583
    %v3585 = vsel %vm2468, %v3559, %v3555
    %v3586 = vsel %vm2470, %v3563, %v3585
    %v3587 = vsel %vm2472, %v3567, %v3586
    %3588 = vrot.lane.b32.xlu0 %v3574, 110
    %v3589 = vpop.permute.xlu0 %3588
    %3590 = vrot.lane.b32.xlu0 %v3577, 110
    %v3591 = vpop.permute.xlu0 %3590
    %3592 = vrot.lane.b32.xlu0 %v3584, 110
    %v3593 = vpop.permute.xlu0 %3592
    %3594 = vrot.lane.b32.xlu0 %v3587, 110
    %v3595 = vpop.permute.xlu0 %3594
    %vm3600 = vcmask 80896
    %v3601 = vsel %vm3600, %v2481, %v2500
    %v3602 = vsel %vm3600, %v2484, %v2502
    %v3603 = vsel %vm3600, %v2491, %v2504
    %v3604 = vsel %vm3600, %v2494, %v2506
    %vm3605 = vcmask 162816
    %v3606 = vsel %vm3605, %v3601, %v2512
    %v3607 = vsel %vm3605, %v3602, %v2514
    %v3608 = vsel %vm3605, %v3603, %v2516
    %v3609 = vsel %vm3605, %v3604, %v2518
    %vm3610 = vcmask 244736
    %v3611 = vsel %vm3610, %v3606, %v2524
    %v3612 = vsel %vm3610, %v3607, %v2526
    %v3613 = vsel %vm3610, %v3608, %v2528
    %v3614 = vsel %vm3610, %v3609, %v2530
    %vm3615 = vcmask 326656
    %v3616 = vsel %vm3615, %v3611, %v2536
    %v3617 = vsel %vm3615, %v3612, %v2538
    %v3618 = vsel %vm3615, %v3613, %v2540
    %v3619 = vsel %vm3615, %v3614, %v2542
    %vm3620 = vcmask 408576
    %v3621 = vsel %vm3620, %v3616, %v2548
    %v3622 = vsel %vm3620, %v3617, %v2550
    %v3623 = vsel %vm3620, %v3618, %v2552
    %v3624 = vsel %vm3620, %v3619, %v2554
    %vm3625 = vcmask 490496
    %v3626 = vsel %vm3625, %v3621, %v2832
    %v3627 = vsel %vm3625, %v3622, %v2833
    %v3628 = vsel %vm3625, %v3623, %v2834
    %v3629 = vsel %vm3625, %v3624, %v2835
    %vm3630 = vcmask 572416
    %v3631 = vsel %vm3630, %v3626, %v2981
    %v3632 = vsel %vm3630, %v3627, %v2983
    %v3633 = vsel %vm3630, %v3628, %v2985
    %v3634 = vsel %vm3630, %v3629, %v2987
    %vm3635 = vcmask 654336
    %v3636 = vsel %vm3635, %v3631, %v3133
    %v3637 = vsel %vm3635, %v3632, %v3135
    %v3638 = vsel %vm3635, %v3633, %v3137
    %v3639 = vsel %vm3635, %v3634, %v3139
    %vm3640 = vcmask 736256
    %v3641 = vsel %vm3640, %v3636, %v3285
    %v3642 = vsel %vm3640, %v3637, %v3287
    %v3643 = vsel %vm3640, %v3638, %v3289
    %v3644 = vsel %vm3640, %v3639, %v3291
    %vm3645 = vcmask 818176
    %v3646 = vsel %vm3645, %v3641, %v3437
    %v3647 = vsel %vm3645, %v3642, %v3439
    %v3648 = vsel %vm3645, %v3643, %v3441
    %v3649 = vsel %vm3645, %v3644, %v3443
    %vm3650 = vcmask 900096
    %v3651 = vsel %vm3650, %v3646, %v3589
    %v3652 = vsel %vm3650, %v3647, %v3591
    %v3653 = vsel %vm3650, %v3648, %v3593
    %v3654 = vsel %vm3650, %v3649, %v3595
    %v3655 = vmax.f32 %v3651, 0.0
    %v3656 = vmax.f32 %v3652, 0.0
    %v3657 = vmax.f32 %v3653, 0.0
    %v3658 = vmax.f32 %v3654, 0.0
    %v3659 = vcombine.high %v3655, 0.0
    %v3661 = vunpack.c.l.s4 1983009808
    %v3662 = vunpack.c.0.s8 %v3661
    %v3663 = vlaneseq
    %v3664 = vshrl.u32 %v3663, 7
    %v3665 = vsub.s32 %v3662, %v3664
    %v3666 = vrot.slane %v3655, %v3665
    %v3668 = vunpack.c.l.s4 1983009808
    %v3669 = vunpack.c.0.s8 %v3668
    %v3670 = vlaneseq
    %v3671 = vshrl.u32 %v3670, 7
    %v3672 = vsub.s32 %v3669, %v3671
    %v3673 = vrot.slane %v3659, %v3672
    %v3674 = vcombine.high %v3657, 0.0
    %v3676 = vunpack.c.l.s4 1983009808
    %v3677 = vunpack.c.0.s8 %v3676
    %v3678 = vlaneseq
    %v3679 = vshrl.u32 %v3678, 7
    %v3680 = vsub.s32 %v3677, %v3679
    %v3681 = vrot.slane %v3657, %v3680
    %v3683 = vunpack.c.l.s4 1983009808
    %v3684 = vunpack.c.0.s8 %v3683
    %v3685 = vlaneseq
    %v3686 = vshrl.u32 %v3685, 7
    %v3687 = vsub.s32 %v3684, %v3686
    %v3688 = vrot.slane %v3674, %v3687
    %v3689 = vcombine.low %v3666, %v3681
    %v3690 = vcombine.high %v3666, %v3681
    %v3692 = vunpack.c.l.s4 1934713408
    %v3693 = vunpack.c.0.s8 %v3692
    %v3694 = vlaneseq
    %v3695 = vshrl.u32 %v3694, 7
    %v3696 = vsub.s32 %v3693, %v3695
    %v3697 = vrot.slane %v3689, %v3696
    %v3699 = vunpack.c.l.s4 1934713408
    %v3700 = vunpack.c.0.s8 %v3699
    %v3701 = vlaneseq
    %v3702 = vshrl.u32 %v3701, 7
    %v3703 = vsub.s32 %v3700, %v3702
    %v3704 = vrot.slane %v3690, %v3703
    %v3705 = vcombine.low %v3673, %v3688
    %v3706 = vcombine.high %v3673, %v3688
    %v3708 = vunpack.c.l.s4 1934713408
    %v3709 = vunpack.c.0.s8 %v3708
    %v3710 = vlaneseq
    %v3711 = vshrl.u32 %v3710, 7
    %v3712 = vsub.s32 %v3709, %v3711
    %v3713 = vrot.slane %v3705, %v3712
    %v3715 = vunpack.c.l.s4 1934713408
    %v3716 = vunpack.c.0.s8 %v3715
    %v3717 = vlaneseq
    %v3718 = vshrl.u32 %v3717, 7
    %v3719 = vsub.s32 %v3716, %v3718
    %v3720 = vrot.slane %v3706, %v3719
    %v3721 = vcombine.high %v3697, 0.0
    %v3722 = vcombine.high %v3704, 0.0
    %v3723 = vcombine.high %v3713, 0.0
    %v3724 = vcombine.high %v3720, 0.0
    %v3726 = vunpack.c.l.s4 1983009808
    %v3727 = vunpack.c.0.s8 %v3726
    %v3728 = vlaneseq
    %v3729 = vshrl.u32 %v3728, 7
    %v3730 = vsub.s32 %v3727, %v3729
    %v3731 = vrot.slane %v3656, %v3730
    %v3733 = vunpack.c.l.s4 1983009808
    %v3734 = vunpack.c.0.s8 %v3733
    %v3735 = vlaneseq
    %v3736 = vshrl.u32 %v3735, 7
    %v3737 = vsub.s32 %v3734, %v3736
    %v3738 = vrot.slane %v3658, %v3737
    %v3739 = vcombine.low %v3731, %v3738
    %v3740 = vcombine.high %v3731, %v3738
    %v3742 = vunpack.c.l.s4 1934713408
    %v3743 = vunpack.c.0.s8 %v3742
    %v3744 = vlaneseq
    %v3745 = vshrl.u32 %v3744, 7
    %v3746 = vsub.s32 %v3743, %v3745
    %v3747 = vrot.slane %v3739, %v3746
    %v3749 = vunpack.c.l.s4 1934713408
    %v3750 = vunpack.c.0.s8 %v3749
    %v3751 = vlaneseq
    %v3752 = vshrl.u32 %v3751, 7
    %v3753 = vsub.s32 %v3750, %v3752
    %v3754 = vrot.slane %v3740, %v3753
    %v3755 = vcombine.high %v3747, 0.0
    %v3756 = vcombine.high %v3754, 0.0
    %3758 = vrot.lane.b32.xlu0 %v3721, 120
    %v3759 = vpop.permute.xlu0 %3758
    %3762 = vrot.lane.b32.xlu0 %v3704, 112
    %v3763 = vpop.permute.xlu0 %3762
    %3766 = vrot.lane.b32.xlu0 %v3722, 104
    %v3767 = vpop.permute.xlu0 %3766
    %3770 = vrot.lane.b32.xlu0 %v3713, 96
    %v3771 = vpop.permute.xlu0 %3770
    %3774 = vrot.lane.b32.xlu0 %v3723, 88
    %v3775 = vpop.permute.xlu0 %3774
    %3778 = vrot.lane.b32.xlu0 %v3720, 80
    %v3779 = vpop.permute.xlu0 %3778
    %3782 = vrot.lane.b32.xlu0 %v3724, 72
    %v3783 = vpop.permute.xlu0 %3782
    %3786 = vrot.lane.b32.xlu0 %v3747, 64
    %v3787 = vpop.permute.xlu0 %3786
    %3790 = vrot.lane.b32.xlu0 %v3755, 56
    %v3791 = vpop.permute.xlu0 %3790
    %3794 = vrot.lane.b32.xlu0 %v3754, 48
    %v3795 = vpop.permute.xlu0 %3794
    %3798 = vrot.lane.b32.xlu0 %v3756, 40
    %v3799 = vpop.permute.xlu0 %3798
    %vm3801 = vcmask 982016
    %v3802 = vsel %vm3801, %v3697, %v3759
    %vm3803 = vcmask 916480
    %v3804 = vsel %vm3803, %v3759, %v3763
    %vm3805 = vcmask 850944
    %v3806 = vsel %vm3805, %v3763, %v3767
    %vm3807 = vcmask 785408
    %v3808 = vsel %vm3807, %v3767, %v3771
    %vm3809 = vcmask 719872
    %v3810 = vsel %vm3809, %v3771, %v3775
    %v3811 = vsel %vm3635, %v3775, %v3779
    %vm3812 = vcmask 588800
    %v3813 = vsel %vm3812, %v3779, %v3783
    %vm3814 = vcmask 523264
    %v3815 = vsel %vm3814, %v3783, %v3787
    %vm3816 = vcmask 457728
    %v3817 = vsel %vm3816, %v3787, %v3791
    %vm3818 = vcmask 392192
    %v3819 = vsel %vm3818, %v3791, %v3795
    %v3820 = vsel %vm3615, %v3795, %v3799
    %v3832 = vcombine.low %v3802, %v3804
    %v3833 = vcombine.low %v3806, %v3808
    %v3835 = vunpack.c.l.s4 1983009808
    %v3836 = vunpack.c.0.s8 %v3835
    %v3837 = vlaneseq
    %v3838 = vshrl.u32 %v3837, 7
    %v3839 = vsub.s32 %v3836, %v3838
    %v3840 = vrot.slane %v3832, %v3839
    %v3842 = vunpack.c.l.s4 1983009808
    %v3843 = vunpack.c.0.s8 %v3842
    %v3844 = vlaneseq
    %v3845 = vshrl.u32 %v3844, 7
    %v3846 = vsub.s32 %v3843, %v3845
    %v3847 = vrot.slane %v3833, %v3846
    %v3848 = vcombine.low %v3840, %v3847
    %v3849 = vcombine.low %v3810, %v3811
    %v3850 = vcombine.low %v3813, %v3815
    %v3852 = vunpack.c.l.s4 1983009808
    %v3853 = vunpack.c.0.s8 %v3852
    %v3854 = vlaneseq
    %v3855 = vshrl.u32 %v3854, 7
    %v3856 = vsub.s32 %v3853, %v3855
    %v3857 = vrot.slane %v3849, %v3856
    %v3859 = vunpack.c.l.s4 1983009808
    %v3860 = vunpack.c.0.s8 %v3859
    %v3861 = vlaneseq
    %v3862 = vshrl.u32 %v3861, 7
    %v3863 = vsub.s32 %v3860, %v3862
    %v3864 = vrot.slane %v3850, %v3863
    %v3865 = vcombine.low %v3857, %v3864
    %v3866 = vcombine.low %v3817, %v3819
    %v3867 = vcombine.low %v3820, %v3799
    %v3869 = vunpack.c.l.s4 1983009808
    %v3870 = vunpack.c.0.s8 %v3869
    %v3871 = vlaneseq
    %v3872 = vshrl.u32 %v3871, 7
    %v3873 = vsub.s32 %v3870, %v3872
    %v3874 = vrot.slane %v3866, %v3873
    %v3876 = vunpack.c.l.s4 1983009808
    %v3877 = vunpack.c.0.s8 %v3876
    %v3878 = vlaneseq
    %v3879 = vshrl.u32 %v3878, 7
    %v3880 = vsub.s32 %v3877, %v3879
    %v3881 = vrot.slane %v3867, %v3880
    %v3882 = vcombine.low %v3874, %v3881
    %3886 = vst [vmem:[%s10] sm:$0xff] %v3848
    %3887 = vst [vmem:[%s10 + $0x8] sm:$0xff] %v3865
    %vm3888 = vcmask 1041408
    %vm3889 = vcmask 1043458
    %vm3890 = vmor %vm3889, %vm3888
    %vm3891 = vcmask 1045508
    %vm3892 = vmor %vm3891, %vm3890
    %vm3893 = vcmask 261126
    %vm3894 = vmor %vm3893, %vm3892
    %3895 = vst.msk [vmem:[%s10 + $0x10] sm:$0xff] %vm3894, %v3882
    %v3896 = vld [vmem:[%s4] sm:$0x3]
    %v3898 = vlaneseq
    %v3899 = vshrl.u32 %v3898, 7
    %v3900 = vsub.s32 0, %v3899
    %v3901 = vrot.slane %v3896, %v3900
    %v3902 = vlaneseq
    %v3903 = vshrl.u32 %v3902, 7
    %v3904 = vsub.s32 1, %v3903
    %v3905 = vrot.slane %v3896, %v3904
    %v3908 = vadd.f32 %v3901, 0.0
    %v3909 = vadd.f32 %v3905, 0.0
    %v3910 = vld [vmem:[%s3] sm:$0xff]
    %v3911 = vld [vmem:[%s3 + $0x8] sm:$0xff]
    %v3912 = vld [vmem:[%s3 + $0x10] sm:$0xff]
    %v3913 = vld [vmem:[%s3 + $0x18] sm:$0xff]
    %v3914 = vld [vmem:[%s3 + $0x20] sm:$0xff]
    %v3915 = vld [vmem:[%s3 + $0x28] sm:$0xff]
    %v3916 = vld [vmem:[%s3 + $0x30] sm:$0xff]
    %v3917 = vld [vmem:[%s3 + $0x38] sm:$0xff]
    %v3918 = vld [vmem:[%s3 + $0x40] sm:$0xff]
    %v3919 = vld [vmem:[%s3 + $0x48] sm:$0xff]
    %v3920 = vld [vmem:[%s3 + $0x50] sm:$0xff]
    %v3921 = vld [vmem:[%s3 + $0x58] sm:$0xff]
    %v3922 = vld [vmem:[%s3 + $0x60] sm:$0xff]
    %v3923 = vld [vmem:[%s3 + $0x68] sm:$0xff]
    %v3924 = vld [vmem:[%s3 + $0x70] sm:$0xff]
    %v3925 = vld [vmem:[%s3 + $0x78] sm:$0xff]
    %v3926 = vld [vmem:[%s3 + $0x80] sm:$0xff]
    %v3927 = vld [vmem:[%s3 + $0x88] sm:$0xff]
    %v3928 = vld [vmem:[%s3 + $0x90] sm:$0xff]
    %v3929 = vld [vmem:[%s3 + $0x98] sm:$0xff]
    %v3930 = vld [vmem:[%s3 + $0xa0] sm:$0xff]
    %v3931 = vld [vmem:[%s3 + $0xa8] sm:$0xff]
    %v3932 = vld [vmem:[%s3 + $0xb0] sm:$0xff]
    %v3933 = vld [vmem:[%s3 + $0xb8] sm:$0xff]
    %v3934 = vld [vmem:[%s3 + $0xc0] sm:$0xff]
    %v3935 = vld [vmem:[%s3 + $0xc8] sm:$0xff]
    %v3936 = vld [vmem:[%s3 + $0xd0] sm:$0xff]
    %v3937 = vld [vmem:[%s3 + $0xd8] sm:$0xff]
    %v3938 = vld [vmem:[%s3 + $0xe0] sm:$0xff]
    %v3939 = vld [vmem:[%s3 + $0xe8] sm:$0xff]
    %v3941 = vsel %vm3801, %v3655, 0
    %v3944 = vsel %vm3801, %v3657, 0
    %3946 = vmatprep.subr.mxu0 %v3911
    %3947 = vmatpush1.msra.mxu0 %v3910
    %3948 = vmatprep.subr.mxu0 %v3913
    %3949 = vmatpush1.msra.mxu0 %v3912
    %3950 = vmatprep.subr.mxu0 %v3915
    %3951 = vmatpush1.msra.mxu0 %v3914
    %3952 = vmatprep.subr.mxu0 %v3917
    %3953 = vmatpush1.msra.mxu0 %v3916
    %3954 = vmatprep.subr.mxu0 %v3919
    %3955 = vmatpush1.msra.mxu0 %v3918
    %3956 = vmatprep.subr.mxu0 %v3921
    %3957 = vmatpush1.msra.mxu0 %v3920
    %3958 = vmatprep.subr.mxu0 %v3923
    %3959 = vmatpush1.msra.mxu0 %v3922
    %3960 = vmatprep.subr.mxu0 %v3925
    %3961 = vmatpush1.msra.mxu0 %v3924
    %3962 = vmatprep.subr.mxu0 %v3927
    %3963 = vmatpush1.msra.mxu0 %v3926
    %3964 = vmatprep.subr.mxu0 %v3929
    %3965 = vmatpush1.msra.mxu0 %v3928
    %3966 = vmatprep.subr.mxu0 %v3931
    %3967 = vmatpush1.msra.mxu0 %v3930
    %3968 = vmatprep.subr.mxu0 %v3933
    %3969 = vmatpush1.msra.mxu0 %v3932
    %3970 = vmatprep.subr.mxu0 %v3935
    %3971 = vmatpush1.msra.mxu0 %v3934
    %3972 = vmatprep.subr.mxu0 %v3937
    %3973 = vmatpush1.msra.mxu0 %v3936
    %3974 = vmatprep.subr.mxu0 %v3939
    %3975 = vmatpush1.msra.mxu0 %v3938
    %3976 = vmatprep.subr.mxu0 0.0
    %3977 = vmatpush1.msra.mxu0 0.0
    %3978 = vmatprep.subr.mxu0 0.0
    %3979 = vmatpush1.msra.mxu0 0.0
    %3980 = vmatprep.subr.mxu0 0.0
    %3981 = vmatpush1.msra.mxu0 0.0
    %3982 = vmatprep.subr.mxu0 0.0
    %3983 = vmatpush1.msra.mxu0 0.0
    %3984 = vmatprep.subr.mxu0 0.0
    %3985 = vmatpush1.msra.mxu0 0.0
    %3986 = vmatprep.subr.mxu0 0.0
    %3987 = vmatpush1.msra.mxu0 0.0
    %3988 = vmatprep.subr.mxu0 0.0
    %3989 = vmatpush1.msra.mxu0 0.0
    %3990 = vmatprep.subr.mxu0 0.0
    %3991 = vmatpush1.msra.mxu0 0.0
    %3992 = vmatprep.subr.mxu0 0.0
    %3993 = vmatpush1.msra.mxu0 0.0
    %3994 = vmatprep.subr.mxu0 0.0
    %3995 = vmatpush1.msra.mxu0 0.0
    %3996 = vmatprep.subr.mxu0 0.0
    %3997 = vmatpush1.msra.mxu0 0.0
    %3998 = vmatprep.subr.mxu0 0.0
    %3999 = vmatpush1.msra.mxu0 0.0
    %4000 = vmatprep.subr.mxu0 0.0
    %4001 = vmatpush1.msra.mxu0 0.0
    %4002 = vmatprep.subr.mxu0 0.0
    %4003 = vmatpush1.msra.mxu0 0.0
    %4004 = vmatprep.subr.mxu0 0.0
    %4005 = vmatpush1.msra.mxu0 0.0
    %4006 = vmatprep.subr.mxu0 0.0
    %4007 = vmatpush1.msra.mxu0 0.0
    %4008 = vmatprep.subr.mxu0 0.0
    %4009 = vmatpush1.msra.mxu0 0.0
    %4010 = vmatprep.mubr.f32.mxu0 0.0
    %4011 = vmatmul.mubr.f32.gmra.mrb[0].mxu0 %v3941
    %v4012 = vpop.f32.mrb[0].mxu0
    %v4013 = vadd.f32 0.0, %v4012
    %v4014 = vpop.f32.mrb[0].mxu0
    %v4015 = vadd.f32 0.0, %v4014
    %4016 = vmatprep.mubr.f32.mxu0 0.0
    %4017 = vmatmul.mubr.f32.gmra.mrb[0].mxu0 %v3944
    %v4018 = vpop.f32.mrb[0].mxu0
    %v4019 = vadd.f32 0.0, %v4018
    %v4020 = vpop.f32.mrb[0].mxu0
    %v4021 = vadd.f32 0.0, %v4020
    %4022 = vdwg.mxu0
    %v4023 = vadd.f32 %v3908, %v4013
    %v4024 = vadd.f32 %v3909, %v4015
    %v4025 = vadd.f32 %v3908, %v4019
    %v4026 = vadd.f32 %v3909, %v4021
    %vm4029 = vcmask 1046528
    %v4030 = vrot.slane %v3655, 1
    %v4031 = vrot.slane %v3656, 1
    %v4032 = vsel %vm4029, %v4030, %v4031
    %v4033 = vrot.slane %v3657, 1
    %v4034 = vrot.slane %v3658, 1
    %v4035 = vsel %vm4029, %v4033, %v4034
    %s4036 = scalar_lea.vmem %s3, 240
    %v4037 = vld [vmem:[%s4036] sm:$0xff]
    %v4038 = vld [vmem:[%s4036 + $0x8] sm:$0xff]
    %v4039 = vld [vmem:[%s4036 + $0x10] sm:$0xff]
    %v4040 = vld [vmem:[%s4036 + $0x18] sm:$0xff]
    %v4041 = vld [vmem:[%s4036 + $0x20] sm:$0xff]
    %v4042 = vld [vmem:[%s4036 + $0x28] sm:$0xff]
    %v4043 = vld [vmem:[%s4036 + $0x30] sm:$0xff]
    %v4044 = vld [vmem:[%s4036 + $0x38] sm:$0xff]
    %v4045 = vld [vmem:[%s4036 + $0x40] sm:$0xff]
    %v4046 = vld [vmem:[%s4036 + $0x48] sm:$0xff]
    %v4047 = vld [vmem:[%s4036 + $0x50] sm:$0xff]
    %v4048 = vld [vmem:[%s4036 + $0x58] sm:$0xff]
    %v4049 = vld [vmem:[%s4036 + $0x60] sm:$0xff]
    %v4050 = vld [vmem:[%s4036 + $0x68] sm:$0xff]
    %v4051 = vld [vmem:[%s4036 + $0x70] sm:$0xff]
    %v4052 = vld [vmem:[%s4036 + $0x78] sm:$0xff]
    %v4053 = vld [vmem:[%s4036 + $0x80] sm:$0xff]
    %v4054 = vld [vmem:[%s4036 + $0x88] sm:$0xff]
    %v4055 = vld [vmem:[%s4036 + $0x90] sm:$0xff]
    %v4056 = vld [vmem:[%s4036 + $0x98] sm:$0xff]
    %v4057 = vld [vmem:[%s4036 + $0xa0] sm:$0xff]
    %v4058 = vld [vmem:[%s4036 + $0xa8] sm:$0xff]
    %v4059 = vld [vmem:[%s4036 + $0xb0] sm:$0xff]
    %v4060 = vld [vmem:[%s4036 + $0xb8] sm:$0xff]
    %v4061 = vld [vmem:[%s4036 + $0xc0] sm:$0xff]
    %v4062 = vld [vmem:[%s4036 + $0xc8] sm:$0xff]
    %v4063 = vld [vmem:[%s4036 + $0xd0] sm:$0xff]
    %v4064 = vld [vmem:[%s4036 + $0xd8] sm:$0xff]
    %v4065 = vld [vmem:[%s4036 + $0xe0] sm:$0xff]
    %v4066 = vld [vmem:[%s4036 + $0xe8] sm:$0xff]
    %v4067 = vsel %vm3801, %v4032, 0
    %v4069 = vsel %vm3801, %v4035, 0
    %4071 = vmatprep.subr.mxu0 %v4038
    %4072 = vmatpush1.msra.mxu0 %v4037
    %4073 = vmatprep.subr.mxu0 %v4040
    %4074 = vmatpush1.msra.mxu0 %v4039
    %4075 = vmatprep.subr.mxu0 %v4042
    %4076 = vmatpush1.msra.mxu0 %v4041
    %4077 = vmatprep.subr.mxu0 %v4044
    %4078 = vmatpush1.msra.mxu0 %v4043
    %4079 = vmatprep.subr.mxu0 %v4046
    %4080 = vmatpush1.msra.mxu0 %v4045
    %4081 = vmatprep.subr.mxu0 %v4048
    %4082 = vmatpush1.msra.mxu0 %v4047
    %4083 = vmatprep.subr.mxu0 %v4050
    %4084 = vmatpush1.msra.mxu0 %v4049
    %4085 = vmatprep.subr.mxu0 %v4052
    %4086 = vmatpush1.msra.mxu0 %v4051
    %4087 = vmatprep.subr.mxu0 %v4054
    %4088 = vmatpush1.msra.mxu0 %v4053
    %4089 = vmatprep.subr.mxu0 %v4056
    %4090 = vmatpush1.msra.mxu0 %v4055
    %4091 = vmatprep.subr.mxu0 %v4058
    %4092 = vmatpush1.msra.mxu0 %v4057
    %4093 = vmatprep.subr.mxu0 %v4060
    %4094 = vmatpush1.msra.mxu0 %v4059
    %4095 = vmatprep.subr.mxu0 %v4062
    %4096 = vmatpush1.msra.mxu0 %v4061
    %4097 = vmatprep.subr.mxu0 %v4064
    %4098 = vmatpush1.msra.mxu0 %v4063
    %4099 = vmatprep.subr.mxu0 %v4066
    %4100 = vmatpush1.msra.mxu0 %v4065
    %4101 = vmatprep.subr.mxu0 0.0
    %4102 = vmatpush1.msra.mxu0 0.0
    %4103 = vmatprep.subr.mxu0 0.0
    %4104 = vmatpush1.msra.mxu0 0.0
    %4105 = vmatprep.subr.mxu0 0.0
    %4106 = vmatpush1.msra.mxu0 0.0
    %4107 = vmatprep.subr.mxu0 0.0
    %4108 = vmatpush1.msra.mxu0 0.0
    %4109 = vmatprep.subr.mxu0 0.0
    %4110 = vmatpush1.msra.mxu0 0.0
    %4111 = vmatprep.subr.mxu0 0.0
    %4112 = vmatpush1.msra.mxu0 0.0
    %4113 = vmatprep.subr.mxu0 0.0
    %4114 = vmatpush1.msra.mxu0 0.0
    %4115 = vmatprep.subr.mxu0 0.0
    %4116 = vmatpush1.msra.mxu0 0.0
    %4117 = vmatprep.subr.mxu0 0.0
    %4118 = vmatpush1.msra.mxu0 0.0
    %4119 = vmatprep.subr.mxu0 0.0
    %4120 = vmatpush1.msra.mxu0 0.0
    %4121 = vmatprep.subr.mxu0 0.0
    %4122 = vmatpush1.msra.mxu0 0.0
    %4123 = vmatprep.subr.mxu0 0.0
    %4124 = vmatpush1.msra.mxu0 0.0
    %4125 = vmatprep.subr.mxu0 0.0
    %4126 = vmatpush1.msra.mxu0 0.0
    %4127 = vmatprep.subr.mxu0 0.0
    %4128 = vmatpush1.msra.mxu0 0.0
    %4129 = vmatprep.subr.mxu0 0.0
    %4130 = vmatpush1.msra.mxu0 0.0
    %4131 = vmatprep.subr.mxu0 0.0
    %4132 = vmatpush1.msra.mxu0 0.0
    %4133 = vmatprep.subr.mxu0 0.0
    %4134 = vmatpush1.msra.mxu0 0.0
    %4135 = vmatprep.mubr.f32.mxu0 0.0
    %4136 = vmatmul.mubr.f32.gmra.mrb[0].mxu0 %v4067
    %v4137 = vpop.f32.mrb[0].mxu0
    %v4138 = vadd.f32 0.0, %v4137
    %v4139 = vpop.f32.mrb[0].mxu0
    %v4140 = vadd.f32 0.0, %v4139
    %4141 = vmatprep.mubr.f32.mxu0 0.0
    %4142 = vmatmul.mubr.f32.gmra.mrb[0].mxu0 %v4069
    %v4143 = vpop.f32.mrb[0].mxu0
    %v4144 = vadd.f32 0.0, %v4143
    %v4145 = vpop.f32.mrb[0].mxu0
    %v4146 = vadd.f32 0.0, %v4145
    %4147 = vdwg.mxu0
    %v4148 = vadd.f32 %v4023, %v4138
    %v4149 = vadd.f32 %v4024, %v4140
    %v4150 = vadd.f32 %v4025, %v4144
    %v4151 = vadd.f32 %v4026, %v4146
    %vm4152 = vcmask 1045504
    %v4153 = vrot.slane %v3655, 2
    %v4154 = vrot.slane %v3656, 2
    %v4155 = vsel %vm4152, %v4153, %v4154
    %v4156 = vrot.slane %v3657, 2
    %v4157 = vrot.slane %v3658, 2
    %v4158 = vsel %vm4152, %v4156, %v4157
    %s4159 = scalar_lea.vmem %s3, 480
    %v4160 = vld [vmem:[%s4159] sm:$0xff]
    %v4161 = vld [vmem:[%s4159 + $0x8] sm:$0xff]
    %v4162 = vld [vmem:[%s4159 + $0x10] sm:$0xff]
    %v4163 = vld [vmem:[%s4159 + $0x18] sm:$0xff]
    %v4164 = vld [vmem:[%s4159 + $0x20] sm:$0xff]
    %v4165 = vld [vmem:[%s4159 + $0x28] sm:$0xff]
    %v4166 = vld [vmem:[%s4159 + $0x30] sm:$0xff]
    %v4167 = vld [vmem:[%s4159 + $0x38] sm:$0xff]
    %v4168 = vld [vmem:[%s4159 + $0x40] sm:$0xff]
    %v4169 = vld [vmem:[%s4159 + $0x48] sm:$0xff]
    %v4170 = vld [vmem:[%s4159 + $0x50] sm:$0xff]
    %v4171 = vld [vmem:[%s4159 + $0x58] sm:$0xff]
    %v4172 = vld [vmem:[%s4159 + $0x60] sm:$0xff]
    %v4173 = vld [vmem:[%s4159 + $0x68] sm:$0xff]
    %v4174 = vld [vmem:[%s4159 + $0x70] sm:$0xff]
    %v4175 = vld [vmem:[%s4159 + $0x78] sm:$0xff]
    %v4176 = vld [vmem:[%s4159 + $0x80] sm:$0xff]
    %v4177 = vld [vmem:[%s4159 + $0x88] sm:$0xff]
    %v4178 = vld [vmem:[%s4159 + $0x90] sm:$0xff]
    %v4179 = vld [vmem:[%s4159 + $0x98] sm:$0xff]
    %v4180 = vld [vmem:[%s4159 + $0xa0] sm:$0xff]
    %v4181 = vld [vmem:[%s4159 + $0xa8] sm:$0xff]
    %v4182 = vld [vmem:[%s4159 + $0xb0] sm:$0xff]
    %v4183 = vld [vmem:[%s4159 + $0xb8] sm:$0xff]
    %v4184 = vld [vmem:[%s4159 + $0xc0] sm:$0xff]
    %v4185 = vld [vmem:[%s4159 + $0xc8] sm:$0xff]
    %v4186 = vld [vmem:[%s4159 + $0xd0] sm:$0xff]
    %v4187 = vld [vmem:[%s4159 + $0xd8] sm:$0xff]
    %v4188 = vld [vmem:[%s4159 + $0xe0] sm:$0xff]
    %v4189 = vld [vmem:[%s4159 + $0xe8] sm:$0xff]
    %v4190 = vsel %vm3801, %v4155, 0
    %v4192 = vsel %vm3801, %v4158, 0
    %4194 = vmatprep.subr.mxu0 %v4161
    %4195 = vmatpush1.msra.mxu0 %v4160
    %4196 = vmatprep.subr.mxu0 %v4163
    %4197 = vmatpush1.msra.mxu0 %v4162
    %4198 = vmatprep.subr.mxu0 %v4165
    %4199 = vmatpush1.msra.mxu0 %v4164
    %4200 = vmatprep.subr.mxu0 %v4167
    %4201 = vmatpush1.msra.mxu0 %v4166
    %4202 = vmatprep.subr.mxu0 %v4169
    %4203 = vmatpush1.msra.mxu0 %v4168
    %4204 = vmatprep.subr.mxu0 %v4171
    %4205 = vmatpush1.msra.mxu0 %v4170
    %4206 = vmatprep.subr.mxu0 %v4173
    %4207 = vmatpush1.msra.mxu0 %v4172
    %4208 = vmatprep.subr.mxu0 %v4175
    %4209 = vmatpush1.msra.mxu0 %v4174
    %4210 = vmatprep.subr.mxu0 %v4177
    %4211 = vmatpush1.msra.mxu0 %v4176
    %4212 = vmatprep.subr.mxu0 %v4179
    %4213 = vmatpush1.msra.mxu0 %v4178
    %4214 = vmatprep.subr.mxu0 %v4181
    %4215 = vmatpush1.msra.mxu0 %v4180
    %4216 = vmatprep.subr.mxu0 %v4183
    %4217 = vmatpush1.msra.mxu0 %v4182
    %4218 = vmatprep.subr.mxu0 %v4185
    %4219 = vmatpush1.msra.mxu0 %v4184
    %4220 = vmatprep.subr.mxu0 %v4187
    %4221 = vmatpush1.msra.mxu0 %v4186
    %4222 = vmatprep.subr.mxu0 %v4189
    %4223 = vmatpush1.msra.mxu0 %v4188
    %4224 = vmatprep.subr.mxu0 0.0
    %4225 = vmatpush1.msra.mxu0 0.0
    %4226 = vmatprep.subr.mxu0 0.0
    %4227 = vmatpush1.msra.mxu0 0.0
    %4228 = vmatprep.subr.mxu0 0.0
    %4229 = vmatpush1.msra.mxu0 0.0
    %4230 = vmatprep.subr.mxu0 0.0
    %4231 = vmatpush1.msra.mxu0 0.0
    %4232 = vmatprep.subr.mxu0 0.0
    %4233 = vmatpush1.msra.mxu0 0.0
    %4234 = vmatprep.subr.mxu0 0.0
    %4235 = vmatpush1.msra.mxu0 0.0
    %4236 = vmatprep.subr.mxu0 0.0
    %4237 = vmatpush1.msra.mxu0 0.0
    %4238 = vmatprep.subr.mxu0 0.0
    %4239 = vmatpush1.msra.mxu0 0.0
    %4240 = vmatprep.subr.mxu0 0.0
    %4241 = vmatpush1.msra.mxu0 0.0
    %4242 = vmatprep.subr.mxu0 0.0
    %4243 = vmatpush1.msra.mxu0 0.0
    %4244 = vmatprep.subr.mxu0 0.0
    %4245 = vmatpush1.msra.mxu0 0.0
    %4246 = vmatprep.subr.mxu0 0.0
    %4247 = vmatpush1.msra.mxu0 0.0
    %4248 = vmatprep.subr.mxu0 0.0
    %4249 = vmatpush1.msra.mxu0 0.0
    %4250 = vmatprep.subr.mxu0 0.0
    %4251 = vmatpush1.msra.mxu0 0.0
    %4252 = vmatprep.subr.mxu0 0.0
    %4253 = vmatpush1.msra.mxu0 0.0
    %4254 = vmatprep.subr.mxu0 0.0
    %4255 = vmatpush1.msra.mxu0 0.0
    %4256 = vmatprep.subr.mxu0 0.0
    %4257 = vmatpush1.msra.mxu0 0.0
    %4258 = vmatprep.mubr.f32.mxu0 0.0
    %4259 = vmatmul.mubr.f32.gmra.mrb[0].mxu0 %v4190
    %v4260 = vpop.f32.mrb[0].mxu0
    %v4261 = vadd.f32 0.0, %v4260
    %v4262 = vpop.f32.mrb[0].mxu0
    %v4263 = vadd.f32 0.0, %v4262
    %4264 = vmatprep.mubr.f32.mxu0 0.0
    %4265 = vmatmul.mubr.f32.gmra.mrb[0].mxu0 %v4192
    %v4266 = vpop.f32.mrb[0].mxu0
    %v4267 = vadd.f32 0.0, %v4266
    %v4268 = vpop.f32.mrb[0].mxu0
    %v4269 = vadd.f32 0.0, %v4268
    %4270 = vdwg.mxu0
    %v4271 = vadd.f32 %v4148, %v4261
    %v4272 = vadd.f32 %v4149, %v4263
    %v4273 = vadd.f32 %v4150, %v4267
    %v4274 = vadd.f32 %v4151, %v4269
    %vm4275 = vcmask 1044480
    %v4276 = vrot.slane %v3655, 3
    %v4277 = vrot.slane %v3656, 3
    %v4278 = vsel %vm4275, %v4276, %v4277
    %v4279 = vrot.slane %v3657, 3
    %v4280 = vrot.slane %v3658, 3
    %v4281 = vsel %vm4275, %v4279, %v4280
    %s4282 = scalar_lea.vmem %s3, 720
    %v4283 = vld [vmem:[%s4282] sm:$0xff]
    %v4284 = vld [vmem:[%s4282 + $0x8] sm:$0xff]
    %v4285 = vld [vmem:[%s4282 + $0x10] sm:$0xff]
    %v4286 = vld [vmem:[%s4282 + $0x18] sm:$0xff]
    %v4287 = vld [vmem:[%s4282 + $0x20] sm:$0xff]
    %v4288 = vld [vmem:[%s4282 + $0x28] sm:$0xff]
    %v4289 = vld [vmem:[%s4282 + $0x30] sm:$0xff]
    %v4290 = vld [vmem:[%s4282 + $0x38] sm:$0xff]
    %v4291 = vld [vmem:[%s4282 + $0x40] sm:$0xff]
    %v4292 = vld [vmem:[%s4282 + $0x48] sm:$0xff]
    %v4293 = vld [vmem:[%s4282 + $0x50] sm:$0xff]
    %v4294 = vld [vmem:[%s4282 + $0x58] sm:$0xff]
    %v4295 = vld [vmem:[%s4282 + $0x60] sm:$0xff]
    %v4296 = vld [vmem:[%s4282 + $0x68] sm:$0xff]
    %v4297 = vld [vmem:[%s4282 + $0x70] sm:$0xff]
    %v4298 = vld [vmem:[%s4282 + $0x78] sm:$0xff]
    %v4299 = vld [vmem:[%s4282 + $0x80] sm:$0xff]
    %v4300 = vld [vmem:[%s4282 + $0x88] sm:$0xff]
    %v4301 = vld [vmem:[%s4282 + $0x90] sm:$0xff]
    %v4302 = vld [vmem:[%s4282 + $0x98] sm:$0xff]
    %v4303 = vld [vmem:[%s4282 + $0xa0] sm:$0xff]
    %v4304 = vld [vmem:[%s4282 + $0xa8] sm:$0xff]
    %v4305 = vld [vmem:[%s4282 + $0xb0] sm:$0xff]
    %v4306 = vld [vmem:[%s4282 + $0xb8] sm:$0xff]
    %v4307 = vld [vmem:[%s4282 + $0xc0] sm:$0xff]
    %v4308 = vld [vmem:[%s4282 + $0xc8] sm:$0xff]
    %v4309 = vld [vmem:[%s4282 + $0xd0] sm:$0xff]
    %v4310 = vld [vmem:[%s4282 + $0xd8] sm:$0xff]
    %v4311 = vld [vmem:[%s4282 + $0xe0] sm:$0xff]
    %v4312 = vld [vmem:[%s4282 + $0xe8] sm:$0xff]
    %v4313 = vsel %vm3801, %v4278, 0
    %v4315 = vsel %vm3801, %v4281, 0
    %4317 = vmatprep.subr.mxu0 %v4284
    %4318 = vmatpush1.msra.mxu0 %v4283
    %4319 = vmatprep.subr.mxu0 %v4286
    %4320 = vmatpush1.msra.mxu0 %v4285
    %4321 = vmatprep.subr.mxu0 %v4288
    %4322 = vmatpush1.msra.mxu0 %v4287
    %4323 = vmatprep.subr.mxu0 %v4290
    %4324 = vmatpush1.msra.mxu0 %v4289
    %4325 = vmatprep.subr.mxu0 %v4292
    %4326 = vmatpush1.msra.mxu0 %v4291
    %4327 = vmatprep.subr.mxu0 %v4294
    %4328 = vmatpush1.msra.mxu0 %v4293
    %4329 = vmatprep.subr.mxu0 %v4296
    %4330 = vmatpush1.msra.mxu0 %v4295
    %4331 = vmatprep.subr.mxu0 %v4298
    %4332 = vmatpush1.msra.mxu0 %v4297
    %4333 = vmatprep.subr.mxu0 %v4300
    %4334 = vmatpush1.msra.mxu0 %v4299
    %4335 = vmatprep.subr.mxu0 %v4302
    %4336 = vmatpush1.msra.mxu0 %v4301
    %4337 = vmatprep.subr.mxu0 %v4304
    %4338 = vmatpush1.msra.mxu0 %v4303
    %4339 = vmatprep.subr.mxu0 %v4306
    %4340 = vmatpush1.msra.mxu0 %v4305
    %4341 = vmatprep.subr.mxu0 %v4308
    %4342 = vmatpush1.msra.mxu0 %v4307
    %4343 = vmatprep.subr.mxu0 %v4310
    %4344 = vmatpush1.msra.mxu0 %v4309
    %4345 = vmatprep.subr.mxu0 %v4312
    %4346 = vmatpush1.msra.mxu0 %v4311
    %4347 = vmatprep.subr.mxu0 0.0
    %4348 = vmatpush1.msra.mxu0 0.0
    %4349 = vmatprep.subr.mxu0 0.0
    %4350 = vmatpush1.msra.mxu0 0.0
    %4351 = vmatprep.subr.mxu0 0.0
    %4352 = vmatpush1.msra.mxu0 0.0
    %4353 = vmatprep.subr.mxu0 0.0
    %4354 = vmatpush1.msra.mxu0 0.0
    %4355 = vmatprep.subr.mxu0 0.0
    %4356 = vmatpush1.msra.mxu0 0.0
    %4357 = vmatprep.subr.mxu0 0.0
    %4358 = vmatpush1.msra.mxu0 0.0
    %4359 = vmatprep.subr.mxu0 0.0
    %4360 = vmatpush1.msra.mxu0 0.0
    %4361 = vmatprep.subr.mxu0 0.0
    %4362 = vmatpush1.msra.mxu0 0.0
    %4363 = vmatprep.subr.mxu0 0.0
    %4364 = vmatpush1.msra.mxu0 0.0
    %4365 = vmatprep.subr.mxu0 0.0
    %4366 = vmatpush1.msra.mxu0 0.0
    %4367 = vmatprep.subr.mxu0 0.0
    %4368 = vmatpush1.msra.mxu0 0.0
    %4369 = vmatprep.subr.mxu0 0.0
    %4370 = vmatpush1.msra.mxu0 0.0
    %4371 = vmatprep.subr.mxu0 0.0
    %4372 = vmatpush1.msra.mxu0 0.0
    %4373 = vmatprep.subr.mxu0 0.0
    %4374 = vmatpush1.msra.mxu0 0.0
    %4375 = vmatprep.subr.mxu0 0.0
    %4376 = vmatpush1.msra.mxu0 0.0
    %4377 = vmatprep.subr.mxu0 0.0
    %4378 = vmatpush1.msra.mxu0 0.0
    %4379 = vmatprep.subr.mxu0 0.0
    %4380 = vmatpush1.msra.mxu0 0.0
    %4381 = vmatprep.mubr.f32.mxu0 0.0
    %4382 = vmatmul.mubr.f32.gmra.mrb[0].mxu0 %v4313
    %v4383 = vpop.f32.mrb[0].mxu0
    %v4384 = vadd.f32 0.0, %v4383
    %v4385 = vpop.f32.mrb[0].mxu0
    %v4386 = vadd.f32 0.0, %v4385
    %4387 = vmatprep.mubr.f32.mxu0 0.0
    %4388 = vmatmul.mubr.f32.gmra.mrb[0].mxu0 %v4315
    %v4389 = vpop.f32.mrb[0].mxu0
    %v4390 = vadd.f32 0.0, %v4389
    %v4391 = vpop.f32.mrb[0].mxu0
    %v4392 = vadd.f32 0.0, %v4391
    %4393 = vdwg.mxu0
    %v4394 = vadd.f32 %v4271, %v4384
    %v4395 = vadd.f32 %v4272, %v4386
    %v4396 = vadd.f32 %v4273, %v4390
    %v4397 = vadd.f32 %v4274, %v4392
    %v4398 = vrot.slane %v3655, 4
    %v4399 = vrot.slane %v3656, 4
    %v4400 = vsel %vm83, %v4398, %v4399
    %v4401 = vrot.slane %v3657, 4
    %v4402 = vrot.slane %v3658, 4
    %v4403 = vsel %vm83, %v4401, %v4402
    %s4404 = scalar_lea.vmem %s3, 960
    %v4405 = vld [vmem:[%s4404] sm:$0xff]
    %v4406 = vld [vmem:[%s4404 + $0x8] sm:$0xff]
    %v4407 = vld [vmem:[%s4404 + $0x10] sm:$0xff]
    %v4408 = vld [vmem:[%s4404 + $0x18] sm:$0xff]
    %v4409 = vld [vmem:[%s4404 + $0x20] sm:$0xff]
    %v4410 = vld [vmem:[%s4404 + $0x28] sm:$0xff]
    %v4411 = vld [vmem:[%s4404 + $0x30] sm:$0xff]
    %v4412 = vld [vmem:[%s4404 + $0x38] sm:$0xff]
    %v4413 = vld [vmem:[%s4404 + $0x40] sm:$0xff]
    %v4414 = vld [vmem:[%s4404 + $0x48] sm:$0xff]
    %v4415 = vld [vmem:[%s4404 + $0x50] sm:$0xff]
    %v4416 = vld [vmem:[%s4404 + $0x58] sm:$0xff]
    %v4417 = vld [vmem:[%s4404 + $0x60] sm:$0xff]
    %v4418 = vld [vmem:[%s4404 + $0x68] sm:$0xff]
    %v4419 = vld [vmem:[%s4404 + $0x70] sm:$0xff]
    %v4420 = vld [vmem:[%s4404 + $0x78] sm:$0xff]
    %v4421 = vld [vmem:[%s4404 + $0x80] sm:$0xff]
    %v4422 = vld [vmem:[%s4404 + $0x88] sm:$0xff]
    %v4423 = vld [vmem:[%s4404 + $0x90] sm:$0xff]
    %v4424 = vld [vmem:[%s4404 + $0x98] sm:$0xff]
    %v4425 = vld [vmem:[%s4404 + $0xa0] sm:$0xff]
    %v4426 = vld [vmem:[%s4404 + $0xa8] sm:$0xff]
    %v4427 = vld [vmem:[%s4404 + $0xb0] sm:$0xff]
    %v4428 = vld [vmem:[%s4404 + $0xb8] sm:$0xff]
    %v4429 = vld [vmem:[%s4404 + $0xc0] sm:$0xff]
    %v4430 = vld [vmem:[%s4404 + $0xc8] sm:$0xff]
    %v4431 = vld [vmem:[%s4404 + $0xd0] sm:$0xff]
    %v4432 = vld [vmem:[%s4404 + $0xd8] sm:$0xff]
    %v4433 = vld [vmem:[%s4404 + $0xe0] sm:$0xff]
    %v4434 = vld [vmem:[%s4404 + $0xe8] sm:$0xff]
    %v4435 = vsel %vm3801, %v4400, 0
    %v4437 = vsel %vm3801, %v4403, 0
    %4439 = vmatprep.subr.mxu0 %v4406
    %4440 = vmatpush1.msra.mxu0 %v4405
    %4441 = vmatprep.subr.mxu0 %v4408
    %4442 = vmatpush1.msra.mxu0 %v4407
    %4443 = vmatprep.subr.mxu0 %v4410
    %4444 = vmatpush1.msra.mxu0 %v4409
    %4445 = vmatprep.subr.mxu0 %v4412
    %4446 = vmatpush1.msra.mxu0 %v4411
    %4447 = vmatprep.subr.mxu0 %v4414
    %4448 = vmatpush1.msra.mxu0 %v4413
    %4449 = vmatprep.subr.mxu0 %v4416
    %4450 = vmatpush1.msra.mxu0 %v4415
    %4451 = vmatprep.subr.mxu0 %v4418
    %4452 = vmatpush1.msra.mxu0 %v4417
    %4453 = vmatprep.subr.mxu0 %v4420
    %4454 = vmatpush1.msra.mxu0 %v4419
    %4455 = vmatprep.subr.mxu0 %v4422
    %4456 = vmatpush1.msra.mxu0 %v4421
    %4457 = vmatprep.subr.mxu0 %v4424
    %4458 = vmatpush1.msra.mxu0 %v4423
    %4459 = vmatprep.subr.mxu0 %v4426
    %4460 = vmatpush1.msra.mxu0 %v4425
    %4461 = vmatprep.subr.mxu0 %v4428
    %4462 = vmatpush1.msra.mxu0 %v4427
    %4463 = vmatprep.subr.mxu0 %v4430
    %4464 = vmatpush1.msra.mxu0 %v4429
    %4465 = vmatprep.subr.mxu0 %v4432
    %4466 = vmatpush1.msra.mxu0 %v4431
    %4467 = vmatprep.subr.mxu0 %v4434
    %4468 = vmatpush1.msra.mxu0 %v4433
    %4469 = vmatprep.subr.mxu0 0.0
    %4470 = vmatpush1.msra.mxu0 0.0
    %4471 = vmatprep.subr.mxu0 0.0
    %4472 = vmatpush1.msra.mxu0 0.0
    %4473 = vmatprep.subr.mxu0 0.0
    %4474 = vmatpush1.msra.mxu0 0.0
    %4475 = vmatprep.subr.mxu0 0.0
    %4476 = vmatpush1.msra.mxu0 0.0
    %4477 = vmatprep.subr.mxu0 0.0
    %4478 = vmatpush1.msra.mxu0 0.0
    %4479 = vmatprep.subr.mxu0 0.0
    %4480 = vmatpush1.msra.mxu0 0.0
    %4481 = vmatprep.subr.mxu0 0.0
    %4482 = vmatpush1.msra.mxu0 0.0
    %4483 = vmatprep.subr.mxu0 0.0
    %4484 = vmatpush1.msra.mxu0 0.0
    %4485 = vmatprep.subr.mxu0 0.0
    %4486 = vmatpush1.msra.mxu0 0.0
    %4487 = vmatprep.subr.mxu0 0.0
    %4488 = vmatpush1.msra.mxu0 0.0
    %4489 = vmatprep.subr.mxu0 0.0
    %4490 = vmatpush1.msra.mxu0 0.0
    %4491 = vmatprep.subr.mxu0 0.0
    %4492 = vmatpush1.msra.mxu0 0.0
    %4493 = vmatprep.subr.mxu0 0.0
    %4494 = vmatpush1.msra.mxu0 0.0
    %4495 = vmatprep.subr.mxu0 0.0
    %4496 = vmatpush1.msra.mxu0 0.0
    %4497 = vmatprep.subr.mxu0 0.0
    %4498 = vmatpush1.msra.mxu0 0.0
    %4499 = vmatprep.subr.mxu0 0.0
    %4500 = vmatpush1.msra.mxu0 0.0
    %4501 = vmatprep.subr.mxu0 0.0
    %4502 = vmatpush1.msra.mxu0 0.0
    %4503 = vmatprep.mubr.f32.mxu0 0.0
    %4504 = vmatmul.mubr.f32.gmra.mrb[0].mxu0 %v4435
    %v4505 = vpop.f32.mrb[0].mxu0
    %v4506 = vadd.f32 0.0, %v4505
    %v4507 = vpop.f32.mrb[0].mxu0
    %v4508 = vadd.f32 0.0, %v4507
    %4509 = vmatprep.mubr.f32.mxu0 0.0
    %4510 = vmatmul.mubr.f32.gmra.mrb[0].mxu0 %v4437
    %v4511 = vpop.f32.mrb[0].mxu0
    %v4512 = vadd.f32 0.0, %v4511
    %v4513 = vpop.f32.mrb[0].mxu0
    %v4514 = vadd.f32 0.0, %v4513
    %4515 = vdwg.mxu0
    %v4516 = vadd.f32 %v4394, %v4506
    %v4517 = vadd.f32 %v4395, %v4508
    %v4518 = vadd.f32 %v4396, %v4512
    %v4519 = vadd.f32 %v4397, %v4514
    %v4524 = vcombine.low %v4516, %v4517
    %v4525 = vcombine.high %v4516, %v4517
    %v4527 = vunpack.c.l.s4 1983009808
    %v4528 = vunpack.c.0.s8 %v4527
    %v4529 = vlaneseq
    %v4530 = vshrl.u32 %v4529, 7
    %v4531 = vsub.s32 %v4528, %v4530
    %v4532 = vrot.slane %v4524, %v4531
    %v4534 = vunpack.c.l.s4 1983009808
    %v4535 = vunpack.c.0.s8 %v4534
    %v4536 = vlaneseq
    %v4537 = vshrl.u32 %v4536, 7
    %v4538 = vsub.s32 %v4535, %v4537
    %v4539 = vrot.slane %v4525, %v4538
    %v4540 = vcombine.high %v4532, %v4532
    %v4541 = vcombine.high %v4539, %v4539
    %v4542 = vcombine.low %v4518, %v4519
    %v4543 = vcombine.high %v4518, %v4519
    %v4545 = vunpack.c.l.s4 1983009808
    %v4546 = vunpack.c.0.s8 %v4545
    %v4547 = vlaneseq
    %v4548 = vshrl.u32 %v4547, 7
    %v4549 = vsub.s32 %v4546, %v4548
    %v4550 = vrot.slane %v4542, %v4549
    %v4552 = vunpack.c.l.s4 1983009808
    %v4553 = vunpack.c.0.s8 %v4552
    %v4554 = vlaneseq
    %v4555 = vshrl.u32 %v4554, 7
    %v4556 = vsub.s32 %v4553, %v4555
    %v4557 = vrot.slane %v4543, %v4556
    %v4558 = vcombine.high %v4550, %v4550
    %v4559 = vcombine.high %v4557, %v4557
    %v4568 = vrot.slane %v4532, 7
    %v4569 = vrot.slane %v4568, 2
    %v4570 = vrot.slane %v4540, 7
    %v4571 = vrot.slane %v4570, 2
    %v4572 = vrot.slane %v4539, 7
    %v4573 = vrot.slane %v4572, 2
    %v4574 = vrot.slane %v4541, 7
    %v4575 = vrot.slane %v4574, 2
    %v4576 = vrot.slane %v4550, 7
    %v4577 = vrot.slane %v4576, 2
    %v4578 = vrot.slane %v4558, 7
    %v4579 = vrot.slane %v4578, 2
    %v4580 = vrot.slane %v4557, 7
    %v4581 = vrot.slane %v4580, 2
    %v4582 = vrot.slane %v4559, 7
    %v4583 = vrot.slane %v4582, 2
    %v4592 = vmax.f32 %v4532, %v4569
    %v4593 = vmax.f32 %v4540, %v4571
    %v4594 = vmax.f32 %v4539, %v4573
    %v4595 = vmax.f32 %v4541, %v4575
    %v4596 = vmax.f32 %v4550, %v4577
    %v4597 = vmax.f32 %v4558, %v4579
    %v4598 = vmax.f32 %v4557, %v4581
    %v4599 = vmax.f32 %v4559, %v4583
    %4608 = vrot.lane.b32.xlu0 %v4592, 108
    %v4609 = vpop.permute.xlu0 %4608
    %4610 = vrot.lane.b32.xlu0 %v4593, 108
    %v4611 = vpop.permute.xlu0 %4610
    %4612 = vrot.lane.b32.xlu0 %v4594, 108
    %v4613 = vpop.permute.xlu0 %4612
    %4614 = vrot.lane.b32.xlu0 %v4595, 108
    %v4615 = vpop.permute.xlu0 %4614
    %4616 = vrot.lane.b32.xlu0 %v4596, 108
    %v4617 = vpop.permute.xlu0 %4616
    %4618 = vrot.lane.b32.xlu0 %v4597, 108
    %v4619 = vpop.permute.xlu0 %4618
    %4620 = vrot.lane.b32.xlu0 %v4598, 108
    %v4621 = vpop.permute.xlu0 %4620
    %4622 = vrot.lane.b32.xlu0 %v4599, 108
    %v4623 = vpop.permute.xlu0 %4622
    %v4632 = vmax.f32 %v4592, %v4609
    %v4633 = vmax.f32 %v4593, %v4611
    %v4634 = vmax.f32 %v4594, %v4613
    %v4635 = vmax.f32 %v4595, %v4615
    %v4636 = vmax.f32 %v4596, %v4617
    %v4637 = vmax.f32 %v4597, %v4619
    %v4638 = vmax.f32 %v4598, %v4621
    %v4639 = vmax.f32 %v4599, %v4623
    %v4640 = vrot.slane %v4609, 2
    %v4641 = vrot.slane %v4611, 2
    %v4642 = vrot.slane %v4613, 2
    %v4643 = vrot.slane %v4615, 2
    %v4644 = vrot.slane %v4617, 2
    %v4645 = vrot.slane %v4619, 2
    %v4646 = vrot.slane %v4621, 2
    %v4647 = vrot.slane %v4623, 2
    %vm4648 = vcmask 883712
    %v4649 = vsel %vm4648, %v4609, %v4640
    %v4650 = vsel %vm4648, %v4611, %v4641
    %v4651 = vsel %vm4648, %v4613, %v4642
    %v4652 = vsel %vm4648, %v4615, %v4643
    %v4653 = vsel %vm4648, %v4617, %v4644
    %v4654 = vsel %vm4648, %v4619, %v4645
    %v4655 = vsel %vm4648, %v4621, %v4646
    %v4656 = vsel %vm4648, %v4623, %v4647
    %v4665 = vmax.f32 %v4592, %v4649
    %v4666 = vmax.f32 %v4593, %v4650
    %v4667 = vmax.f32 %v4594, %v4651
    %v4668 = vmax.f32 %v4595, %v4652
    %v4669 = vmax.f32 %v4596, %v4653
    %v4670 = vmax.f32 %v4597, %v4654
    %v4671 = vmax.f32 %v4598, %v4655
    %v4672 = vmax.f32 %v4599, %v4656
    %v4681 = vlaneseq
    %v4682 = vshrl.u32 %v4681, 7
    %v4683 = vsub.s32 0, %v4682
    %v4684 = vrot.slane %v4632, %v4683
    %v4685 = vlaneseq
    %v4686 = vshrl.u32 %v4685, 7
    %v4687 = vsub.s32 0, %v4686
    %v4688 = vrot.slane %v4633, %v4687
    %v4689 = vlaneseq
    %v4690 = vshrl.u32 %v4689, 7
    %v4691 = vsub.s32 0, %v4690
    %v4692 = vrot.slane %v4634, %v4691
    %v4693 = vlaneseq
    %v4694 = vshrl.u32 %v4693, 7
    %v4695 = vsub.s32 0, %v4694
    %v4696 = vrot.slane %v4635, %v4695
    %v4697 = vlaneseq
    %v4698 = vshrl.u32 %v4697, 7
    %v4699 = vsub.s32 0, %v4698
    %v4700 = vrot.slane %v4636, %v4699
    %v4701 = vlaneseq
    %v4702 = vshrl.u32 %v4701, 7
    %v4703 = vsub.s32 0, %v4702
    %v4704 = vrot.slane %v4637, %v4703
    %v4705 = vlaneseq
    %v4706 = vshrl.u32 %v4705, 7
    %v4707 = vsub.s32 0, %v4706
    %v4708 = vrot.slane %v4638, %v4707
    %v4709 = vlaneseq
    %v4710 = vshrl.u32 %v4709, 7
    %v4711 = vsub.s32 0, %v4710
    %v4712 = vrot.slane %v4639, %v4711
    %v4713 = vsel %vm2468, %v4688, %v4684
    %v4714 = vsel %vm2470, %v4692, %v4713
    %v4715 = vsel %vm2472, %v4696, %v4714
    %v4716 = vsel %vm2468, %v4704, %v4700
    %v4717 = vsel %vm2470, %v4708, %v4716
    %v4718 = vsel %vm2472, %v4712, %v4717
    %4721 = vrot.lane.b32.xlu0 %v4715, 108
    %v4722 = vpop.permute.xlu0 %4721
    %4723 = vrot.lane.b32.xlu0 %v4718, 108
    %v4724 = vpop.permute.xlu0 %4723
    %4727 = vrot.lane.b32.xlu0 %v4715, 88
    %v4728 = vpop.permute.xlu0 %4727
    %4729 = vrot.lane.b32.xlu0 %v4718, 88
    %v4730 = vpop.permute.xlu0 %4729
    %v4741 = vlaneseq
    %v4742 = vshrl.u32 %v4741, 7
    %v4743 = vsub.s32 0, %v4742
    %v4744 = vrot.slane %v4665, %v4743
    %v4745 = vlaneseq
    %v4746 = vshrl.u32 %v4745, 7
    %v4747 = vsub.s32 2, %v4746
    %v4748 = vrot.slane %v4665, %v4747
    %v4749 = vlaneseq
    %v4750 = vshrl.u32 %v4749, 7
    %v4751 = vsub.s32 0, %v4750
    %v4752 = vrot.slane %v4666, %v4751
    %v4753 = vlaneseq
    %v4754 = vshrl.u32 %v4753, 7
    %v4755 = vsub.s32 2, %v4754
    %v4756 = vrot.slane %v4666, %v4755
    %v4757 = vlaneseq
    %v4758 = vshrl.u32 %v4757, 7
    %v4759 = vsub.s32 0, %v4758
    %v4760 = vrot.slane %v4667, %v4759
    %v4761 = vlaneseq
    %v4762 = vshrl.u32 %v4761, 7
    %v4763 = vsub.s32 2, %v4762
    %v4764 = vrot.slane %v4667, %v4763
    %v4765 = vlaneseq
    %v4766 = vshrl.u32 %v4765, 7
    %v4767 = vsub.s32 0, %v4766
    %v4768 = vrot.slane %v4668, %v4767
    %v4769 = vlaneseq
    %v4770 = vshrl.u32 %v4769, 7
    %v4771 = vsub.s32 2, %v4770
    %v4772 = vrot.slane %v4668, %v4771
    %v4773 = vlaneseq
    %v4774 = vshrl.u32 %v4773, 7
    %v4775 = vsub.s32 0, %v4774
    %v4776 = vrot.slane %v4669, %v4775
    %v4777 = vlaneseq
    %v4778 = vshrl.u32 %v4777, 7
    %v4779 = vsub.s32 2, %v4778
    %v4780 = vrot.slane %v4669, %v4779
    %v4781 = vlaneseq
    %v4782 = vshrl.u32 %v4781, 7
    %v4783 = vsub.s32 0, %v4782
    %v4784 = vrot.slane %v4670, %v4783
    %v4785 = vlaneseq
    %v4786 = vshrl.u32 %v4785, 7
    %v4787 = vsub.s32 2, %v4786
    %v4788 = vrot.slane %v4670, %v4787
    %v4789 = vlaneseq
    %v4790 = vshrl.u32 %v4789, 7
    %v4791 = vsub.s32 0, %v4790
    %v4792 = vrot.slane %v4671, %v4791
    %v4793 = vlaneseq
    %v4794 = vshrl.u32 %v4793, 7
    %v4795 = vsub.s32 2, %v4794
    %v4796 = vrot.slane %v4671, %v4795
    %v4797 = vlaneseq
    %v4798 = vshrl.u32 %v4797, 7
    %v4799 = vsub.s32 0, %v4798
    %v4800 = vrot.slane %v4672, %v4799
    %v4801 = vlaneseq
    %v4802 = vshrl.u32 %v4801, 7
    %v4803 = vsub.s32 2, %v4802
    %v4804 = vrot.slane %v4672, %v4803
    %v4805 = vsel %vm2468, %v4752, %v4744
    %v4806 = vsel %vm2470, %v4760, %v4805
    %v4807 = vsel %vm2472, %v4768, %v4806
    %v4808 = vsel %vm2468, %v4756, %v4748
    %v4809 = vsel %vm2470, %v4764, %v4808
    %v4810 = vsel %vm2472, %v4772, %v4809
    %v4811 = vsel %vm2468, %v4784, %v4776
    %v4812 = vsel %vm2470, %v4792, %v4811
    %v4813 = vsel %vm2472, %v4800, %v4812
    %v4814 = vsel %vm2468, %v4788, %v4780
    %v4815 = vsel %vm2470, %v4796, %v4814
    %v4816 = vsel %vm2472, %v4804, %v4815
    %4817 = vrot.lane.b32.xlu0 %v4807, 68
    %v4818 = vpop.permute.xlu0 %4817
    %4819 = vrot.lane.b32.xlu0 %v4810, 68
    %v4820 = vpop.permute.xlu0 %4819
    %4821 = vrot.lane.b32.xlu0 %v4813, 68
    %v4822 = vpop.permute.xlu0 %4821
    %4823 = vrot.lane.b32.xlu0 %v4816, 68
    %v4824 = vpop.permute.xlu0 %4823
    %v4825 = vsel %vm2831, %v4818, %v4820
    %v4826 = vsel %vm2831, %v4822, %v4824
    %v4829 = vsel %vm3605, %v4715, %v4722
    %v4830 = vsel %vm3605, %v4718, %v4724
    %v4831 = vsel %vm3615, %v4829, %v4728
    %v4832 = vsel %vm3615, %v4830, %v4730
    %v4833 = vsel %vm3625, %v4831, %v4825
    %v4834 = vsel %vm3625, %v4832, %v4826
    %v4835 = vmax.f32 %v4833, 0.0
    %v4837 = vunpack.c.l.s4 1983009808
    %v4838 = vunpack.c.0.s8 %v4837
    %v4839 = vlaneseq
    %v4840 = vshrl.u32 %v4839, 7
    %v4841 = vsub.s32 %v4838, %v4840
    %v4842 = vrot.slane %v4835, %v4841
    %v4843 = vmax.f32 %v4834, 0.0
    %v4845 = vunpack.c.l.s4 1983009808
    %v4846 = vunpack.c.0.s8 %v4845
    %v4847 = vlaneseq
    %v4848 = vshrl.u32 %v4847, 7
    %v4849 = vsub.s32 %v4846, %v4848
    %v4850 = vrot.slane %v4843, %v4849
    %v4851 = vcombine.low %v4842, %v4850
    %v4852 = vcombine.high %v4842, %v4850
    %v4854 = vunpack.c.l.s4 1934713408
    %v4855 = vunpack.c.0.s8 %v4854
    %v4856 = vlaneseq
    %v4857 = vshrl.u32 %v4856, 7
    %v4858 = vsub.s32 %v4855, %v4857
    %v4859 = vrot.slane %v4851, %v4858
    %v4861 = vunpack.c.l.s4 1934713408
    %v4862 = vunpack.c.0.s8 %v4861
    %v4863 = vlaneseq
    %v4864 = vshrl.u32 %v4863, 7
    %v4865 = vsub.s32 %v4862, %v4864
    %v4866 = vrot.slane %v4852, %v4865
    %v4867 = vcombine.high %v4859, 0.0
    %v4868 = vcombine.high %v4866, 0.0
    %4870 = vrot.lane.b32.xlu0 %v4867, 80
    %v4871 = vpop.permute.xlu0 %4870
    %4874 = vrot.lane.b32.xlu0 %v4866, 32
    %v4875 = vpop.permute.xlu0 %4874
    %4878 = vrot.lane.b32.xlu0 %v4868, 112
    %v4879 = vpop.permute.xlu0 %4878
    %v4881 = vsel %vm3635, %v4859, %v4871
    %vm4882 = vcmask 261120
    %v4883 = vsel %vm4882, %v4871, %v4875
    %v4884 = vsel %vm3803, %v4883, %v4879
    %v4887 = vcombine.low %v4881, %v4884
    %v4889 = vunpack.c.l.s4 1983009808
    %v4890 = vunpack.c.0.s8 %v4889
    %v4891 = vlaneseq
    %v4892 = vshrl.u32 %v4891, 7
    %v4893 = vsub.s32 %v4890, %v4892
    %v4894 = vrot.slane %v4887, %v4893
    %v4896 = vunpack.c.l.s4 1983009808
    %v4897 = vunpack.c.0.s8 %v4896
    %v4898 = vlaneseq
    %v4899 = vshrl.u32 %v4898, 7
    %v4900 = vsub.s32 %v4897, %v4899
    %v4901 = vrot.slane %v4879, %v4900
    %v4902 = vcombine.low %v4894, %v4901
    %vm4904 = vcmask 521220
    %vm4905 = vmor %vm4904, %vm3890
    %4906 = vst.msk [vmem:[%s11] sm:$0x3f] %vm4905, %v4902
    %v4907 = vld [vmem:[%s5] sm:$0xff]
    %v4908 = vld [vmem:[%s5 + $0x8] sm:$0xff]
    %v4909 = vld [vmem:[%s5 + $0x10] sm:$0xff]
    %v4910 = vld [vmem:[%s5 + $0x18] sm:$0xff]
    %v4911 = vld [vmem:[%s5 + $0x20] sm:$0xff]
    %v4912 = vld [vmem:[%s5 + $0x28] sm:$0xff]
    %v4913 = vld [vmem:[%s5 + $0x30] sm:$0xff]
    %v4914 = vld [vmem:[%s5 + $0x38] sm:$0xff]
    %v4915 = vld [vmem:[%s5 + $0x40] sm:$0xff]
    %v4916 = vld [vmem:[%s5 + $0x48] sm:$0xff]
    %v4917 = vld [vmem:[%s5 + $0x50] sm:$0xff]
    %v4918 = vld [vmem:[%s5 + $0x58] sm:$0xff]
    %v4919 = vld [vmem:[%s5 + $0x60] sm:$0xff]
    %v4920 = vld [vmem:[%s5 + $0x68] sm:$0xff]
    %v4921 = vld [vmem:[%s5 + $0x70] sm:$0xff]
    %v4922 = vld [vmem:[%s5 + $0x78] sm:$0xff]
    %v4923 = vld [vmem:[%s5 + $0x80] sm:$0xff]
    %v4924 = vld [vmem:[%s5 + $0x88] sm:$0xff]
    %v4925 = vld [vmem:[%s5 + $0x90] sm:$0xff]
    %v4926 = vld [vmem:[%s5 + $0x98] sm:$0xff]
    %v4927 = vld [vmem:[%s5 + $0xa0] sm:$0xff]
    %v4928 = vld [vmem:[%s5 + $0xa8] sm:$0xff]
    %v4929 = vld [vmem:[%s5 + $0xb0] sm:$0xff]
    %v4930 = vld [vmem:[%s5 + $0xb8] sm:$0xff]
    %v4931 = vld [vmem:[%s5 + $0xc0] sm:$0xff]
    %v4932 = vld [vmem:[%s5 + $0xc8] sm:$0xff]
    %v4933 = vld [vmem:[%s5 + $0xd0] sm:$0xff]
    %v4934 = vld [vmem:[%s5 + $0xd8] sm:$0xff]
    %v4935 = vld [vmem:[%s5 + $0xe0] sm:$0xff]
    %v4936 = vld [vmem:[%s5 + $0xe8] sm:$0xff]
    %v4937 = vld [vmem:[%s5 + $0xf0] sm:$0xff]
    %v4938 = vld [vmem:[%s5 + $0xf8] sm:$0xff]
    %v4939 = vld [vmem:[%s5 + $0x100] sm:$0xff]
    %v4940 = vld [vmem:[%s5 + $0x108] sm:$0xff]
    %v4941 = vld [vmem:[%s5 + $0x110] sm:$0xff]
    %v4942 = vld [vmem:[%s5 + $0x118] sm:$0xff]
    %v4943 = vld [vmem:[%s5 + $0x120] sm:$0xff]
    %v4944 = vld [vmem:[%s5 + $0x128] sm:$0xff]
    %v4945 = vld [vmem:[%s5 + $0x130] sm:$0xff]
    %v4946 = vld [vmem:[%s5 + $0x138] sm:$0xff]
    %v4947 = vld [vmem:[%s6] sm:$0x1]
    %v4949 = vlaneseq
    %v4950 = vshrl.u32 %v4949, 7
    %v4951 = vsub.s32 0, %v4950
    %v4952 = vrot.slane %v4947, %v4951
    %v4954 = vsel %vm3814, %v4879, 0
    %4956 = vmatprep.subr.mxu0 0.0
    %4957 = vmatpush1.msra.mxu0 %v4907
    %4958 = vmatprep.subr.mxu0 0.0
    %4959 = vmatpush1.msra.mxu0 %v4908
    %4960 = vmatprep.subr.mxu0 0.0
    %4961 = vmatpush1.msra.mxu0 %v4909
    %4962 = vmatprep.subr.mxu0 0.0
    %4963 = vmatpush1.msra.mxu0 %v4910
    %4964 = vmatprep.subr.mxu0 0.0
    %4965 = vmatpush1.msra.mxu0 %v4911
    %4966 = vmatprep.subr.mxu0 0.0
    %4967 = vmatpush1.msra.mxu0 %v4912
    %4968 = vmatprep.subr.mxu0 0.0
    %4969 = vmatpush1.msra.mxu0 %v4913
    %4970 = vmatprep.subr.mxu0 0.0
    %4971 = vmatpush1.msra.mxu0 %v4914
    %4972 = vmatprep.subr.mxu0 0.0
    %4973 = vmatpush1.msra.mxu0 %v4915
    %4974 = vmatprep.subr.mxu0 0.0
    %4975 = vmatpush1.msra.mxu0 %v4916
    %4976 = vmatprep.subr.mxu0 0.0
    %4977 = vmatpush1.msra.mxu0 %v4917
    %4978 = vmatprep.subr.mxu0 0.0
    %4979 = vmatpush1.msra.mxu0 %v4918
    %4980 = vmatprep.subr.mxu0 0.0
    %4981 = vmatpush1.msra.mxu0 %v4919
    %4982 = vmatprep.subr.mxu0 0.0
    %4983 = vmatpush1.msra.mxu0 %v4920
    %4984 = vmatprep.subr.mxu0 0.0
    %4985 = vmatpush1.msra.mxu0 %v4921
    %4986 = vmatprep.subr.mxu0 0.0
    %4987 = vmatpush1.msra.mxu0 %v4922
    %4988 = vmatprep.subr.mxu0 0.0
    %4989 = vmatpush1.msra.mxu0 %v4923
    %4990 = vmatprep.subr.mxu0 0.0
    %4991 = vmatpush1.msra.mxu0 %v4924
    %4992 = vmatprep.subr.mxu0 0.0
    %4993 = vmatpush1.msra.mxu0 %v4925
    %4994 = vmatprep.subr.mxu0 0.0
    %4995 = vmatpush1.msra.mxu0 %v4926
    %4996 = vmatprep.subr.mxu0 0.0
    %4997 = vmatpush1.msra.mxu0 %v4927
    %4998 = vmatprep.subr.mxu0 0.0
    %4999 = vmatpush1.msra.mxu0 %v4928
    %5000 = vmatprep.subr.mxu0 0.0
    %5001 = vmatpush1.msra.mxu0 %v4929
    %5002 = vmatprep.subr.mxu0 0.0
    %5003 = vmatpush1.msra.mxu0 %v4930
    %5004 = vmatprep.subr.mxu0 0.0
    %5005 = vmatpush1.msra.mxu0 %v4931
    %5006 = vmatprep.subr.mxu0 0.0
    %5007 = vmatpush1.msra.mxu0 %v4932
    %5008 = vmatprep.subr.mxu0 0.0
    %5009 = vmatpush1.msra.mxu0 %v4933
    %5010 = vmatprep.subr.mxu0 0.0
    %5011 = vmatpush1.msra.mxu0 %v4934
    %5012 = vmatprep.subr.mxu0 0.0
    %5013 = vmatpush1.msra.mxu0 %v4935
    %5014 = vmatprep.subr.mxu0 0.0
    %5015 = vmatpush1.msra.mxu0 %v4936
    %5016 = vmatprep.subr.mxu0 0.0
    %5017 = vmatpush1.msra.mxu0 %v4937
    %5018 = vmatprep.subr.mxu0 0.0
    %5019 = vmatpush1.msra.mxu0 %v4938
    %5020 = vmatprep.mubr.f32.mxu0 %v4884
    %5021 = vmatmul.mubr.f32.gmra.mrb[0].mxu0 %v4881
    %v5022 = vpop.f32.mrb[0].mxu0
    %v5023 = vadd.f32 %v4952, %v5022
    %v5024 = vpop.f32.mrb[0].mxu0
    %5025 = vdwg.mxu0
    %5026 = vmatprep.subr.mxu0 0.0
    %5027 = vmatpush1.msra.mxu0 %v4939
    %5028 = vmatprep.subr.mxu0 0.0
    %5029 = vmatpush1.msra.mxu0 %v4940
    %5030 = vmatprep.subr.mxu0 0.0
    %5031 = vmatpush1.msra.mxu0 %v4941
    %5032 = vmatprep.subr.mxu0 0.0
    %5033 = vmatpush1.msra.mxu0 %v4942
    %5034 = vmatprep.subr.mxu0 0.0
    %5035 = vmatpush1.msra.mxu0 %v4943
    %5036 = vmatprep.subr.mxu0 0.0
    %5037 = vmatpush1.msra.mxu0 %v4944
    %5038 = vmatprep.subr.mxu0 0.0
    %5039 = vmatpush1.msra.mxu0 %v4945
    %5040 = vmatprep.subr.mxu0 0.0
    %5041 = vmatpush1.msra.mxu0 %v4946
    %5042 = vmatprep.subr.mxu0 0.0
    %5043 = vmatpush1.msra.mxu0 0.0
    %5044 = vmatprep.subr.mxu0 0.0
    %5045 = vmatpush1.msra.mxu0 0.0
    %5046 = vmatprep.subr.mxu0 0.0
    %5047 = vmatpush1.msra.mxu0 0.0
    %5048 = vmatprep.subr.mxu0 0.0
    %5049 = vmatpush1.msra.mxu0 0.0
    %5050 = vmatprep.subr.mxu0 0.0
    %5051 = vmatpush1.msra.mxu0 0.0
    %5052 = vmatprep.subr.mxu0 0.0
    %5053 = vmatpush1.msra.mxu0 0.0
    %5054 = vmatprep.subr.mxu0 0.0
    %5055 = vmatpush1.msra.mxu0 0.0
    %5056 = vmatprep.subr.mxu0 0.0
    %5057 = vmatpush1.msra.mxu0 0.0
    %5058 = vmatprep.subr.mxu0 0.0
    %5059 = vmatpush1.msra.mxu0 0.0
    %5060 = vmatprep.subr.mxu0 0.0
    %5061 = vmatpush1.msra.mxu0 0.0
    %5062 = vmatprep.subr.mxu0 0.0
    %5063 = vmatpush1.msra.mxu0 0.0
    %5064 = vmatprep.subr.mxu0 0.0
    %5065 = vmatpush1.msra.mxu0 0.0
    %5066 = vmatprep.subr.mxu0 0.0
    %5067 = vmatpush1.msra.mxu0 0.0
    %5068 = vmatprep.subr.mxu0 0.0
    %5069 = vmatpush1.msra.mxu0 0.0
    %5070 = vmatprep.subr.mxu0 0.0
    %5071 = vmatpush1.msra.mxu0 0.0
    %5072 = vmatprep.subr.mxu0 0.0
    %5073 = vmatpush1.msra.mxu0 0.0
    %5074 = vmatprep.subr.mxu0 0.0
    %5075 = vmatpush1.msra.mxu0 0.0
    %5076 = vmatprep.subr.mxu0 0.0
    %5077 = vmatpush1.msra.mxu0 0.0
    %5078 = vmatprep.subr.mxu0 0.0
    %5079 = vmatpush1.msra.mxu0 0.0
    %5080 = vmatprep.subr.mxu0 0.0
    %5081 = vmatpush1.msra.mxu0 0.0
    %5082 = vmatprep.subr.mxu0 0.0
    %5083 = vmatpush1.msra.mxu0 0.0
    %5084 = vmatprep.subr.mxu0 0.0
    %5085 = vmatpush1.msra.mxu0 0.0
    %5086 = vmatprep.subr.mxu0 0.0
    %5087 = vmatpush1.msra.mxu0 0.0
    %5088 = vmatprep.subr.mxu0 0.0
    %5089 = vmatpush1.msra.mxu0 0.0
    %5090 = vmatprep.mubr.f32.mxu0 0.0
    %5091 = vmatmul.mubr.f32.gmra.mrb[0].mxu0 %v4954
    %v5092 = vpop.f32.mrb[0].mxu0
    %v5093 = vadd.f32 %v5023, %v5092
    %v5094 = vpop.f32.mrb[0].mxu0
    %5095 = vdwg.mxu0
    %v5096 = vmax.f32 %v5093, 0.0
    %v5097 = vld [vmem:[%s7] sm:$0xff]
    %v5098 = vld [vmem:[%s7 + $0x8] sm:$0xff]
    %v5099 = vld [vmem:[%s7 + $0x10] sm:$0xff]
    %v5100 = vld [vmem:[%s7 + $0x18] sm:$0xff]
    %v5101 = vld [vmem:[%s7 + $0x20] sm:$0xff]
    %v5102 = vld [vmem:[%s7 + $0x28] sm:$0xff]
    %v5103 = vld [vmem:[%s7 + $0x30] sm:$0x3]
    %v5104 = vld [vmem:[%s8] sm:$0x1]
    %v5106 = vlaneseq
    %v5107 = vshrl.u32 %v5106, 7
    %v5108 = vsub.s32 0, %v5107
    %v5109 = vrot.slane %v5104, %v5108
    %v5112 = vsel %vm3620, %v5096, 0
    %v5115 = vsel %vm3888, %v5103, 0
    %5117 = vmatprep.subr.mxu0 0.0
    %5118 = vmatpush1.msra.mxu0 %v5097
    %5119 = vmatprep.subr.mxu0 0.0
    %5120 = vmatpush1.msra.mxu0 %v5098
    %5121 = vmatprep.subr.mxu0 0.0
    %5122 = vmatpush1.msra.mxu0 %v5099
    %5123 = vmatprep.subr.mxu0 0.0
    %5124 = vmatpush1.msra.mxu0 %v5100
    %5125 = vmatprep.subr.mxu0 0.0
    %5126 = vmatpush1.msra.mxu0 %v5101
    %5127 = vmatprep.subr.mxu0 0.0
    %5128 = vmatpush1.msra.mxu0 %v5102
    %5129 = vmatprep.subr.mxu0 0.0
    %5130 = vmatpush1.msra.mxu0 %v5115
    %5131 = vmatprep.subr.mxu0 0.0
    %5132 = vmatpush1.msra.mxu0 0.0
    %5133 = vmatprep.subr.mxu0 0.0
    %5134 = vmatpush1.msra.mxu0 0.0
    %5135 = vmatprep.subr.mxu0 0.0
    %5136 = vmatpush1.msra.mxu0 0.0
    %5137 = vmatprep.subr.mxu0 0.0
    %5138 = vmatpush1.msra.mxu0 0.0
    %5139 = vmatprep.subr.mxu0 0.0
    %5140 = vmatpush1.msra.mxu0 0.0
    %5141 = vmatprep.subr.mxu0 0.0
    %5142 = vmatpush1.msra.mxu0 0.0
    %5143 = vmatprep.subr.mxu0 0.0
    %5144 = vmatpush1.msra.mxu0 0.0
    %5145 = vmatprep.subr.mxu0 0.0
    %5146 = vmatpush1.msra.mxu0 0.0
    %5147 = vmatprep.subr.mxu0 0.0
    %5148 = vmatpush1.msra.mxu0 0.0
    %5149 = vmatprep.subr.mxu0 0.0
    %5150 = vmatpush1.msra.mxu0 0.0
    %5151 = vmatprep.subr.mxu0 0.0
    %5152 = vmatpush1.msra.mxu0 0.0
    %5153 = vmatprep.subr.mxu0 0.0
    %5154 = vmatpush1.msra.mxu0 0.0
    %5155 = vmatprep.subr.mxu0 0.0
    %5156 = vmatpush1.msra.mxu0 0.0
    %5157 = vmatprep.subr.mxu0 0.0
    %5158 = vmatpush1.msra.mxu0 0.0
    %5159 = vmatprep.subr.mxu0 0.0
    %5160 = vmatpush1.msra.mxu0 0.0
    %5161 = vmatprep.subr.mxu0 0.0
    %5162 = vmatpush1.msra.mxu0 0.0
    %5163 = vmatprep.subr.mxu0 0.0
    %5164 = vmatpush1.msra.mxu0 0.0
    %5165 = vmatprep.subr.mxu0 0.0
    %5166 = vmatpush1.msra.mxu0 0.0
    %5167 = vmatprep.subr.mxu0 0.0
    %5168 = vmatpush1.msra.mxu0 0.0
    %5169 = vmatprep.subr.mxu0 0.0
    %5170 = vmatpush1.msra.mxu0 0.0
    %5171 = vmatprep.subr.mxu0 0.0
    %5172 = vmatpush1.msra.mxu0 0.0
    %5173 = vmatprep.subr.mxu0 0.0
    %5174 = vmatpush1.msra.mxu0 0.0
    %5175 = vmatprep.subr.mxu0 0.0
    %5176 = vmatpush1.msra.mxu0 0.0
    %5177 = vmatprep.subr.mxu0 0.0
    %5178 = vmatpush1.msra.mxu0 0.0
    %5179 = vmatprep.subr.mxu0 0.0
    %5180 = vmatpush1.msra.mxu0 0.0
    %5181 = vmatprep.mubr.f32.mxu0 0.0
    %5182 = vmatmul.mubr.f32.gmra.mrb[0].mxu0 %v5112
    %v5183 = vpop.f32.mrb[0].mxu0
    %v5184 = vadd.f32 %v5109, %v5183
    %v5185 = vpop.f32.mrb[0].mxu0
    %5186 = vdwg.mxu0
    %vm5187 = vcmask 74752
    %5188 = vst.msk [vmem:[#allocation2] sm:$0x3] %vm5187, %v5184
    // Predicated region
    $region38: #{net1_forward.1} parent=1 // pred_check
      _
    $region39: #{net1_forward.1} parent=1 // pred_check_branch
      %5190 = sbr.rel (0) target = $region41
    $region40: #{net1_forward.1} parent=1 // pred_region
      %s5192 = ssub.s32 32, 32
      %5193 = vsyncadd [#allocation3], %s5192
      %s5195 = sshll.u32 [#allocation2], 4
      %s5196 = int_to_ptr.vmem [resolvable:$true] %s5195
      %5198 = dma.vmem_to_hbm [thread:$0]  %s5196, 32, %s9, [#allocation3]
    $region41: #{net1_forward.1} parent=1 // pred_fallthru
      _
    // Predicated region
    $region42: #{net1_forward.1} parent=1 // pred_check
      _
    $region43: #{net1_forward.1} parent=1 // pred_check_branch
      %5200 = sbr.rel (0) target = $region45
    $region44: #{net1_forward.1} parent=1 // pred_region
      _
    $region45: #{net1_forward.1} parent=1 // pred_fallthru
      _
    // Predicated region
    $region46: #{net1_forward.1} parent=1 // pred_check
      _
    $region47: #{net1_forward.1} parent=1 // pred_check_branch
      %5202 = sbr.rel (0) target = $region49
    $region48: #{net1_forward.1} parent=1 // pred_region
      _
    $region49: #{net1_forward.1} parent=1 // pred_fallthru
      _
    // Predicated region
    $region50: #{net1_forward.1} parent=1 // pred_check
      _
    $region51: #{net1_forward.1} parent=1 // pred_check_branch
      %5204 = sbr.rel (0) target = $region53
    $region52: #{net1_forward.1} parent=1 // pred_region
      %5205 = dma.done [#allocation3], 32
    $region53: #{net1_forward.1} parent=1 // pred_fallthru
      _
    // Predicated region
    $region54: #{net1_forward.1} parent=1 // pred_check
      _
    $region55: #{net1_forward.1} parent=1 // pred_check_branch
      %5207 = sbr.rel (0) target = $region57
    $region56: #{net1_forward.1} parent=1 // pred_region
      _
    $region57: #{net1_forward.1} parent=1 // pred_fallthru
      _
    // Predicated region
    $region58: #{net1_forward.1} parent=1 // pred_check
      _
    $region59: #{net1_forward.1} parent=1 // pred_check_branch
      %5209 = sbr.rel (0) target = $region61
    $region60: #{net1_forward.1} parent=1 // pred_region
      _
    $region61: #{net1_forward.1} parent=1 // pred_fallthru
      _
    %5210 = vsyncpa [#allocation3], 1

</llo_original>
